<compile_context>
chip_gen: v5e
topology: v5e:2x2
jax: 0.10.0
libtpu: 0.0.40
codegen_flags: <defaults>
</compile_context>

<pallas_src>
import jax
import jax.numpy as jnp
import numpy as np
from jax.experimental import pallas as pl
from jax.experimental.pallas import tpu as pltpu

BF16 = jnp.bfloat16
F32 = jnp.float32


# ------------------------------ Pallas kernel -------------------------------

def encoder_layer_kernel(x_ref, lens_ref, wih_ref, whh_ref, b_ref,
                         w1_ref, b1_ref, w2_ref, b2_ref, gamma_ref, beta_ref,
                         out_ref, gx_sc, out_sc):
    # x_ref   : (B*T, Din) f32, batch-first rows (row = b*T + t)
    # lens_ref: (B, 1) i32 valid lengths
    # wih_ref : (Din, 8H) bf16, per-gate direction-interleaved columns
    # whh_ref : (2H, 8H) bf16, rows [h_f ; h_b], same interleaved columns
    # b_ref   : (1, 8H) f32 combined LSTM bias (b_ih + b_hh), interleaved
    # w1/b1/w2/b2/gamma/beta : FFN + LayerNorm params (weights bf16, rest f32)
    # out_ref : (B, T, 2H) f32 (batch-first, lane-dense last dim = 2H)
    # gx_sc   : (B, T, 8H) f32 scratch — hoisted input-projection gates
    # out_sc  : (T, B, 2H) f32 scratch — packed biLSTM outputs (time-major)
    T, B, D2 = out_sc.shape
    H = D2 // 2
    G8 = 8 * H

    # ---- hoisted input projection: one MXU matmul covers both directions.
    x = x_ref[...].astype(BF16)                                     # (B*T, Din)
    gx = jnp.dot(x, wih_ref[...], preferred_element_type=F32) + b_ref[...]
    gx_sc[...] = gx.reshape(B, T, G8)

    whh = whh_ref[...]                                              # (2H, 8H) bf16
    lens = lens_ref[...]                                            # (B, 1) i32

    # ---- hoisted lane selectors & per-step length masks (off the serial chain)
    lane8 = jax.lax.broadcasted_iota(jnp.int32, (B, G8), 1)
    fwd_gate_lane = (lane8 % D2) < H           # fwd half of every 2H gate chunk
    t_idx = jax.lax.broadcasted_iota(jnp.int32, (T, B, D2), 0)
    l_idx = jax.lax.broadcasted_iota(jnp.int32, (T, B, D2), 2)
    eff_t = jnp.where(l_idx < H, t_idx, (T - 1) - t_idx)
    step_mask = eff_t < lens.reshape(1, B, 1)  # (T,B,2H): fwd lanes test t, bwd lanes test T-1-t

    # ---- recurrent state: single full-lane (B, 2H) f32 values kept in vregs.
    h = jnp.zeros((B, D2), F32)
    c = jnp.zeros((B, D2), F32)

    # Fully-unrolled recurrence (T static & small); both directions ride the
    # same lanes, one (B,2H)@(2H,8H) hidden matmul per step.
    for t in range(T):
        tb = T - 1 - t
        gx_t = jnp.where(fwd_gate_lane, gx_sc[:, t, :], gx_sc[:, tb, :])  # (B, 8H)
        gates = gx_t + jnp.dot(h.astype(BF16), whh, preferred_element_type=F32)

        # PyTorch gate order i, f, g, o; each slice is a full 128-lane vreg.
        i = jax.nn.sigmoid(gates[:, 0 * D2:1 * D2])
        f = jax.nn.sigmoid(gates[:, 1 * D2:2 * D2])
        g = jnp.tanh(gates[:, 2 * D2:3 * D2])
        o = jax.nn.sigmoid(gates[:, 3 * D2:4 * D2])
        c_new = f * c + i * g
        h_new = o * jnp.tanh(c_new)

        m = step_mask[t]                        # (B, 2H) precomputed mask
        h = jnp.where(m, h_new, h)              # freeze state past each length
        c = jnp.where(m, c_new, c)

        # packed-sequence semantics: zeros at padded positions.
        out_sc[t, :, :H] = jnp.where(m[:, :H], h_new[:, :H], 0.0)
        out_sc[tb, :, H:] = jnp.where(m[:, H:], h_new[:, H:], 0.0)

    # ---- fused position-wise FFN + residual + LayerNorm(eps=1e-6)
    x2 = out_sc[...].reshape(T * B, D2)                              # f32
    h1 = jnp.maximum(
        jnp.dot(x2.astype(BF16), w1_ref[...], preferred_element_type=F32)
        + b1_ref[...], 0.0)
    y = (jnp.dot(h1.astype(BF16), w2_ref[...], preferred_element_type=F32)
         + b2_ref[...] + x2)                                         # residual
    mu = jnp.mean(y, axis=-1, keepdims=True)
    var = jnp.mean((y - mu) ** 2, axis=-1, keepdims=True)
    out_tm = ((y - mu) * jax.lax.rsqrt(var + 1e-6)
              * gamma_ref[...] + beta_ref[...]).reshape(T, B, D2)

    # Batch-first store straight from VMEM (no wrapper-side XLA transpose).
    for t in range(T):
        out_ref[:, t, :] = out_tm[t]


# ------------------------------ JAX wrapper ---------------------------------

_VMEM = pl.BlockSpec(memory_space=pltpu.MemorySpace.VMEM)


def pack_params(p):
    """Pack / pre-cast weights ONCE (cached; not re-done inside the jitted fwd)."""
    H = p["whh_f"].shape[0]

    def interleave_gates(af, ab):
        lead = af.shape[:-1]
        a = jnp.concatenate([af.reshape(*lead, 4, H),
                             ab.reshape(*lead, 4, H)], axis=-1)      # (.., 4, 2H)
        return a.reshape(*lead, 8 * H)

    zeros = jnp.zeros((H, 4, H), F32)
    top = jnp.concatenate([p["whh_f"].reshape(H, 4, H), zeros], axis=-1)
    bot = jnp.concatenate([zeros, p["whh_b"].reshape(H, 4, H)], axis=-1)
    whh = jnp.concatenate([top, bot], axis=0).reshape(2 * H, 8 * H)

    return {
        "wih": interleave_gates(p["wih_f"], p["wih_b"]).astype(BF16),  # (Din, 8H)
        "whh": whh.astype(BF16),                                       # (2H, 8H)
        "b": interleave_gates(p["b_f"], p["b_b"]),                     # (1, 8H) f32
        "w1": p["w1"].astype(BF16), "b1": p["b1"],
        "w2": p["w2"].astype(BF16), "b2": p["b2"],
        "gamma": p["gamma"], "beta": p["beta"],
    }


@jax.jit
def encoder_layer_forward(enc_input, lengths, pp):
    """enc_input: (B, T, 2*d_model_i) f32; lengths: (B,) i32 (slf_attn_mask)."""
    B, T, Din = enc_input.shape
    H = pp["whh"].shape[0] // 2

    x = enc_input.reshape(B * T, Din)                 # pure reshape, no transpose
    lens = lengths.reshape(B, 1).astype(jnp.int32)

    # TODO(synk): for production sizes add a row-tiled "parallel" grid for the
    # FFN tail, per-generation VMEM limits, and a v7x two-core split.
    return pl.pallas_call(
        encoder_layer_kernel,
        out_shape=jax.ShapeDtypeStruct((B, T, 2 * H), F32),
        in_specs=[_VMEM] * 11,
        out_specs=_VMEM,
        scratch_shapes=[pltpu.VMEM((B, T, 8 * H), F32),   # hoisted gate slab
                        pltpu.VMEM((T, B, 2 * H), F32)],  # biLSTM outputs
    )(x, lens, pp["wih"], pp["whh"], pp["b"],
      pp["w1"], pp["b1"], pp["w2"], pp["b2"], pp["gamma"], pp["beta"])


# --------------------------- pure-JAX reference ------------------------------
# Mirrors the kernel numerics (bf16 MXU operands, f32 accumulation/elementwise).

def reference_forward(enc_input, lengths, p):
    B, T, Din = enc_input.shape
    H = p["whh_f"].shape[0]

    def run_direction(wih, whh, b, reverse):
        wih = wih.astype(BF16)
        whh = whh.astype(BF16)
        h = jnp.zeros((B, H), F32)
        c = jnp.zeros((B, H), F32)
        outs = [None] * T
        order = range(T - 1, -1, -1) if reverse else range(T)
        for t in order:
            x_t = enc_input[:, t, :].astype(BF16)
            g = (jnp.dot(x_t, wih, preferred_element_type=F32) + b
                 + jnp.dot(h.astype(BF16), whh, preferred_element_type=F32))
            i = jax.nn.sigmoid(g[:, :H])
            f = jax.nn.sigmoid(g[:, H:2 * H])
            gg = jnp.tanh(g[:, 2 * H:3 * H])
            o = jax.nn.sigmoid(g[:, 3 * H:])
            c_new = f * c + i * gg
            h_new = o * jnp.tanh(c_new)
            m = (t < lengths)[:, None]
            h = jnp.where(m, h_new, h)
            c = jnp.where(m, c_new, c)
            outs[t] = jnp.where(m, h, 0.0)
        return jnp.stack(outs, axis=1)                    # (B, T, H)

    of = run_direction(p["wih_f"], p["whh_f"], p["b_f"], reverse=False)
    ob = run_direction(p["wih_b"], p["whh_b"], p["b_b"], reverse=True)
    lstm_out = jnp.concatenate([of, ob], axis=-1)         # (B, T, 2H)

    x = lstm_out.reshape(B * T, 2 * H)
    h1 = jnp.maximum(
        jnp.dot(x.astype(BF16), p["w1"].astype(BF16), preferred_element_type=F32)
        + p["b1"], 0.0)
    y = (jnp.dot(h1.astype(BF16), p["w2"].astype(BF16), preferred_element_type=F32)
         + p["b2"] + x)
    mu = y.mean(-1, keepdims=True)
    var = ((y - mu) ** 2).mean(-1, keepdims=True)
    out = (y - mu) * jax.lax.rsqrt(var + 1e-6) * p["gamma"] + p["beta"]
    return out.reshape(B, T, 2 * H)


# --------------------------------- setup -------------------------------------

def init_params(key, d_model_i, d_inner):
    H = d_model_i
    Din = 2 * d_model_i          # LSTM input size = d_model_i + d_model_i
    D = 2 * d_model_i            # biLSTM output / FFN model dim
    ks = jax.random.split(key, 10)
    k_lstm = 1.0 / np.sqrt(H)

    def u(k, shape, scale):
        return jax.random.uniform(k, shape, F32, -scale, scale)

    return {
        # LSTM weights stored as (in, 4H) so kernels do x @ W; gate order i,f,g,o
        "wih_f": u(ks[0], (Din, 4 * H), k_lstm),
        "whh_f": u(ks[1], (H, 4 * H), k_lstm),
        "b_f":   u(ks[2], (1, 4 * H), k_lstm),    # = b_ih + b_hh combined
        "wih_b": u(ks[3], (Din, 4 * H), k_lstm),
        "whh_b": u(ks[4], (H, 4 * H), k_lstm),
        "b_b":   u(ks[5], (1, 4 * H), k_lstm),
        # PositionwiseFeedForward: Linear(D, d_inner) -> ReLU -> Linear(d_inner, D)
        "w1": u(ks[6], (D, d_inner), 1.0 / np.sqrt(D)),
        "b1": u(ks[7], (1, d_inner), 1.0 / np.sqrt(D)),
        "w2": u(ks[8], (d_inner, D), 1.0 / np.sqrt(d_inner)),
        "b2": u(ks[9], (1, D), 1.0 / np.sqrt(d_inner)),
        # LayerNorm(D, eps=1e-6): default gamma=1, beta=0
        "gamma": jnp.ones((1, D), F32),
        "beta":  jnp.zeros((1, D), F32),
    }


if __name__ == "__main__":
    # Lane-friendly small demo dims: H=64 -> 2H=128 state/FFN width, 8H=512 gates.
    B, T, d_model_i, d_inner = 8, 8, 64, 256
    key = jax.random.PRNGKey(0)
    k_in, k_par = jax.random.split(key)

    params = init_params(k_par, d_model_i, d_inner)
    packed = pack_params(params)                    # one-time packed/pre-cast weights
    enc_input = jax.random.normal(k_in, (B, T, 2 * d_model_i), F32)
    # slf_attn_mask carries per-sequence valid lengths (pack_padded_sequence arg)
    lengths = jnp.array([8, 5, 3, 6, 8, 1, 7, 4], dtype=jnp.int32)

    out = jax.block_until_ready(encoder_layer_forward(enc_input, lengths, packed))
    ref = jax.block_until_ready(reference_forward(enc_input, lengths, params))

    np.testing.assert_allclose(np.asarray(out), np.asarray(ref), rtol=1e-3, atol=1e-3)
    assert out.shape == (B, T, 2 * d_model_i)
    print("KERNEL_OK")
</pallas_src>

<mosaic_0001>
module attributes {stable_mosaic.version = 11 : i64} {
  func.func @encoder_layer_kernel(%arg0: memref<64x128xf32, #tpu.memory_space<vmem>>, %arg1: memref<8x1xi32, #tpu.memory_space<vmem>>, %arg2: memref<128x512xbf16, #tpu.memory_space<vmem>>, %arg3: memref<128x512xbf16, #tpu.memory_space<vmem>>, %arg4: memref<1x512xf32, #tpu.memory_space<vmem>>, %arg5: memref<128x256xbf16, #tpu.memory_space<vmem>>, %arg6: memref<1x256xf32, #tpu.memory_space<vmem>>, %arg7: memref<256x128xbf16, #tpu.memory_space<vmem>>, %arg8: memref<1x128xf32, #tpu.memory_space<vmem>>, %arg9: memref<1x128xf32, #tpu.memory_space<vmem>>, %arg10: memref<1x128xf32, #tpu.memory_space<vmem>>, %arg11: memref<8x8x128xf32, #tpu.memory_space<vmem>>, %arg12: memref<8x8x512xf32, #tpu.memory_space<vmem>>, %arg13: memref<8x8x128xf32, #tpu.memory_space<vmem>>) attributes {dimension_semantics = [], scalar_prefetch = 0 : i64, scratch_operands = 2 : i64, tpu.core_type = #tpu.core_type<tc>} {
    %c0 = arith.constant 0 : index
    %c0_0 = arith.constant 0 : index
    %0 = vector.load %arg0[%c0, %c0_0] : memref<64x128xf32, #tpu.memory_space<vmem>>, vector<64x128xf32>
    %1 = arith.truncf %0 : vector<64x128xf32> to vector<64x128xbf16>
    %c0_1 = arith.constant 0 : index
    %c0_2 = arith.constant 0 : index
    %2 = vector.load %arg2[%c0_1, %c0_2] : memref<128x512xbf16, #tpu.memory_space<vmem>>, vector<128x512xbf16>
    %cst = arith.constant dense<0.000000e+00> : vector<64x512xf32>
    %3 = tpu.matmul %1, %2, %cst {dimension_numbers = #tpu.dot_dimension_numbers<[1], [0], [0], [1], [0, 0, 1, 1], [], []>} : vector<64x128xbf16>, vector<128x512xbf16>, vector<64x512xf32> -> vector<64x512xf32>
    %c0_3 = arith.constant 0 : index
    %c0_4 = arith.constant 0 : index
    %4 = vector.load %arg4[%c0_3, %c0_4] : memref<1x512xf32, #tpu.memory_space<vmem>>, vector<1x512xf32>
    %5 = vector.broadcast %4 : vector<1x512xf32> to vector<64x512xf32>
    %6 = arith.addf %3, %5 : vector<64x512xf32>
    %7 = vector.shape_cast %6 : vector<64x512xf32> to vector<8x8x512xf32>
    %c0_5 = arith.constant 0 : index
    %c0_6 = arith.constant 0 : index
    %c0_7 = arith.constant 0 : index
    %8 = vector.load %arg12[%c0_5, %c0_6, %c0_7] : memref<8x8x512xf32, #tpu.memory_space<vmem>>, vector<8x8x512xf32>
    tpu.vector_store %arg12[%c0_5, %c0_6, %c0_7], %7 {strides = array<i32>} : memref<8x8x512xf32, #tpu.memory_space<vmem>>, vector<8x8x512xf32>,
    %c0_8 = arith.constant 0 : index
    %c0_9 = arith.constant 0 : index
    %9 = vector.load %arg3[%c0_8, %c0_9] : memref<128x512xbf16, #tpu.memory_space<vmem>>, vector<128x512xbf16>
    %c0_10 = arith.constant 0 : index
    %c0_11 = arith.constant 0 : index
    %10 = vector.load %arg1[%c0_10, %c0_11] : memref<8x1xi32, #tpu.memory_space<vmem>>, vector<8x1xi32>
    %11 = tpu.iota {dimensions = array<i32: 1>} : vector<8x512xi32>
    %c128_i32 = arith.constant 128 : i32
    %c0_i32 = arith.constant 0 : i32
    %12 = arith.cmpi eq, %c128_i32, %c0_i32 : i32
    %c1_i32 = arith.constant 1 : i32
    %13 = arith.select %12, %c1_i32, %c128_i32 : i32
    %14 = vector.broadcast %13 : i32 to vector<8x512xi32>
    %15 = arith.remsi %11, %14 : vector<8x512xi32>
    %c0_i32_12 = arith.constant 0 : i32
    %16 = vector.broadcast %c0_i32_12 : i32 to vector<8x512xi32>
    %17 = arith.cmpi ne, %15, %16 : vector<8x512xi32>
    %c0_i32_13 = arith.constant 0 : i32
    %18 = vector.broadcast %c0_i32_13 : i32 to vector<8x512xi32>
    %19 = arith.cmpi slt, %15, %18 : vector<8x512xi32>
    %c0_i32_14 = arith.constant 0 : i32
    %20 = arith.cmpi slt, %13, %c0_i32_14 : i32
    %21 = vector.broadcast %20 : i1 to vector<8x512xi1>
    %22 = vector.broadcast %21 : vector<8x512xi1> to vector<8x512xi1>
    %23 = arith.xori %19, %22 : vector<8x512xi1>
    %24 = arith.andi %23, %17 : vector<8x512xi1>
    %25 = vector.broadcast %13 : i32 to vector<8x512xi32>
    %26 = arith.addi %15, %25 : vector<8x512xi32>
    %27 = arith.select %24, %26, %15 : vector<8x512xi1>, vector<8x512xi32>
    %c64_i32 = arith.constant 64 : i32
    %28 = vector.broadcast %c64_i32 : i32 to vector<8x512xi32>
    %29 = arith.cmpi slt, %27, %28 : vector<8x512xi32>
    %30 = tpu.iota {dimensions = array<i32: 0>} : vector<8x8x128xi32>
    %31 = tpu.iota {dimensions = array<i32: 2>} : vector<8x8x128xi32>
    %c64_i32_15 = arith.constant 64 : i32
    %32 = vector.broadcast %c64_i32_15 : i32 to vector<8x8x128xi32>
    %33 = arith.cmpi slt, %31, %32 : vector<8x8x128xi32>
    %c7_i32 = arith.constant 7 : i32
    %34 = vector.broadcast %c7_i32 : i32 to vector<8x8x128xi32>
    %35 = arith.subi %34, %30 : vector<8x8x128xi32>
    %36 = arith.select %33, %30, %35 : vector<8x8x128xi1>, vector<8x8x128xi32>
    %37 = vector.shape_cast %10 : vector<8x1xi32> to vector<1x8x1xi32>
    %38 = vector.broadcast %37 : vector<1x8x1xi32> to vector<8x8x128xi32>
    %39 = arith.cmpi slt, %36, %38 : vector<8x8x128xi32>
    %cst_16 = arith.constant 0.000000e+00 : f32
    %40 = vector.broadcast %cst_16 : f32 to vector<8x128xf32>
    %cst_17 = arith.constant 0.000000e+00 : f32
    %41 = vector.broadcast %cst_17 : f32 to vector<8x128xf32>
    %c0_18 = arith.constant 0 : index
    %c0_19 = arith.constant 0 : index
    %c0_20 = arith.constant 0 : index
    %42 = vector.load %arg12[%c0_18, %c0_19, %c0_20] : memref<8x8x512xf32, #tpu.memory_space<vmem>>, vector<8x1x512xf32>
    %43 = vector.shape_cast %42 : vector<8x1x512xf32> to vector<8x512xf32>
    %c0_21 = arith.constant 0 : index
    %c7 = arith.constant 7 : index
    %c0_22 = arith.constant 0 : index
    %44 = vector.load %arg12[%c0_21, %c7, %c0_22] : memref<8x8x512xf32, #tpu.memory_space<vmem>>, vector<8x1x512xf32>
    %45 = vector.shape_cast %44 : vector<8x1x512xf32> to vector<8x512xf32>
    %46 = arith.select %29, %43, %45 : vector<8x512xi1>, vector<8x512xf32>
    %47 = arith.truncf %40 : vector<8x128xf32> to vector<8x128xbf16>
    %cst_23 = arith.constant dense<0.000000e+00> : vector<8x512xf32>
    %48 = tpu.matmul %47, %9, %cst_23 {dimension_numbers = #tpu.dot_dimension_numbers<[1], [0], [0], [1], [0, 0, 1, 1], [], []>} : vector<8x128xbf16>, vector<128x512xbf16>, vector<8x512xf32> -> vector<8x512xf32>
    %49 = arith.addf %46, %48 : vector<8x512xf32>
    %50 = vector.extract_strided_slice %49 {offsets = [0, 0], sizes = [8, 128], strides = [1, 1]} : vector<8x512xf32> to vector<8x128xf32>
    %51 = arith.negf %50 : vector<8x128xf32>
    %52 = math.exp %51 : vector<8x128xf32>
    %cst_24 = arith.constant 1.000000e+00 : f32
    %53 = vector.broadcast %cst_24 : f32 to vector<8x128xf32>
    %54 = arith.addf %53, %52 : vector<8x128xf32>
    %55 = arith.divf %53, %54 : vector<8x128xf32>
    %56 = vector.extract_strided_slice %49 {offsets = [0, 128], sizes = [8, 128], strides = [1, 1]} : vector<8x512xf32> to vector<8x128xf32>
    %57 = arith.negf %56 : vector<8x128xf32>
    %58 = math.exp %57 : vector<8x128xf32>
    %cst_25 = arith.constant 1.000000e+00 : f32
    %59 = vector.broadcast %cst_25 : f32 to vector<8x128xf32>
    %60 = arith.addf %59, %58 : vector<8x128xf32>
    %61 = arith.divf %59, %60 : vector<8x128xf32>
    %62 = vector.extract_strided_slice %49 {offsets = [0, 256], sizes = [8, 128], strides = [1, 1]} : vector<8x512xf32> to vector<8x128xf32>
    %63 = math.tanh %62 : vector<8x128xf32>
    %64 = vector.extract_strided_slice %49 {offsets = [0, 384], sizes = [8, 128], strides = [1, 1]} : vector<8x512xf32> to vector<8x128xf32>
    %65 = arith.negf %64 : vector<8x128xf32>
    %66 = math.exp %65 : vector<8x128xf32>
    %cst_26 = arith.constant 1.000000e+00 : f32
    %67 = vector.broadcast %cst_26 : f32 to vector<8x128xf32>
    %68 = arith.addf %67, %66 : vector<8x128xf32>
    %69 = arith.divf %67, %68 : vector<8x128xf32>
    %70 = arith.mulf %61, %41 : vector<8x128xf32>
    %71 = arith.mulf %55, %63 : vector<8x128xf32>
    %72 = arith.addf %70, %71 : vector<8x128xf32>
    %73 = math.tanh %72 : vector<8x128xf32>
    %74 = arith.mulf %69, %73 : vector<8x128xf32>
    %75 = vector.extract_strided_slice %39 {offsets = [0, 0, 0], sizes = [1, 8, 128], strides = [1, 1, 1]} : vector<8x8x128xi1> to vector<1x8x128xi1>
    %76 = vector.shape_cast %75 : vector<1x8x128xi1> to vector<8x128xi1>
    %77 = arith.select %76, %74, %40 : vector<8x128xi1>, vector<8x128xf32>
    %78 = arith.select %76, %72, %41 : vector<8x128xi1>, vector<8x128xf32>
    %79 = vector.extract_strided_slice %76 {offsets = [0, 0], sizes = [8, 64], strides = [1, 1]} : vector<8x128xi1> to vector<8x64xi1>
    %80 = vector.extract_strided_slice %74 {offsets = [0, 0], sizes = [8, 64], strides = [1, 1]} : vector<8x128xf32> to vector<8x64xf32>
    %cst_27 = arith.constant 0.000000e+00 : f32
    %81 = vector.broadcast %cst_27 : f32 to vector<8x64xf32>
    %82 = arith.select %79, %80, %81 : vector<8x64xi1>, vector<8x64xf32>
    %c0_28 = arith.constant 0 : index
    %c0_29 = arith.constant 0 : index
    %c0_30 = arith.constant 0 : index
    %83 = vector.load %arg13[%c0_28, %c0_29, %c0_30] : memref<8x8x128xf32, #tpu.memory_space<vmem>>, vector<1x8x64xf32>
    %84 = vector.shape_cast %83 : vector<1x8x64xf32> to vector<8x64xf32>
    %85 = vector.shape_cast %82 : vector<8x64xf32> to vector<1x8x64xf32>
    tpu.vector_store %arg13[%c0_28, %c0_29, %c0_30], %85 {strides = array<i32>} : memref<8x8x128xf32, #tpu.memory_space<vmem>>, vector<1x8x64xf32>,
    %86 = vector.extract_strided_slice %76 {offsets = [0, 64], sizes = [8, 64], strides = [1, 1]} : vector<8x128xi1> to vector<8x64xi1>
    %87 = vector.extract_strided_slice %74 {offsets = [0, 64], sizes = [8, 64], strides = [1, 1]} : vector<8x128xf32> to vector<8x64xf32>
    %cst_31 = arith.constant 0.000000e+00 : f32
    %88 = vector.broadcast %cst_31 : f32 to vector<8x64xf32>
    %89 = arith.select %86, %87, %88 : vector<8x64xi1>, vector<8x64xf32>
    %c7_32 = arith.constant 7 : index
    %c0_33 = arith.constant 0 : index
    %c64 = arith.constant 64 : index
    %90 = vector.load %arg13[%c7_32, %c0_33, %c64] : memref<8x8x128xf32, #tpu.memory_space<vmem>>, vector<1x8x64xf32>
    %91 = vector.shape_cast %90 : vector<1x8x64xf32> to vector<8x64xf32>
    %92 = vector.shape_cast %89 : vector<8x64xf32> to vector<1x8x64xf32>
    tpu.vector_store %arg13[%c7_32, %c0_33, %c64], %92 {strides = array<i32>} : memref<8x8x128xf32, #tpu.memory_space<vmem>>, vector<1x8x64xf32>,
    %c0_34 = arith.constant 0 : index
    %c1 = arith.constant 1 : index
    %c0_35 = arith.constant 0 : index
    %93 = vector.load %arg12[%c0_34, %c1, %c0_35] : memref<8x8x512xf32, #tpu.memory_space<vmem>>, vector<8x1x512xf32>
    %94 = vector.shape_cast %93 : vector<8x1x512xf32> to vector<8x512xf32>
    %c0_36 = arith.constant 0 : index
    %c6 = arith.constant 6 : index
    %c0_37 = arith.constant 0 : index
    %95 = vector.load %arg12[%c0_36, %c6, %c0_37] : memref<8x8x512xf32, #tpu.memory_space<vmem>>, vector<8x1x512xf32>
    %96 = vector.shape_cast %95 : vector<8x1x512xf32> to vector<8x512xf32>
    %97 = arith.select %29, %94, %96 : vector<8x512xi1>, vector<8x512xf32>
    %98 = arith.truncf %77 : vector<8x128xf32> to vector<8x128xbf16>
    %cst_38 = arith.constant dense<0.000000e+00> : vector<8x512xf32>
    %99 = tpu.matmul %98, %9, %cst_38 {dimension_numbers = #tpu.dot_dimension_numbers<[1], [0], [0], [1], [0, 0, 1, 1], [], []>} : vector<8x128xbf16>, vector<128x512xbf16>, vector<8x512xf32> -> vector<8x512xf32>
    %100 = arith.addf %97, %99 : vector<8x512xf32>
    %101 = vector.extract_strided_slice %100 {offsets = [0, 0], sizes = [8, 128], strides = [1, 1]} : vector<8x512xf32> to vector<8x128xf32>
    %102 = arith.negf %101 : vector<8x128xf32>
    %103 = math.exp %102 : vector<8x128xf32>
    %cst_39 = arith.constant 1.000000e+00 : f32
    %104 = vector.broadcast %cst_39 : f32 to vector<8x128xf32>
    %105 = arith.addf %104, %103 : vector<8x128xf32>
    %106 = arith.divf %104, %105 : vector<8x128xf32>
    %107 = vector.extract_strided_slice %100 {offsets = [0, 128], sizes = [8, 128], strides = [1, 1]} : vector<8x512xf32> to vector<8x128xf32>
    %108 = arith.negf %107 : vector<8x128xf32>
    %109 = math.exp %108 : vector<8x128xf32>
    %cst_40 = arith.constant 1.000000e+00 : f32
    %110 = vector.broadcast %cst_40 : f32 to vector<8x128xf32>
    %111 = arith.addf %110, %109 : vector<8x128xf32>
    %112 = arith.divf %110, %111 : vector<8x128xf32>
    %113 = vector.extract_strided_slice %100 {offsets = [0, 256], sizes = [8, 128], strides = [1, 1]} : vector<8x512xf32> to vector<8x128xf32>
    %114 = math.tanh %113 : vector<8x128xf32>
    %115 = vector.extract_strided_slice %100 {offsets = [0, 384], sizes = [8, 128], strides = [1, 1]} : vector<8x512xf32> to vector<8x128xf32>
    %116 = arith.negf %115 : vector<8x128xf32>
    %117 = math.exp %116 : vector<8x128xf32>
    %cst_41 = arith.constant 1.000000e+00 : f32
    %118 = vector.broadcast %cst_41 : f32 to vector<8x128xf32>
    %119 = arith.addf %118, %117 : vector<8x128xf32>
    %120 = arith.divf %118, %119 : vector<8x128xf32>
    %121 = arith.mulf %112, %78 : vector<8x128xf32>
    %122 = arith.mulf %106, %114 : vector<8x128xf32>
    %123 = arith.addf %121, %122 : vector<8x128xf32>
    %124 = math.tanh %123 : vector<8x128xf32>
    %125 = arith.mulf %120, %124 : vector<8x128xf32>
    %126 = vector.extract_strided_slice %39 {offsets = [1, 0, 0], sizes = [1, 8, 128], strides = [1, 1, 1]} : vector<8x8x128xi1> to vector<1x8x128xi1>
    %127 = vector.shape_cast %126 : vector<1x8x128xi1> to vector<8x128xi1>
    %128 = arith.select %127, %125, %77 : vector<8x128xi1>, vector<8x128xf32>
    %129 = arith.select %127, %123, %78 : vector<8x128xi1>, vector<8x128xf32>
    %130 = vector.extract_strided_slice %127 {offsets = [0, 0], sizes = [8, 64], strides = [1, 1]} : vector<8x128xi1> to vector<8x64xi1>
    %131 = vector.extract_strided_slice %125 {offsets = [0, 0], sizes = [8, 64], strides = [1, 1]} : vector<8x128xf32> to vector<8x64xf32>
    %cst_42 = arith.constant 0.000000e+00 : f32
    %132 = vector.broadcast %cst_42 : f32 to vector<8x64xf32>
    %133 = arith.select %130, %131, %132 : vector<8x64xi1>, vector<8x64xf32>
    %c1_43 = arith.constant 1 : index
    %c0_44 = arith.constant 0 : index
    %c0_45 = arith.constant 0 : index
    %134 = vector.load %arg13[%c1_43, %c0_44, %c0_45] : memref<8x8x128xf32, #tpu.memory_space<vmem>>, vector<1x8x64xf32>
    %135 = vector.shape_cast %134 : vector<1x8x64xf32> to vector<8x64xf32>
    %136 = vector.shape_cast %133 : vector<8x64xf32> to vector<1x8x64xf32>
    tpu.vector_store %arg13[%c1_43, %c0_44, %c0_45], %136 {strides = array<i32>} : memref<8x8x128xf32, #tpu.memory_space<vmem>>, vector<1x8x64xf32>,
    %137 = vector.extract_strided_slice %127 {offsets = [0, 64], sizes = [8, 64], strides = [1, 1]} : vector<8x128xi1> to vector<8x64xi1>
    %138 = vector.extract_strided_slice %125 {offsets = [0, 64], sizes = [8, 64], strides = [1, 1]} : vector<8x128xf32> to vector<8x64xf32>
    %cst_46 = arith.constant 0.000000e+00 : f32
    %139 = vector.broadcast %cst_46 : f32 to vector<8x64xf32>
    %140 = arith.select %137, %138, %139 : vector<8x64xi1>, vector<8x64xf32>
    %c6_47 = arith.constant 6 : index
    %c0_48 = arith.constant 0 : index
    %c64_49 = arith.constant 64 : index
    %141 = vector.load %arg13[%c6_47, %c0_48, %c64_49] : memref<8x8x128xf32, #tpu.memory_space<vmem>>, vector<1x8x64xf32>
    %142 = vector.shape_cast %141 : vector<1x8x64xf32> to vector<8x64xf32>
    %143 = vector.shape_cast %140 : vector<8x64xf32> to vector<1x8x64xf32>
    tpu.vector_store %arg13[%c6_47, %c0_48, %c64_49], %143 {strides = array<i32>} : memref<8x8x128xf32, #tpu.memory_space<vmem>>, vector<1x8x64xf32>,
    %c0_50 = arith.constant 0 : index
    %c2 = arith.constant 2 : index
    %c0_51 = arith.constant 0 : index
    %144 = vector.load %arg12[%c0_50, %c2, %c0_51] : memref<8x8x512xf32, #tpu.memory_space<vmem>>, vector<8x1x512xf32>
    %145 = vector.shape_cast %144 : vector<8x1x512xf32> to vector<8x512xf32>
    %c0_52 = arith.constant 0 : index
    %c5 = arith.constant 5 : index
    %c0_53 = arith.constant 0 : index
    %146 = vector.load %arg12[%c0_52, %c5, %c0_53] : memref<8x8x512xf32, #tpu.memory_space<vmem>>, vector<8x1x512xf32>
    %147 = vector.shape_cast %146 : vector<8x1x512xf32> to vector<8x512xf32>
    %148 = arith.select %29, %145, %147 : vector<8x512xi1>, vector<8x512xf32>
    %149 = arith.truncf %128 : vector<8x128xf32> to vector<8x128xbf16>
    %cst_54 = arith.constant dense<0.000000e+00> : vector<8x512xf32>
    %150 = tpu.matmul %149, %9, %cst_54 {dimension_numbers = #tpu.dot_dimension_numbers<[1], [0], [0], [1], [0, 0, 1, 1], [], []>} : vector<8x128xbf16>, vector<128x512xbf16>, vector<8x512xf32> -> vector<8x512xf32>
    %151 = arith.addf %148, %150 : vector<8x512xf32>
    %152 = vector.extract_strided_slice %151 {offsets = [0, 0], sizes = [8, 128], strides = [1, 1]} : vector<8x512xf32> to vector<8x128xf32>
    %153 = arith.negf %152 : vector<8x128xf32>
    %154 = math.exp %153 : vector<8x128xf32>
    %cst_55 = arith.constant 1.000000e+00 : f32
    %155 = vector.broadcast %cst_55 : f32 to vector<8x128xf32>
    %156 = arith.addf %155, %154 : vector<8x128xf32>
    %157 = arith.divf %155, %156 : vector<8x128xf32>
    %158 = vector.extract_strided_slice %151 {offsets = [0, 128], sizes = [8, 128], strides = [1, 1]} : vector<8x512xf32> to vector<8x128xf32>
    %159 = arith.negf %158 : vector<8x128xf32>
    %160 = math.exp %159 : vector<8x128xf32>
    %cst_56 = arith.constant 1.000000e+00 : f32
    %161 = vector.broadcast %cst_56 : f32 to vector<8x128xf32>
    %162 = arith.addf %161, %160 : vector<8x128xf32>
    %163 = arith.divf %161, %162 : vector<8x128xf32>
    %164 = vector.extract_strided_slice %151 {offsets = [0, 256], sizes = [8, 128], strides = [1, 1]} : vector<8x512xf32> to vector<8x128xf32>
    %165 = math.tanh %164 : vector<8x128xf32>
    %166 = vector.extract_strided_slice %151 {offsets = [0, 384], sizes = [8, 128], strides = [1, 1]} : vector<8x512xf32> to vector<8x128xf32>
    %167 = arith.negf %166 : vector<8x128xf32>
    %168 = math.exp %167 : vector<8x128xf32>
    %cst_57 = arith.constant 1.000000e+00 : f32
    %169 = vector.broadcast %cst_57 : f32 to vector<8x128xf32>
    %170 = arith.addf %169, %168 : vector<8x128xf32>
    %171 = arith.divf %169, %170 : vector<8x128xf32>
    %172 = arith.mulf %163, %129 : vector<8x128xf32>
    %173 = arith.mulf %157, %165 : vector<8x128xf32>
    %174 = arith.addf %172, %173 : vector<8x128xf32>
    %175 = math.tanh %174 : vector<8x128xf32>
    %176 = arith.mulf %171, %175 : vector<8x128xf32>
    %177 = vector.extract_strided_slice %39 {offsets = [2, 0, 0], sizes = [1, 8, 128], strides = [1, 1, 1]} : vector<8x8x128xi1> to vector<1x8x128xi1>
    %178 = vector.shape_cast %177 : vector<1x8x128xi1> to vector<8x128xi1>
    %179 = arith.select %178, %176, %128 : vector<8x128xi1>, vector<8x128xf32>
    %180 = arith.select %178, %174, %129 : vector<8x128xi1>, vector<8x128xf32>
    %181 = vector.extract_strided_slice %178 {offsets = [0, 0], sizes = [8, 64], strides = [1, 1]} : vector<8x128xi1> to vector<8x64xi1>
    %182 = vector.extract_strided_slice %176 {offsets = [0, 0], sizes = [8, 64], strides = [1, 1]} : vector<8x128xf32> to vector<8x64xf32>
    %cst_58 = arith.constant 0.000000e+00 : f32
    %183 = vector.broadcast %cst_58 : f32 to vector<8x64xf32>
    %184 = arith.select %181, %182, %183 : vector<8x64xi1>, vector<8x64xf32>
    %c2_59 = arith.constant 2 : index
    %c0_60 = arith.constant 0 : index
    %c0_61 = arith.constant 0 : index
    %185 = vector.load %arg13[%c2_59, %c0_60, %c0_61] : memref<8x8x128xf32, #tpu.memory_space<vmem>>, vector<1x8x64xf32>
    %186 = vector.shape_cast %185 : vector<1x8x64xf32> to vector<8x64xf32>
    %187 = vector.shape_cast %184 : vector<8x64xf32> to vector<1x8x64xf32>
    tpu.vector_store %arg13[%c2_59, %c0_60, %c0_61], %187 {strides = array<i32>} : memref<8x8x128xf32, #tpu.memory_space<vmem>>, vector<1x8x64xf32>,
    %188 = vector.extract_strided_slice %178 {offsets = [0, 64], sizes = [8, 64], strides = [1, 1]} : vector<8x128xi1> to vector<8x64xi1>
    %189 = vector.extract_strided_slice %176 {offsets = [0, 64], sizes = [8, 64], strides = [1, 1]} : vector<8x128xf32> to vector<8x64xf32>
    %cst_62 = arith.constant 0.000000e+00 : f32
    %190 = vector.broadcast %cst_62 : f32 to vector<8x64xf32>
    %191 = arith.select %188, %189, %190 : vector<8x64xi1>, vector<8x64xf32>
    %c5_63 = arith.constant 5 : index
    %c0_64 = arith.constant 0 : index
    %c64_65 = arith.constant 64 : index
    %192 = vector.load %arg13[%c5_63, %c0_64, %c64_65] : memref<8x8x128xf32, #tpu.memory_space<vmem>>, vector<1x8x64xf32>
    %193 = vector.shape_cast %192 : vector<1x8x64xf32> to vector<8x64xf32>
    %194 = vector.shape_cast %191 : vector<8x64xf32> to vector<1x8x64xf32>
    tpu.vector_store %arg13[%c5_63, %c0_64, %c64_65], %194 {strides = array<i32>} : memref<8x8x128xf32, #tpu.memory_space<vmem>>, vector<1x8x64xf32>,
    %c0_66 = arith.constant 0 : index
    %c3 = arith.constant 3 : index
    %c0_67 = arith.constant 0 : index
    %195 = vector.load %arg12[%c0_66, %c3, %c0_67] : memref<8x8x512xf32, #tpu.memory_space<vmem>>, vector<8x1x512xf32>
    %196 = vector.shape_cast %195 : vector<8x1x512xf32> to vector<8x512xf32>
    %c0_68 = arith.constant 0 : index
    %c4 = arith.constant 4 : index
    %c0_69 = arith.constant 0 : index
    %197 = vector.load %arg12[%c0_68, %c4, %c0_69] : memref<8x8x512xf32, #tpu.memory_space<vmem>>, vector<8x1x512xf32>
    %198 = vector.shape_cast %197 : vector<8x1x512xf32> to vector<8x512xf32>
    %199 = arith.select %29, %196, %198 : vector<8x512xi1>, vector<8x512xf32>
    %200 = arith.truncf %179 : vector<8x128xf32> to vector<8x128xbf16>
    %cst_70 = arith.constant dense<0.000000e+00> : vector<8x512xf32>
    %201 = tpu.matmul %200, %9, %cst_70 {dimension_numbers = #tpu.dot_dimension_numbers<[1], [0], [0], [1], [0, 0, 1, 1], [], []>} : vector<8x128xbf16>, vector<128x512xbf16>, vector<8x512xf32> -> vector<8x512xf32>
    %202 = arith.addf %199, %201 : vector<8x512xf32>
    %203 = vector.extract_strided_slice %202 {offsets = [0, 0], sizes = [8, 128], strides = [1, 1]} : vector<8x512xf32> to vector<8x128xf32>
    %204 = arith.negf %203 : vector<8x128xf32>
    %205 = math.exp %204 : vector<8x128xf32>
    %cst_71 = arith.constant 1.000000e+00 : f32
    %206 = vector.broadcast %cst_71 : f32 to vector<8x128xf32>
    %207 = arith.addf %206, %205 : vector<8x128xf32>
    %208 = arith.divf %206, %207 : vector<8x128xf32>
    %209 = vector.extract_strided_slice %202 {offsets = [0, 128], sizes = [8, 128], strides = [1, 1]} : vector<8x512xf32> to vector<8x128xf32>
    %210 = arith.negf %209 : vector<8x128xf32>
    %211 = math.exp %210 : vector<8x128xf32>
    %cst_72 = arith.constant 1.000000e+00 : f32
    %212 = vector.broadcast %cst_72 : f32 to vector<8x128xf32>
    %213 = arith.addf %212, %211 : vector<8x128xf32>
    %214 = arith.divf %212, %213 : vector<8x128xf32>
    %215 = vector.extract_strided_slice %202 {offsets = [0, 256], sizes = [8, 128], strides = [1, 1]} : vector<8x512xf32> to vector<8x128xf32>
    %216 = math.tanh %215 : vector<8x128xf32>
    %217 = vector.extract_strided_slice %202 {offsets = [0, 384], sizes = [8, 128], strides = [1, 1]} : vector<8x512xf32> to vector<8x128xf32>
    %218 = arith.negf %217 : vector<8x128xf32>
    %219 = math.exp %218 : vector<8x128xf32>
    %cst_73 = arith.constant 1.000000e+00 : f32
    %220 = vector.broadcast %cst_73 : f32 to vector<8x128xf32>
    %221 = arith.addf %220, %219 : vector<8x128xf32>
    %222 = arith.divf %220, %221 : vector<8x128xf32>
    %223 = arith.mulf %214, %180 : vector<8x128xf32>
    %224 = arith.mulf %208, %216 : vector<8x128xf32>
    %225 = arith.addf %223, %224 : vector<8x128xf32>
    %226 = math.tanh %225 : vector<8x128xf32>
    %227 = arith.mulf %222, %226 : vector<8x128xf32>
    %228 = vector.extract_strided_slice %39 {offsets = [3, 0, 0], sizes = [1, 8, 128], strides = [1, 1, 1]} : vector<8x8x128xi1> to vector<1x8x128xi1>
    %229 = vector.shape_cast %228 : vector<1x8x128xi1> to vector<8x128xi1>
    %230 = arith.select %229, %227, %179 : vector<8x128xi1>, vector<8x128xf32>
    %231 = arith.select %229, %225, %180 : vector<8x128xi1>, vector<8x128xf32>
    %232 = vector.extract_strided_slice %229 {offsets = [0, 0], sizes = [8, 64], strides = [1, 1]} : vector<8x128xi1> to vector<8x64xi1>
    %233 = vector.extract_strided_slice %227 {offsets = [0, 0], sizes = [8, 64], strides = [1, 1]} : vector<8x128xf32> to vector<8x64xf32>
    %cst_74 = arith.constant 0.000000e+00 : f32
    %234 = vector.broadcast %cst_74 : f32 to vector<8x64xf32>
    %235 = arith.select %232, %233, %234 : vector<8x64xi1>, vector<8x64xf32>
    %c3_75 = arith.constant 3 : index
    %c0_76 = arith.constant 0 : index
    %c0_77 = arith.constant 0 : index
    %236 = vector.load %arg13[%c3_75, %c0_76, %c0_77] : memref<8x8x128xf32, #tpu.memory_space<vmem>>, vector<1x8x64xf32>
    %237 = vector.shape_cast %236 : vector<1x8x64xf32> to vector<8x64xf32>
    %238 = vector.shape_cast %235 : vector<8x64xf32> to vector<1x8x64xf32>
    tpu.vector_store %arg13[%c3_75, %c0_76, %c0_77], %238 {strides = array<i32>} : memref<8x8x128xf32, #tpu.memory_space<vmem>>, vector<1x8x64xf32>,
    %239 = vector.extract_strided_slice %229 {offsets = [0, 64], sizes = [8, 64], strides = [1, 1]} : vector<8x128xi1> to vector<8x64xi1>
    %240 = vector.extract_strided_slice %227 {offsets = [0, 64], sizes = [8, 64], strides = [1, 1]} : vector<8x128xf32> to vector<8x64xf32>
    %cst_78 = arith.constant 0.000000e+00 : f32
    %241 = vector.broadcast %cst_78 : f32 to vector<8x64xf32>
    %242 = arith.select %239, %240, %241 : vector<8x64xi1>, vector<8x64xf32>
    %c4_79 = arith.constant 4 : index
    %c0_80 = arith.constant 0 : index
    %c64_81 = arith.constant 64 : index
    %243 = vector.load %arg13[%c4_79, %c0_80, %c64_81] : memref<8x8x128xf32, #tpu.memory_space<vmem>>, vector<1x8x64xf32>
    %244 = vector.shape_cast %243 : vector<1x8x64xf32> to vector<8x64xf32>
    %245 = vector.shape_cast %242 : vector<8x64xf32> to vector<1x8x64xf32>
    tpu.vector_store %arg13[%c4_79, %c0_80, %c64_81], %245 {strides = array<i32>} : memref<8x8x128xf32, #tpu.memory_space<vmem>>, vector<1x8x64xf32>,
    %c0_82 = arith.constant 0 : index
    %c4_83 = arith.constant 4 : index
    %c0_84 = arith.constant 0 : index
    %246 = vector.load %arg12[%c0_82, %c4_83, %c0_84] : memref<8x8x512xf32, #tpu.memory_space<vmem>>, vector<8x1x512xf32>
    %247 = vector.shape_cast %246 : vector<8x1x512xf32> to vector<8x512xf32>
    %c0_85 = arith.constant 0 : index
    %c3_86 = arith.constant 3 : index
    %c0_87 = arith.constant 0 : index
    %248 = vector.load %arg12[%c0_85, %c3_86, %c0_87] : memref<8x8x512xf32, #tpu.memory_space<vmem>>, vector<8x1x512xf32>
    %249 = vector.shape_cast %248 : vector<8x1x512xf32> to vector<8x512xf32>
    %250 = arith.select %29, %247, %249 : vector<8x512xi1>, vector<8x512xf32>
    %251 = arith.truncf %230 : vector<8x128xf32> to vector<8x128xbf16>
    %cst_88 = arith.constant dense<0.000000e+00> : vector<8x512xf32>
    %252 = tpu.matmul %251, %9, %cst_88 {dimension_numbers = #tpu.dot_dimension_numbers<[1], [0], [0], [1], [0, 0, 1, 1], [], []>} : vector<8x128xbf16>, vector<128x512xbf16>, vector<8x512xf32> -> vector<8x512xf32>
    %253 = arith.addf %250, %252 : vector<8x512xf32>
    %254 = vector.extract_strided_slice %253 {offsets = [0, 0], sizes = [8, 128], strides = [1, 1]} : vector<8x512xf32> to vector<8x128xf32>
    %255 = arith.negf %254 : vector<8x128xf32>
    %256 = math.exp %255 : vector<8x128xf32>
    %cst_89 = arith.constant 1.000000e+00 : f32
    %257 = vector.broadcast %cst_89 : f32 to vector<8x128xf32>
    %258 = arith.addf %257, %256 : vector<8x128xf32>
    %259 = arith.divf %257, %258 : vector<8x128xf32>
    %260 = vector.extract_strided_slice %253 {offsets = [0, 128], sizes = [8, 128], strides = [1, 1]} : vector<8x512xf32> to vector<8x128xf32>
    %261 = arith.negf %260 : vector<8x128xf32>
    %262 = math.exp %261 : vector<8x128xf32>
    %cst_90 = arith.constant 1.000000e+00 : f32
    %263 = vector.broadcast %cst_90 : f32 to vector<8x128xf32>
    %264 = arith.addf %263, %262 : vector<8x128xf32>
    %265 = arith.divf %263, %264 : vector<8x128xf32>
    %266 = vector.extract_strided_slice %253 {offsets = [0, 256], sizes = [8, 128], strides = [1, 1]} : vector<8x512xf32> to vector<8x128xf32>
    %267 = math.tanh %266 : vector<8x128xf32>
    %268 = vector.extract_strided_slice %253 {offsets = [0, 384], sizes = [8, 128], strides = [1, 1]} : vector<8x512xf32> to vector<8x128xf32>
    %269 = arith.negf %268 : vector<8x128xf32>
    %270 = math.exp %269 : vector<8x128xf32>
    %cst_91 = arith.constant 1.000000e+00 : f32
    %271 = vector.broadcast %cst_91 : f32 to vector<8x128xf32>
    %272 = arith.addf %271, %270 : vector<8x128xf32>
    %273 = arith.divf %271, %272 : vector<8x128xf32>
    %274 = arith.mulf %265, %231 : vector<8x128xf32>
    %275 = arith.mulf %259, %267 : vector<8x128xf32>
    %276 = arith.addf %274, %275 : vector<8x128xf32>
    %277 = math.tanh %276 : vector<8x128xf32>
    %278 = arith.mulf %273, %277 : vector<8x128xf32>
    %279 = vector.extract_strided_slice %39 {offsets = [4, 0, 0], sizes = [1, 8, 128], strides = [1, 1, 1]} : vector<8x8x128xi1> to vector<1x8x128xi1>
    %280 = vector.shape_cast %279 : vector<1x8x128xi1> to vector<8x128xi1>
    %281 = arith.select %280, %278, %230 : vector<8x128xi1>, vector<8x128xf32>
    %282 = arith.select %280, %276, %231 : vector<8x128xi1>, vector<8x128xf32>
    %283 = vector.extract_strided_slice %280 {offsets = [0, 0], sizes = [8, 64], strides = [1, 1]} : vector<8x128xi1> to vector<8x64xi1>
    %284 = vector.extract_strided_slice %278 {offsets = [0, 0], sizes = [8, 64], strides = [1, 1]} : vector<8x128xf32> to vector<8x64xf32>
    %cst_92 = arith.constant 0.000000e+00 : f32
    %285 = vector.broadcast %cst_92 : f32 to vector<8x64xf32>
    %286 = arith.select %283, %284, %285 : vector<8x64xi1>, vector<8x64xf32>
    %c4_93 = arith.constant 4 : index
    %c0_94 = arith.constant 0 : index
    %c0_95 = arith.constant 0 : index
    %287 = vector.load %arg13[%c4_93, %c0_94, %c0_95] : memref<8x8x128xf32, #tpu.memory_space<vmem>>, vector<1x8x64xf32>
    %288 = vector.shape_cast %287 : vector<1x8x64xf32> to vector<8x64xf32>
    %289 = vector.shape_cast %286 : vector<8x64xf32> to vector<1x8x64xf32>
    tpu.vector_store %arg13[%c4_93, %c0_94, %c0_95], %289 {strides = array<i32>} : memref<8x8x128xf32, #tpu.memory_space<vmem>>, vector<1x8x64xf32>,
    %290 = vector.extract_strided_slice %280 {offsets = [0, 64], sizes = [8, 64], strides = [1, 1]} : vector<8x128xi1> to vector<8x64xi1>
    %291 = vector.extract_strided_slice %278 {offsets = [0, 64], sizes = [8, 64], strides = [1, 1]} : vector<8x128xf32> to vector<8x64xf32>
    %cst_96 = arith.constant 0.000000e+00 : f32
    %292 = vector.broadcast %cst_96 : f32 to vector<8x64xf32>
    %293 = arith.select %290, %291, %292 : vector<8x64xi1>, vector<8x64xf32>
    %c3_97 = arith.constant 3 : index
    %c0_98 = arith.constant 0 : index
    %c64_99 = arith.constant 64 : index
    %294 = vector.load %arg13[%c3_97, %c0_98, %c64_99] : memref<8x8x128xf32, #tpu.memory_space<vmem>>, vector<1x8x64xf32>
    %295 = vector.shape_cast %294 : vector<1x8x64xf32> to vector<8x64xf32>
    %296 = vector.shape_cast %293 : vector<8x64xf32> to vector<1x8x64xf32>
    tpu.vector_store %arg13[%c3_97, %c0_98, %c64_99], %296 {strides = array<i32>} : memref<8x8x128xf32, #tpu.memory_space<vmem>>, vector<1x8x64xf32>,
    %c0_100 = arith.constant 0 : index
    %c5_101 = arith.constant 5 : index
    %c0_102 = arith.constant 0 : index
    %297 = vector.load %arg12[%c0_100, %c5_101, %c0_102] : memref<8x8x512xf32, #tpu.memory_space<vmem>>, vector<8x1x512xf32>
    %298 = vector.shape_cast %297 : vector<8x1x512xf32> to vector<8x512xf32>
    %c0_103 = arith.constant 0 : index
    %c2_104 = arith.constant 2 : index
    %c0_105 = arith.constant 0 : index
    %299 = vector.load %arg12[%c0_103, %c2_104, %c0_105] : memref<8x8x512xf32, #tpu.memory_space<vmem>>, vector<8x1x512xf32>
    %300 = vector.shape_cast %299 : vector<8x1x512xf32> to vector<8x512xf32>
    %301 = arith.select %29, %298, %300 : vector<8x512xi1>, vector<8x512xf32>
    %302 = arith.truncf %281 : vector<8x128xf32> to vector<8x128xbf16>
    %cst_106 = arith.constant dense<0.000000e+00> : vector<8x512xf32>
    %303 = tpu.matmul %302, %9, %cst_106 {dimension_numbers = #tpu.dot_dimension_numbers<[1], [0], [0], [1], [0, 0, 1, 1], [], []>} : vector<8x128xbf16>, vector<128x512xbf16>, vector<8x512xf32> -> vector<8x512xf32>
    %304 = arith.addf %301, %303 : vector<8x512xf32>
    %305 = vector.extract_strided_slice %304 {offsets = [0, 0], sizes = [8, 128], strides = [1, 1]} : vector<8x512xf32> to vector<8x128xf32>
    %306 = arith.negf %305 : vector<8x128xf32>
    %307 = math.exp %306 : vector<8x128xf32>
    %cst_107 = arith.constant 1.000000e+00 : f32
    %308 = vector.broadcast %cst_107 : f32 to vector<8x128xf32>
    %309 = arith.addf %308, %307 : vector<8x128xf32>
    %310 = arith.divf %308, %309 : vector<8x128xf32>
    %311 = vector.extract_strided_slice %304 {offsets = [0, 128], sizes = [8, 128], strides = [1, 1]} : vector<8x512xf32> to vector<8x128xf32>
    %312 = arith.negf %311 : vector<8x128xf32>
    %313 = math.exp %312 : vector<8x128xf32>
    %cst_108 = arith.constant 1.000000e+00 : f32
    %314 = vector.broadcast %cst_108 : f32 to vector<8x128xf32>
    %315 = arith.addf %314, %313 : vector<8x128xf32>
    %316 = arith.divf %314, %315 : vector<8x128xf32>
    %317 = vector.extract_strided_slice %304 {offsets = [0, 256], sizes = [8, 128], strides = [1, 1]} : vector<8x512xf32> to vector<8x128xf32>
    %318 = math.tanh %317 : vector<8x128xf32>
    %319 = vector.extract_strided_slice %304 {offsets = [0, 384], sizes = [8, 128], strides = [1, 1]} : vector<8x512xf32> to vector<8x128xf32>
    %320 = arith.negf %319 : vector<8x128xf32>
    %321 = math.exp %320 : vector<8x128xf32>
    %cst_109 = arith.constant 1.000000e+00 : f32
    %322 = vector.broadcast %cst_109 : f32 to vector<8x128xf32>
    %323 = arith.addf %322, %321 : vector<8x128xf32>
    %324 = arith.divf %322, %323 : vector<8x128xf32>
    %325 = arith.mulf %316, %282 : vector<8x128xf32>
    %326 = arith.mulf %310, %318 : vector<8x128xf32>
    %327 = arith.addf %325, %326 : vector<8x128xf32>
    %328 = math.tanh %327 : vector<8x128xf32>
    %329 = arith.mulf %324, %328 : vector<8x128xf32>
    %330 = vector.extract_strided_slice %39 {offsets = [5, 0, 0], sizes = [1, 8, 128], strides = [1, 1, 1]} : vector<8x8x128xi1> to vector<1x8x128xi1>
    %331 = vector.shape_cast %330 : vector<1x8x128xi1> to vector<8x128xi1>
    %332 = arith.select %331, %329, %281 : vector<8x128xi1>, vector<8x128xf32>
    %333 = arith.select %331, %327, %282 : vector<8x128xi1>, vector<8x128xf32>
    %334 = vector.extract_strided_slice %331 {offsets = [0, 0], sizes = [8, 64], strides = [1, 1]} : vector<8x128xi1> to vector<8x64xi1>
    %335 = vector.extract_strided_slice %329 {offsets = [0, 0], sizes = [8, 64], strides = [1, 1]} : vector<8x128xf32> to vector<8x64xf32>
    %cst_110 = arith.constant 0.000000e+00 : f32
    %336 = vector.broadcast %cst_110 : f32 to vector<8x64xf32>
    %337 = arith.select %334, %335, %336 : vector<8x64xi1>, vector<8x64xf32>
    %c5_111 = arith.constant 5 : index
    %c0_112 = arith.constant 0 : index
    %c0_113 = arith.constant 0 : index
    %338 = vector.load %arg13[%c5_111, %c0_112, %c0_113] : memref<8x8x128xf32, #tpu.memory_space<vmem>>, vector<1x8x64xf32>
    %339 = vector.shape_cast %338 : vector<1x8x64xf32> to vector<8x64xf32>
    %340 = vector.shape_cast %337 : vector<8x64xf32> to vector<1x8x64xf32>
    tpu.vector_store %arg13[%c5_111, %c0_112, %c0_113], %340 {strides = array<i32>} : memref<8x8x128xf32, #tpu.memory_space<vmem>>, vector<1x8x64xf32>,
    %341 = vector.extract_strided_slice %331 {offsets = [0, 64], sizes = [8, 64], strides = [1, 1]} : vector<8x128xi1> to vector<8x64xi1>
    %342 = vector.extract_strided_slice %329 {offsets = [0, 64], sizes = [8, 64], strides = [1, 1]} : vector<8x128xf32> to vector<8x64xf32>
    %cst_114 = arith.constant 0.000000e+00 : f32
    %343 = vector.broadcast %cst_114 : f32 to vector<8x64xf32>
    %344 = arith.select %341, %342, %343 : vector<8x64xi1>, vector<8x64xf32>
    %c2_115 = arith.constant 2 : index
    %c0_116 = arith.constant 0 : index
    %c64_117 = arith.constant 64 : index
    %345 = vector.load %arg13[%c2_115, %c0_116, %c64_117] : memref<8x8x128xf32, #tpu.memory_space<vmem>>, vector<1x8x64xf32>
    %346 = vector.shape_cast %345 : vector<1x8x64xf32> to vector<8x64xf32>
    %347 = vector.shape_cast %344 : vector<8x64xf32> to vector<1x8x64xf32>
    tpu.vector_store %arg13[%c2_115, %c0_116, %c64_117], %347 {strides = array<i32>} : memref<8x8x128xf32, #tpu.memory_space<vmem>>, vector<1x8x64xf32>,
    %c0_118 = arith.constant 0 : index
    %c6_119 = arith.constant 6 : index
    %c0_120 = arith.constant 0 : index
    %348 = vector.load %arg12[%c0_118, %c6_119, %c0_120] : memref<8x8x512xf32, #tpu.memory_space<vmem>>, vector<8x1x512xf32>
    %349 = vector.shape_cast %348 : vector<8x1x512xf32> to vector<8x512xf32>
    %c0_121 = arith.constant 0 : index
    %c1_122 = arith.constant 1 : index
    %c0_123 = arith.constant 0 : index
    %350 = vector.load %arg12[%c0_121, %c1_122, %c0_123] : memref<8x8x512xf32, #tpu.memory_space<vmem>>, vector<8x1x512xf32>
    %351 = vector.shape_cast %350 : vector<8x1x512xf32> to vector<8x512xf32>
    %352 = arith.select %29, %349, %351 : vector<8x512xi1>, vector<8x512xf32>
    %353 = arith.truncf %332 : vector<8x128xf32> to vector<8x128xbf16>
    %cst_124 = arith.constant dense<0.000000e+00> : vector<8x512xf32>
    %354 = tpu.matmul %353, %9, %cst_124 {dimension_numbers = #tpu.dot_dimension_numbers<[1], [0], [0], [1], [0, 0, 1, 1], [], []>} : vector<8x128xbf16>, vector<128x512xbf16>, vector<8x512xf32> -> vector<8x512xf32>
    %355 = arith.addf %352, %354 : vector<8x512xf32>
    %356 = vector.extract_strided_slice %355 {offsets = [0, 0], sizes = [8, 128], strides = [1, 1]} : vector<8x512xf32> to vector<8x128xf32>
    %357 = arith.negf %356 : vector<8x128xf32>
    %358 = math.exp %357 : vector<8x128xf32>
    %cst_125 = arith.constant 1.000000e+00 : f32
    %359 = vector.broadcast %cst_125 : f32 to vector<8x128xf32>
    %360 = arith.addf %359, %358 : vector<8x128xf32>
    %361 = arith.divf %359, %360 : vector<8x128xf32>
    %362 = vector.extract_strided_slice %355 {offsets = [0, 128], sizes = [8, 128], strides = [1, 1]} : vector<8x512xf32> to vector<8x128xf32>
    %363 = arith.negf %362 : vector<8x128xf32>
    %364 = math.exp %363 : vector<8x128xf32>
    %cst_126 = arith.constant 1.000000e+00 : f32
    %365 = vector.broadcast %cst_126 : f32 to vector<8x128xf32>
    %366 = arith.addf %365, %364 : vector<8x128xf32>
    %367 = arith.divf %365, %366 : vector<8x128xf32>
    %368 = vector.extract_strided_slice %355 {offsets = [0, 256], sizes = [8, 128], strides = [1, 1]} : vector<8x512xf32> to vector<8x128xf32>
    %369 = math.tanh %368 : vector<8x128xf32>
    %370 = vector.extract_strided_slice %355 {offsets = [0, 384], sizes = [8, 128], strides = [1, 1]} : vector<8x512xf32> to vector<8x128xf32>
    %371 = arith.negf %370 : vector<8x128xf32>
    %372 = math.exp %371 : vector<8x128xf32>
    %cst_127 = arith.constant 1.000000e+00 : f32
    %373 = vector.broadcast %cst_127 : f32 to vector<8x128xf32>
    %374 = arith.addf %373, %372 : vector<8x128xf32>
    %375 = arith.divf %373, %374 : vector<8x128xf32>
    %376 = arith.mulf %367, %333 : vector<8x128xf32>
    %377 = arith.mulf %361, %369 : vector<8x128xf32>
    %378 = arith.addf %376, %377 : vector<8x128xf32>
    %379 = math.tanh %378 : vector<8x128xf32>
    %380 = arith.mulf %375, %379 : vector<8x128xf32>
    %381 = vector.extract_strided_slice %39 {offsets = [6, 0, 0], sizes = [1, 8, 128], strides = [1, 1, 1]} : vector<8x8x128xi1> to vector<1x8x128xi1>
    %382 = vector.shape_cast %381 : vector<1x8x128xi1> to vector<8x128xi1>
    %383 = arith.select %382, %380, %332 : vector<8x128xi1>, vector<8x128xf32>
    %384 = arith.select %382, %378, %333 : vector<8x128xi1>, vector<8x128xf32>
    %385 = vector.extract_strided_slice %382 {offsets = [0, 0], sizes = [8, 64], strides = [1, 1]} : vector<8x128xi1> to vector<8x64xi1>
    %386 = vector.extract_strided_slice %380 {offsets = [0, 0], sizes = [8, 64], strides = [1, 1]} : vector<8x128xf32> to vector<8x64xf32>
    %cst_128 = arith.constant 0.000000e+00 : f32
    %387 = vector.broadcast %cst_128 : f32 to vector<8x64xf32>
    %388 = arith.select %385, %386, %387 : vector<8x64xi1>, vector<8x64xf32>
    %c6_129 = arith.constant 6 : index
    %c0_130 = arith.constant 0 : index
    %c0_131 = arith.constant 0 : index
    %389 = vector.load %arg13[%c6_129, %c0_130, %c0_131] : memref<8x8x128xf32, #tpu.memory_space<vmem>>, vector<1x8x64xf32>
    %390 = vector.shape_cast %389 : vector<1x8x64xf32> to vector<8x64xf32>
    %391 = vector.shape_cast %388 : vector<8x64xf32> to vector<1x8x64xf32>
    tpu.vector_store %arg13[%c6_129, %c0_130, %c0_131], %391 {strides = array<i32>} : memref<8x8x128xf32, #tpu.memory_space<vmem>>, vector<1x8x64xf32>,
    %392 = vector.extract_strided_slice %382 {offsets = [0, 64], sizes = [8, 64], strides = [1, 1]} : vector<8x128xi1> to vector<8x64xi1>
    %393 = vector.extract_strided_slice %380 {offsets = [0, 64], sizes = [8, 64], strides = [1, 1]} : vector<8x128xf32> to vector<8x64xf32>
    %cst_132 = arith.constant 0.000000e+00 : f32
    %394 = vector.broadcast %cst_132 : f32 to vector<8x64xf32>
    %395 = arith.select %392, %393, %394 : vector<8x64xi1>, vector<8x64xf32>
    %c1_133 = arith.constant 1 : index
    %c0_134 = arith.constant 0 : index
    %c64_135 = arith.constant 64 : index
    %396 = vector.load %arg13[%c1_133, %c0_134, %c64_135] : memref<8x8x128xf32, #tpu.memory_space<vmem>>, vector<1x8x64xf32>
    %397 = vector.shape_cast %396 : vector<1x8x64xf32> to vector<8x64xf32>
    %398 = vector.shape_cast %395 : vector<8x64xf32> to vector<1x8x64xf32>
    tpu.vector_store %arg13[%c1_133, %c0_134, %c64_135], %398 {strides = array<i32>} : memref<8x8x128xf32, #tpu.memory_space<vmem>>, vector<1x8x64xf32>,
    %c0_136 = arith.constant 0 : index
    %c7_137 = arith.constant 7 : index
    %c0_138 = arith.constant 0 : index
    %399 = vector.load %arg12[%c0_136, %c7_137, %c0_138] : memref<8x8x512xf32, #tpu.memory_space<vmem>>, vector<8x1x512xf32>
    %400 = vector.shape_cast %399 : vector<8x1x512xf32> to vector<8x512xf32>
    %c0_139 = arith.constant 0 : index
    %c0_140 = arith.constant 0 : index
    %c0_141 = arith.constant 0 : index
    %401 = vector.load %arg12[%c0_139, %c0_140, %c0_141] : memref<8x8x512xf32, #tpu.memory_space<vmem>>, vector<8x1x512xf32>
    %402 = vector.shape_cast %401 : vector<8x1x512xf32> to vector<8x512xf32>
    %403 = arith.select %29, %400, %402 : vector<8x512xi1>, vector<8x512xf32>
    %404 = arith.truncf %383 : vector<8x128xf32> to vector<8x128xbf16>
    %cst_142 = arith.constant dense<0.000000e+00> : vector<8x512xf32>
    %405 = tpu.matmul %404, %9, %cst_142 {dimension_numbers = #tpu.dot_dimension_numbers<[1], [0], [0], [1], [0, 0, 1, 1], [], []>} : vector<8x128xbf16>, vector<128x512xbf16>, vector<8x512xf32> -> vector<8x512xf32>
    %406 = arith.addf %403, %405 : vector<8x512xf32>
    %407 = vector.extract_strided_slice %406 {offsets = [0, 0], sizes = [8, 128], strides = [1, 1]} : vector<8x512xf32> to vector<8x128xf32>
    %408 = arith.negf %407 : vector<8x128xf32>
    %409 = math.exp %408 : vector<8x128xf32>
    %cst_143 = arith.constant 1.000000e+00 : f32
    %410 = vector.broadcast %cst_143 : f32 to vector<8x128xf32>
    %411 = arith.addf %410, %409 : vector<8x128xf32>
    %412 = arith.divf %410, %411 : vector<8x128xf32>
    %413 = vector.extract_strided_slice %406 {offsets = [0, 128], sizes = [8, 128], strides = [1, 1]} : vector<8x512xf32> to vector<8x128xf32>
    %414 = arith.negf %413 : vector<8x128xf32>
    %415 = math.exp %414 : vector<8x128xf32>
    %cst_144 = arith.constant 1.000000e+00 : f32
    %416 = vector.broadcast %cst_144 : f32 to vector<8x128xf32>
    %417 = arith.addf %416, %415 : vector<8x128xf32>
    %418 = arith.divf %416, %417 : vector<8x128xf32>
    %419 = vector.extract_strided_slice %406 {offsets = [0, 256], sizes = [8, 128], strides = [1, 1]} : vector<8x512xf32> to vector<8x128xf32>
    %420 = math.tanh %419 : vector<8x128xf32>
    %421 = vector.extract_strided_slice %406 {offsets = [0, 384], sizes = [8, 128], strides = [1, 1]} : vector<8x512xf32> to vector<8x128xf32>
    %422 = arith.negf %421 : vector<8x128xf32>
    %423 = math.exp %422 : vector<8x128xf32>
    %cst_145 = arith.constant 1.000000e+00 : f32
    %424 = vector.broadcast %cst_145 : f32 to vector<8x128xf32>
    %425 = arith.addf %424, %423 : vector<8x128xf32>
    %426 = arith.divf %424, %425 : vector<8x128xf32>
    %427 = arith.mulf %418, %384 : vector<8x128xf32>
    %428 = arith.mulf %412, %420 : vector<8x128xf32>
    %429 = arith.addf %427, %428 : vector<8x128xf32>
    %430 = math.tanh %429 : vector<8x128xf32>
    %431 = arith.mulf %426, %430 : vector<8x128xf32>
    %432 = vector.extract_strided_slice %39 {offsets = [7, 0, 0], sizes = [1, 8, 128], strides = [1, 1, 1]} : vector<8x8x128xi1> to vector<1x8x128xi1>
    %433 = vector.shape_cast %432 : vector<1x8x128xi1> to vector<8x128xi1>
    %434 = vector.extract_strided_slice %433 {offsets = [0, 0], sizes = [8, 64], strides = [1, 1]} : vector<8x128xi1> to vector<8x64xi1>
    %435 = vector.extract_strided_slice %431 {offsets = [0, 0], sizes = [8, 64], strides = [1, 1]} : vector<8x128xf32> to vector<8x64xf32>
    %cst_146 = arith.constant 0.000000e+00 : f32
    %436 = vector.broadcast %cst_146 : f32 to vector<8x64xf32>
    %437 = arith.select %434, %435, %436 : vector<8x64xi1>, vector<8x64xf32>
    %c7_147 = arith.constant 7 : index
    %c0_148 = arith.constant 0 : index
    %c0_149 = arith.constant 0 : index
    %438 = vector.load %arg13[%c7_147, %c0_148, %c0_149] : memref<8x8x128xf32, #tpu.memory_space<vmem>>, vector<1x8x64xf32>
    %439 = vector.shape_cast %438 : vector<1x8x64xf32> to vector<8x64xf32>
    %440 = vector.shape_cast %437 : vector<8x64xf32> to vector<1x8x64xf32>
    tpu.vector_store %arg13[%c7_147, %c0_148, %c0_149], %440 {strides = array<i32>} : memref<8x8x128xf32, #tpu.memory_space<vmem>>, vector<1x8x64xf32>,
    %441 = vector.extract_strided_slice %433 {offsets = [0, 64], sizes = [8, 64], strides = [1, 1]} : vector<8x128xi1> to vector<8x64xi1>
    %442 = vector.extract_strided_slice %431 {offsets = [0, 64], sizes = [8, 64], strides = [1, 1]} : vector<8x128xf32> to vector<8x64xf32>
    %cst_150 = arith.constant 0.000000e+00 : f32
    %443 = vector.broadcast %cst_150 : f32 to vector<8x64xf32>
    %444 = arith.select %441, %442, %443 : vector<8x64xi1>, vector<8x64xf32>
    %c0_151 = arith.constant 0 : index
    %c0_152 = arith.constant 0 : index
    %c64_153 = arith.constant 64 : index
    %445 = vector.load %arg13[%c0_151, %c0_152, %c64_153] : memref<8x8x128xf32, #tpu.memory_space<vmem>>, vector<1x8x64xf32>
    %446 = vector.shape_cast %445 : vector<1x8x64xf32> to vector<8x64xf32>
    %447 = vector.shape_cast %444 : vector<8x64xf32> to vector<1x8x64xf32>
    tpu.vector_store %arg13[%c0_151, %c0_152, %c64_153], %447 {strides = array<i32>} : memref<8x8x128xf32, #tpu.memory_space<vmem>>, vector<1x8x64xf32>,
    %c0_154 = arith.constant 0 : index
    %c0_155 = arith.constant 0 : index
    %c0_156 = arith.constant 0 : index
    %448 = vector.load %arg13[%c0_154, %c0_155, %c0_156] : memref<8x8x128xf32, #tpu.memory_space<vmem>>, vector<8x8x128xf32>
    %449 = vector.shape_cast %448 : vector<8x8x128xf32> to vector<64x128xf32>
    %450 = arith.truncf %449 : vector<64x128xf32> to vector<64x128xbf16>
    %c0_157 = arith.constant 0 : index
    %c0_158 = arith.constant 0 : index
    %451 = vector.load %arg5[%c0_157, %c0_158] : memref<128x256xbf16, #tpu.memory_space<vmem>>, vector<128x256xbf16>
    %cst_159 = arith.constant dense<0.000000e+00> : vector<64x256xf32>
    %452 = tpu.matmul %450, %451, %cst_159 {dimension_numbers = #tpu.dot_dimension_numbers<[1], [0], [0], [1], [0, 0, 1, 1], [], []>} : vector<64x128xbf16>, vector<128x256xbf16>, vector<64x256xf32> -> vector<64x256xf32>
    %c0_160 = arith.constant 0 : index
    %c0_161 = arith.constant 0 : index
    %453 = vector.load %arg6[%c0_160, %c0_161] : memref<1x256xf32, #tpu.memory_space<vmem>>, vector<1x256xf32>
    %454 = vector.broadcast %453 : vector<1x256xf32> to vector<64x256xf32>
    %455 = arith.addf %452, %454 : vector<64x256xf32>
    %cst_162 = arith.constant 0.000000e+00 : f32
    %456 = vector.broadcast %cst_162 : f32 to vector<64x256xf32>
    %457 = arith.maximumf %455, %456 : vector<64x256xf32>
    %458 = arith.truncf %457 : vector<64x256xf32> to vector<64x256xbf16>
    %c0_163 = arith.constant 0 : index
    %c0_164 = arith.constant 0 : index
    %459 = vector.load %arg7[%c0_163, %c0_164] : memref<256x128xbf16, #tpu.memory_space<vmem>>, vector<256x128xbf16>
    %cst_165 = arith.constant dense<0.000000e+00> : vector<64x128xf32>
    %460 = tpu.matmul %458, %459, %cst_165 {dimension_numbers = #tpu.dot_dimension_numbers<[1], [0], [0], [1], [0, 0, 1, 1], [], []>} : vector<64x256xbf16>, vector<256x128xbf16>, vector<64x128xf32> -> vector<64x128xf32>
    %c0_166 = arith.constant 0 : index
    %c0_167 = arith.constant 0 : index
    %461 = vector.load %arg8[%c0_166, %c0_167] : memref<1x128xf32, #tpu.memory_space<vmem>>, vector<1x128xf32>
    %462 = vector.broadcast %461 : vector<1x128xf32> to vector<64x128xf32>
    %463 = arith.addf %460, %462 : vector<64x128xf32>
    %464 = arith.addf %463, %449 : vector<64x128xf32>
    %cst_168 = arith.constant dense<0.000000e+00> : vector<64xf32>
    %465 = vector.multi_reduction <add>, %464, %cst_168 [1] : vector<64x128xf32> to vector<64xf32>
    %466 = vector.shape_cast %465 : vector<64xf32> to vector<64x1xf32>
    %cst_169 = arith.constant 1.280000e+02 : f32
    %467 = vector.broadcast %cst_169 : f32 to vector<64x1xf32>
    %468 = arith.divf %466, %467 : vector<64x1xf32>
    %469 = vector.broadcast %468 : vector<64x1xf32> to vector<64x128xf32>
    %470 = arith.subf %464, %469 : vector<64x128xf32>
    %471 = arith.mulf %470, %470 : vector<64x128xf32>
    %cst_170 = arith.constant dense<0.000000e+00> : vector<64xf32>
    %472 = vector.multi_reduction <add>, %471, %cst_170 [1] : vector<64x128xf32> to vector<64xf32>
    %473 = vector.shape_cast %472 : vector<64xf32> to vector<64x1xf32>
    %cst_171 = arith.constant 1.280000e+02 : f32
    %474 = vector.broadcast %cst_171 : f32 to vector<64x1xf32>
    %475 = arith.divf %473, %474 : vector<64x1xf32>
    %476 = vector.broadcast %468 : vector<64x1xf32> to vector<64x128xf32>
    %477 = arith.subf %464, %476 : vector<64x128xf32>
    %cst_172 = arith.constant 9.99999997E-7 : f32
    %478 = vector.broadcast %cst_172 : f32 to vector<64x1xf32>
    %479 = arith.addf %475, %478 : vector<64x1xf32>
    %480 = math.rsqrt %479 : vector<64x1xf32>
    %481 = vector.broadcast %480 : vector<64x1xf32> to vector<64x128xf32>
    %482 = arith.mulf %477, %481 : vector<64x128xf32>
    %c0_173 = arith.constant 0 : index
    %c0_174 = arith.constant 0 : index
    %483 = vector.load %arg9[%c0_173, %c0_174] : memref<1x128xf32, #tpu.memory_space<vmem>>, vector<1x128xf32>
    %484 = vector.broadcast %483 : vector<1x128xf32> to vector<64x128xf32>
    %485 = arith.mulf %482, %484 : vector<64x128xf32>
    %c0_175 = arith.constant 0 : index
    %c0_176 = arith.constant 0 : index
    %486 = vector.load %arg10[%c0_175, %c0_176] : memref<1x128xf32, #tpu.memory_space<vmem>>, vector<1x128xf32>
    %487 = vector.broadcast %486 : vector<1x128xf32> to vector<64x128xf32>
    %488 = arith.addf %485, %487 : vector<64x128xf32>
    %489 = vector.shape_cast %488 : vector<64x128xf32> to vector<8x8x128xf32>
    %490 = vector.extract_strided_slice %489 {offsets = [0, 0, 0], sizes = [1, 8, 128], strides = [1, 1, 1]} : vector<8x8x128xf32> to vector<1x8x128xf32>
    %491 = vector.shape_cast %490 : vector<1x8x128xf32> to vector<8x128xf32>
    %c0_177 = arith.constant 0 : index
    %c0_178 = arith.constant 0 : index
    %c0_179 = arith.constant 0 : index
    %492 = vector.load %arg11[%c0_177, %c0_178, %c0_179] : memref<8x8x128xf32, #tpu.memory_space<vmem>>, vector<8x1x128xf32>
    %493 = vector.shape_cast %492 : vector<8x1x128xf32> to vector<8x128xf32>
    %494 = vector.shape_cast %491 : vector<8x128xf32> to vector<8x1x128xf32>
    tpu.vector_store %arg11[%c0_177, %c0_178, %c0_179], %494 {strides = array<i32>} : memref<8x8x128xf32, #tpu.memory_space<vmem>>, vector<8x1x128xf32>,
    %495 = vector.extract_strided_slice %489 {offsets = [1, 0, 0], sizes = [1, 8, 128], strides = [1, 1, 1]} : vector<8x8x128xf32> to vector<1x8x128xf32>
    %496 = vector.shape_cast %495 : vector<1x8x128xf32> to vector<8x128xf32>
    %c0_180 = arith.constant 0 : index
    %c1_181 = arith.constant 1 : index
    %c0_182 = arith.constant 0 : index
    %497 = vector.load %arg11[%c0_180, %c1_181, %c0_182] : memref<8x8x128xf32, #tpu.memory_space<vmem>>, vector<8x1x128xf32>
    %498 = vector.shape_cast %497 : vector<8x1x128xf32> to vector<8x128xf32>
    %499 = vector.shape_cast %496 : vector<8x128xf32> to vector<8x1x128xf32>
    tpu.vector_store %arg11[%c0_180, %c1_181, %c0_182], %499 {strides = array<i32>} : memref<8x8x128xf32, #tpu.memory_space<vmem>>, vector<8x1x128xf32>,
    %500 = vector.extract_strided_slice %489 {offsets = [2, 0, 0], sizes = [1, 8, 128], strides = [1, 1, 1]} : vector<8x8x128xf32> to vector<1x8x128xf32>
    %501 = vector.shape_cast %500 : vector<1x8x128xf32> to vector<8x128xf32>
    %c0_183 = arith.constant 0 : index
    %c2_184 = arith.constant 2 : index
    %c0_185 = arith.constant 0 : index
    %502 = vector.load %arg11[%c0_183, %c2_184, %c0_185] : memref<8x8x128xf32, #tpu.memory_space<vmem>>, vector<8x1x128xf32>
    %503 = vector.shape_cast %502 : vector<8x1x128xf32> to vector<8x128xf32>
    %504 = vector.shape_cast %501 : vector<8x128xf32> to vector<8x1x128xf32>
    tpu.vector_store %arg11[%c0_183, %c2_184, %c0_185], %504 {strides = array<i32>} : memref<8x8x128xf32, #tpu.memory_space<vmem>>, vector<8x1x128xf32>,
    %505 = vector.extract_strided_slice %489 {offsets = [3, 0, 0], sizes = [1, 8, 128], strides = [1, 1, 1]} : vector<8x8x128xf32> to vector<1x8x128xf32>
    %506 = vector.shape_cast %505 : vector<1x8x128xf32> to vector<8x128xf32>
    %c0_186 = arith.constant 0 : index
    %c3_187 = arith.constant 3 : index
    %c0_188 = arith.constant 0 : index
    %507 = vector.load %arg11[%c0_186, %c3_187, %c0_188] : memref<8x8x128xf32, #tpu.memory_space<vmem>>, vector<8x1x128xf32>
    %508 = vector.shape_cast %507 : vector<8x1x128xf32> to vector<8x128xf32>
    %509 = vector.shape_cast %506 : vector<8x128xf32> to vector<8x1x128xf32>
    tpu.vector_store %arg11[%c0_186, %c3_187, %c0_188], %509 {strides = array<i32>} : memref<8x8x128xf32, #tpu.memory_space<vmem>>, vector<8x1x128xf32>,
    %510 = vector.extract_strided_slice %489 {offsets = [4, 0, 0], sizes = [1, 8, 128], strides = [1, 1, 1]} : vector<8x8x128xf32> to vector<1x8x128xf32>
    %511 = vector.shape_cast %510 : vector<1x8x128xf32> to vector<8x128xf32>
    %c0_189 = arith.constant 0 : index
    %c4_190 = arith.constant 4 : index
    %c0_191 = arith.constant 0 : index
    %512 = vector.load %arg11[%c0_189, %c4_190, %c0_191] : memref<8x8x128xf32, #tpu.memory_space<vmem>>, vector<8x1x128xf32>
    %513 = vector.shape_cast %512 : vector<8x1x128xf32> to vector<8x128xf32>
    %514 = vector.shape_cast %511 : vector<8x128xf32> to vector<8x1x128xf32>
    tpu.vector_store %arg11[%c0_189, %c4_190, %c0_191], %514 {strides = array<i32>} : memref<8x8x128xf32, #tpu.memory_space<vmem>>, vector<8x1x128xf32>,
    %515 = vector.extract_strided_slice %489 {offsets = [5, 0, 0], sizes = [1, 8, 128], strides = [1, 1, 1]} : vector<8x8x128xf32> to vector<1x8x128xf32>
    %516 = vector.shape_cast %515 : vector<1x8x128xf32> to vector<8x128xf32>
    %c0_192 = arith.constant 0 : index
    %c5_193 = arith.constant 5 : index
    %c0_194 = arith.constant 0 : index
    %517 = vector.load %arg11[%c0_192, %c5_193, %c0_194] : memref<8x8x128xf32, #tpu.memory_space<vmem>>, vector<8x1x128xf32>
    %518 = vector.shape_cast %517 : vector<8x1x128xf32> to vector<8x128xf32>
    %519 = vector.shape_cast %516 : vector<8x128xf32> to vector<8x1x128xf32>
    tpu.vector_store %arg11[%c0_192, %c5_193, %c0_194], %519 {strides = array<i32>} : memref<8x8x128xf32, #tpu.memory_space<vmem>>, vector<8x1x128xf32>,
    %520 = vector.extract_strided_slice %489 {offsets = [6, 0, 0], sizes = [1, 8, 128], strides = [1, 1, 1]} : vector<8x8x128xf32> to vector<1x8x128xf32>
    %521 = vector.shape_cast %520 : vector<1x8x128xf32> to vector<8x128xf32>
    %c0_195 = arith.constant 0 : index
    %c6_196 = arith.constant 6 : index
    %c0_197 = arith.constant 0 : index
    %522 = vector.load %arg11[%c0_195, %c6_196, %c0_197] : memref<8x8x128xf32, #tpu.memory_space<vmem>>, vector<8x1x128xf32>
    %523 = vector.shape_cast %522 : vector<8x1x128xf32> to vector<8x128xf32>
    %524 = vector.shape_cast %521 : vector<8x128xf32> to vector<8x1x128xf32>
    tpu.vector_store %arg11[%c0_195, %c6_196, %c0_197], %524 {strides = array<i32>} : memref<8x8x128xf32, #tpu.memory_space<vmem>>, vector<8x1x128xf32>,
    %525 = vector.extract_strided_slice %489 {offsets = [7, 0, 0], sizes = [1, 8, 128], strides = [1, 1, 1]} : vector<8x8x128xf32> to vector<1x8x128xf32>
    %526 = vector.shape_cast %525 : vector<1x8x128xf32> to vector<8x128xf32>
    %c0_198 = arith.constant 0 : index
    %c7_199 = arith.constant 7 : index
    %c0_200 = arith.constant 0 : index
    %527 = vector.load %arg11[%c0_198, %c7_199, %c0_200] : memref<8x8x128xf32, #tpu.memory_space<vmem>>, vector<8x1x128xf32>
    %528 = vector.shape_cast %527 : vector<8x1x128xf32> to vector<8x128xf32>
    %529 = vector.shape_cast %526 : vector<8x128xf32> to vector<8x1x128xf32>
    tpu.vector_store %arg11[%c0_198, %c7_199, %c0_200], %529 {strides = array<i32>} : memref<8x8x128xf32, #tpu.memory_space<vmem>>, vector<8x1x128xf32>,
    return
  }
}

</mosaic_0001>

<llo_original>
// kernel: encoder_layer_forward.1
$region0: #{encoder_layer_forward.1}
  #allocation0 [shape = 'u32[]', space=smem, size = 0x4, offset = 0x4, fixed_abs, tag = 'smem constant byte address 0x4 - core index']
  #allocation1 [shape = 'u32[72,128]{1,0:T(1,128)}', space=vmem, size = 0x9000, scoped, tag = 'internal scratch']
  #allocation2 [shape = 'f32[8,8,512]{2,1,0:T(8,128)}', space=vmem, size = 0x20000, scoped, tag = 'scratch operand']
  #allocation3 [shape = 'f32[8,8,128]{2,1,0:T(8,128)}', space=vmem, size = 0x8000, scoped, tag = 'scratch operand']
  %s0 = inlined_call_operand.hbm [shape: f32[64,128], index: 0, kind: input, shape index: {}]
  %s1 = inlined_call_operand.vmem [shape: s32[8,1], index: 1, kind: input, shape index: {}]
  %s2 = inlined_call_operand.hbm [shape: bf16[128,512], index: 2, kind: input, shape index: {}]
  %s3 = inlined_call_operand.hbm [shape: bf16[128,512], index: 3, kind: input, shape index: {}]
  %s4 = inlined_call_operand.vmem [shape: f32[1,512], index: 4, kind: input, shape index: {}]
  %s5 = inlined_call_operand.hbm [shape: bf16[128,256], index: 5, kind: input, shape index: {}]
  %s6 = inlined_call_operand.vmem [shape: f32[1,256], index: 6, kind: input, shape index: {}]
  %s7 = inlined_call_operand.hbm [shape: bf16[256,128], index: 7, kind: input, shape index: {}]
  %s8 = inlined_call_operand.vmem [shape: f32[1,128], index: 8, kind: input, shape index: {}]
  %s9 = inlined_call_operand.vmem [shape: f32[1,128], index: 9, kind: input, shape index: {}]
  %s10 = inlined_call_operand.vmem [shape: f32[1,128], index: 10, kind: input, shape index: {}]
  %s11 = inlined_call_operand.hbm [shape: f32[8,8,128], index: 11, kind: output, shape index: {}]
  %s12 = sld [smem:[#allocation0]]
  $region74: #{encoder_layer_forward.1} parent=0
    _
  %s14 = ssub.s32 1, %s12
  %s15 = scalar_select 0, %s14, %s12
  $region1: #{encoder_layer_forward.1} parent=0
    #allocation4 [shape = 'u8[32768]{0}', space=vmem, size = 0x8000, scoped, tag = 'input window, operand 0, single buffered']
    #allocation5 [shape = 's32[1]{0}', space=sflag, size = 0x4, scoped, tag = 'scoped memory for encoder_layer_forward.1']
    #allocation6 [shape = 's32[1]{0}', space=sflag, size = 0x4, scoped, tag = 'scoped memory for encoder_layer_forward.1']
    #allocation7 [shape = 'u8[131072]{0}', space=vmem, size = 0x20000, scoped, tag = 'input window, operand 2, single buffered']
    #allocation8 [shape = 's32[1]{0}', space=sflag, size = 0x4, scoped, tag = 'scoped memory for encoder_layer_forward.1']
    #allocation9 [shape = 'u8[131072]{0}', space=vmem, size = 0x20000, scoped, tag = 'input window, operand 3, single buffered']
    #allocation10 [shape = 'u8[65536]{0}', space=vmem, size = 0x10000, scoped, tag = 'input window, operand 5, single buffered']
    #allocation11 [shape = 's32[1]{0}', space=sflag, size = 0x4, scoped, tag = 'scoped memory for encoder_layer_forward.1']
    #allocation12 [shape = 'u8[65536]{0}', space=vmem, size = 0x10000, scoped, tag = 'input window, operand 7, single buffered']
    #allocation13 [shape = 'u8[32768]{0}', space=vmem, size = 0x8000, scoped, tag = 'output window, operand 0, single buffered']
    %16 = vsyncpa [#allocation5], 0
    %17 = vsyncpa [#allocation8], 0
    %18 = vsyncpa [#allocation11], 0
    %19 = vsyncpa [#allocation6], 0
    // Predicated region
    $region2: #{encoder_layer_forward.1} parent=1 // pred_check
      _
    $region3: #{encoder_layer_forward.1} parent=1 // pred_check_branch
      %21 = sbr.rel (0) target = $region5
    $region4: #{encoder_layer_forward.1} parent=1 // pred_region
      %23 = vsyncadd [#allocation5], 0
      %s24 = sshll.u32 %s0, 4
      %s25 = int_to_ptr.hbm [resolvable:$true] %s24
      %s26 = sshll.u32 [#allocation4], 4
      %s27 = int_to_ptr.vmem [resolvable:$true] %s26
      %32 = dma.hbm_to_vmem [thread:$0]  %s25, 1024, %s27, [#allocation5], 128, 128, 8
    $region5: #{encoder_layer_forward.1} parent=1 // pred_fallthru
      _
    // Predicated region
    $region6: #{encoder_layer_forward.1} parent=1 // pred_check
      _
    $region7: #{encoder_layer_forward.1} parent=1 // pred_check_branch
      %34 = sbr.rel (0) target = $region9
    $region8: #{encoder_layer_forward.1} parent=1 // pred_region
      _
    $region9: #{encoder_layer_forward.1} parent=1 // pred_fallthru
      _
    // Predicated region
    $region10: #{encoder_layer_forward.1} parent=1 // pred_check
      _
    $region11: #{encoder_layer_forward.1} parent=1 // pred_check_branch
      %36 = sbr.rel (0) target = $region13
    $region12: #{encoder_layer_forward.1} parent=1 // pred_region
      %38 = vsyncadd [#allocation8], 0
      %s39 = sshll.u32 %s2, 4
      %s40 = int_to_ptr.hbm [resolvable:$true] %s39
      %s41 = sshll.u32 [#allocation7], 4
      %s42 = int_to_ptr.vmem [resolvable:$true] %s41
      %47 = dma.hbm_to_vmem [thread:$0]  %s40, 4096, %s42, [#allocation8], 256, 256, 16
    $region13: #{encoder_layer_forward.1} parent=1 // pred_fallthru
      _
    // Predicated region
    $region14: #{encoder_layer_forward.1} parent=1 // pred_check
      _
    $region15: #{encoder_layer_forward.1} parent=1 // pred_check_branch
      %49 = sbr.rel (0) target = $region17
    $region16: #{encoder_layer_forward.1} parent=1 // pred_region
      %51 = vsyncadd [#allocation8], 0
      %s52 = sshll.u32 %s3, 4
      %s53 = int_to_ptr.hbm [resolvable:$true] %s52
      %s54 = sshll.u32 [#allocation9], 4
      %s55 = int_to_ptr.vmem [resolvable:$true] %s54
      %60 = dma.hbm_to_vmem [thread:$0]  %s53, 4096, %s55, [#allocation8], 256, 256, 16
    $region17: #{encoder_layer_forward.1} parent=1 // pred_fallthru
      _
    // Predicated region
    $region18: #{encoder_layer_forward.1} parent=1 // pred_check
      _
    $region19: #{encoder_layer_forward.1} parent=1 // pred_check_branch
      %62 = sbr.rel (0) target = $region21
    $region20: #{encoder_layer_forward.1} parent=1 // pred_region
      _
    $region21: #{encoder_layer_forward.1} parent=1 // pred_fallthru
      _
    // Predicated region
    $region22: #{encoder_layer_forward.1} parent=1 // pred_check
      _
    $region23: #{encoder_layer_forward.1} parent=1 // pred_check_branch
      %64 = sbr.rel (0) target = $region25
    $region24: #{encoder_layer_forward.1} parent=1 // pred_region
      %66 = vsyncadd [#allocation11], 0
      %s67 = sshll.u32 %s5, 4
      %s68 = int_to_ptr.hbm [resolvable:$true] %s67
      %s69 = sshll.u32 [#allocation10], 4
      %s70 = int_to_ptr.vmem [resolvable:$true] %s69
      %75 = dma.hbm_to_vmem [thread:$0]  %s68, 2048, %s70, [#allocation11], 128, 128, 8
    $region25: #{encoder_layer_forward.1} parent=1 // pred_fallthru
      _
    // Predicated region
    $region26: #{encoder_layer_forward.1} parent=1 // pred_check
      _
    $region27: #{encoder_layer_forward.1} parent=1 // pred_check_branch
      %77 = sbr.rel (0) target = $region29
    $region28: #{encoder_layer_forward.1} parent=1 // pred_region
      _
    $region29: #{encoder_layer_forward.1} parent=1 // pred_fallthru
      _
    // Predicated region
    $region30: #{encoder_layer_forward.1} parent=1 // pred_check
      _
    $region31: #{encoder_layer_forward.1} parent=1 // pred_check_branch
      %79 = sbr.rel (0) target = $region33
    $region32: #{encoder_layer_forward.1} parent=1 // pred_region
      %81 = vsyncadd [#allocation11], 0
      %s82 = sshll.u32 %s7, 4
      %s83 = int_to_ptr.hbm [resolvable:$true] %s82
      %s84 = sshll.u32 [#allocation12], 4
      %s85 = int_to_ptr.vmem [resolvable:$true] %s84
      %90 = dma.hbm_to_vmem [thread:$0]  %s83, 2048, %s85, [#allocation11], 64, 64, 4
    $region33: #{encoder_layer_forward.1} parent=1 // pred_fallthru
      _
    // Predicated region
    $region34: #{encoder_layer_forward.1} parent=1 // pred_check
      _
    $region35: #{encoder_layer_forward.1} parent=1 // pred_check_branch
      %92 = sbr.rel (0) target = $region37
    $region36: #{encoder_layer_forward.1} parent=1 // pred_region
      _
    $region37: #{encoder_layer_forward.1} parent=1 // pred_fallthru
      _
    // Predicated region
    $region38: #{encoder_layer_forward.1} parent=1 // pred_check
      _
    $region39: #{encoder_layer_forward.1} parent=1 // pred_check_branch
      %94 = sbr.rel (0) target = $region41
    $region40: #{encoder_layer_forward.1} parent=1 // pred_region
      _
    $region41: #{encoder_layer_forward.1} parent=1 // pred_fallthru
      _
    // Predicated region
    $region42: #{encoder_layer_forward.1} parent=1 // pred_check
      _
    $region43: #{encoder_layer_forward.1} parent=1 // pred_check_branch
      %96 = sbr.rel (0) target = $region45
    $region44: #{encoder_layer_forward.1} parent=1 // pred_region
      _
    $region45: #{encoder_layer_forward.1} parent=1 // pred_fallthru
      _
    // Predicated region
    $region46: #{encoder_layer_forward.1} parent=1 // pred_check
      _
    $region47: #{encoder_layer_forward.1} parent=1 // pred_check_branch
      %98 = sbr.rel (0) target = $region49
    $region48: #{encoder_layer_forward.1} parent=1 // pred_region
      %100 = dma.done [#allocation5], 1024
    $region49: #{encoder_layer_forward.1} parent=1 // pred_fallthru
      _
    // Predicated region
    $region50: #{encoder_layer_forward.1} parent=1 // pred_check
      _
    $region51: #{encoder_layer_forward.1} parent=1 // pred_check_branch
      %102 = sbr.rel (0) target = $region53
    $region52: #{encoder_layer_forward.1} parent=1 // pred_region
      %104 = dma.done [#allocation8], 4096
    $region53: #{encoder_layer_forward.1} parent=1 // pred_fallthru
      _
    // Predicated region
    $region54: #{encoder_layer_forward.1} parent=1 // pred_check
      _
    $region55: #{encoder_layer_forward.1} parent=1 // pred_check_branch
      %106 = sbr.rel (0) target = $region57
    $region56: #{encoder_layer_forward.1} parent=1 // pred_region
      %108 = dma.done [#allocation8], 4096
    $region57: #{encoder_layer_forward.1} parent=1 // pred_fallthru
      _
    // Predicated region
    $region58: #{encoder_layer_forward.1} parent=1 // pred_check
      _
    $region59: #{encoder_layer_forward.1} parent=1 // pred_check_branch
      %110 = sbr.rel (0) target = $region61
    $region60: #{encoder_layer_forward.1} parent=1 // pred_region
      %112 = dma.done [#allocation11], 2048
    $region61: #{encoder_layer_forward.1} parent=1 // pred_fallthru
      _
    // Predicated region
    $region62: #{encoder_layer_forward.1} parent=1 // pred_check
      _
    $region63: #{encoder_layer_forward.1} parent=1 // pred_check_branch
      %114 = sbr.rel (0) target = $region65
    $region64: #{encoder_layer_forward.1} parent=1 // pred_region
      %116 = dma.done [#allocation11], 2048
    $region65: #{encoder_layer_forward.1} parent=1 // pred_fallthru
      _
    %v118 = vld [vmem:[#allocation4] sm:$0xff]
    %v119 = vld [vmem:[#allocation4 + $0x8] sm:$0xff]
    %v120 = vld [vmem:[#allocation4 + $0x10] sm:$0xff]
    %v121 = vld [vmem:[#allocation4 + $0x18] sm:$0xff]
    %v122 = vld [vmem:[#allocation4 + $0x20] sm:$0xff]
    %v123 = vld [vmem:[#allocation4 + $0x28] sm:$0xff]
    %v124 = vld [vmem:[#allocation4 + $0x30] sm:$0xff]
    %v125 = vld [vmem:[#allocation4 + $0x38] sm:$0xff]
    %v126 = vpack.c.bf16 %v119, %v118
    %v127 = vpack.c.bf16 %v121, %v120
    %v128 = vpack.c.bf16 %v123, %v122
    %v129 = vpack.c.bf16 %v125, %v124
    %v130 = vld [vmem:[#allocation7] sm:$0xff]
    %v131 = vld [vmem:[#allocation7 + $0x8] sm:$0xff]
    %v132 = vld [vmem:[#allocation7 + $0x10] sm:$0xff]
    %v133 = vld [vmem:[#allocation7 + $0x18] sm:$0xff]
    %v134 = vld [vmem:[#allocation7 + $0x20] sm:$0xff]
    %v135 = vld [vmem:[#allocation7 + $0x28] sm:$0xff]
    %v136 = vld [vmem:[#allocation7 + $0x30] sm:$0xff]
    %v137 = vld [vmem:[#allocation7 + $0x38] sm:$0xff]
    %v138 = vld [vmem:[#allocation7 + $0x40] sm:$0xff]
    %v139 = vld [vmem:[#allocation7 + $0x48] sm:$0xff]
    %v140 = vld [vmem:[#allocation7 + $0x50] sm:$0xff]
    %v141 = vld [vmem:[#allocation7 + $0x58] sm:$0xff]
    %v142 = vld [vmem:[#allocation7 + $0x60] sm:$0xff]
    %v143 = vld [vmem:[#allocation7 + $0x68] sm:$0xff]
    %v144 = vld [vmem:[#allocation7 + $0x70] sm:$0xff]
    %v145 = vld [vmem:[#allocation7 + $0x78] sm:$0xff]
    %v146 = vld [vmem:[#allocation7 + $0x80] sm:$0xff]
    %v147 = vld [vmem:[#allocation7 + $0x88] sm:$0xff]
    %v148 = vld [vmem:[#allocation7 + $0x90] sm:$0xff]
    %v149 = vld [vmem:[#allocation7 + $0x98] sm:$0xff]
    %v150 = vld [vmem:[#allocation7 + $0xa0] sm:$0xff]
    %v151 = vld [vmem:[#allocation7 + $0xa8] sm:$0xff]
    %v152 = vld [vmem:[#allocation7 + $0xb0] sm:$0xff]
    %v153 = vld [vmem:[#allocation7 + $0xb8] sm:$0xff]
    %v154 = vld [vmem:[#allocation7 + $0xc0] sm:$0xff]
    %v155 = vld [vmem:[#allocation7 + $0xc8] sm:$0xff]
    %v156 = vld [vmem:[#allocation7 + $0xd0] sm:$0xff]
    %v157 = vld [vmem:[#allocation7 + $0xd8] sm:$0xff]
    %v158 = vld [vmem:[#allocation7 + $0xe0] sm:$0xff]
    %v159 = vld [vmem:[#allocation7 + $0xe8] sm:$0xff]
    %v160 = vld [vmem:[#allocation7 + $0xf0] sm:$0xff]
    %v161 = vld [vmem:[#allocation7 + $0xf8] sm:$0xff]
    %v162 = vld [vmem:[%s4] sm:$0xf]
    %v164 = vperm.slane %v162, 0
    %v165 = vperm.slane %v162, 1
    %v166 = vperm.slane %v162, 2
    %v167 = vperm.slane %v162, 3
    %v204 = vunpack.c.l.b16 %v130
    %v205 = vunpack.c.h.b16 %v130
    %v206 = vunpack.c.l.b16 %v131
    %v207 = vunpack.c.h.b16 %v131
    %v208 = vunpack.c.l.b16 %v132
    %v209 = vunpack.c.h.b16 %v132
    %v210 = vunpack.c.l.b16 %v133
    %v211 = vunpack.c.h.b16 %v133
    %v212 = vunpack.c.l.b16 %v134
    %v213 = vunpack.c.h.b16 %v134
    %v214 = vunpack.c.l.b16 %v135
    %v215 = vunpack.c.h.b16 %v135
    %v216 = vunpack.c.l.b16 %v136
    %v217 = vunpack.c.h.b16 %v136
    %v218 = vunpack.c.l.b16 %v137
    %v219 = vunpack.c.h.b16 %v137
    %v220 = vunpack.c.l.b16 %v138
    %v221 = vunpack.c.h.b16 %v138
    %v222 = vunpack.c.l.b16 %v139
    %v223 = vunpack.c.h.b16 %v139
    %v224 = vunpack.c.l.b16 %v140
    %v225 = vunpack.c.h.b16 %v140
    %v226 = vunpack.c.l.b16 %v141
    %v227 = vunpack.c.h.b16 %v141
    %v228 = vunpack.c.l.b16 %v142
    %v229 = vunpack.c.h.b16 %v142
    %v230 = vunpack.c.l.b16 %v143
    %v231 = vunpack.c.h.b16 %v143
    %v232 = vunpack.c.l.b16 %v144
    %v233 = vunpack.c.h.b16 %v144
    %v234 = vunpack.c.l.b16 %v145
    %v235 = vunpack.c.h.b16 %v145
    %v236 = vunpack.c.l.b16 %v146
    %v237 = vunpack.c.h.b16 %v146
    %v238 = vunpack.c.l.b16 %v147
    %v239 = vunpack.c.h.b16 %v147
    %v240 = vunpack.c.l.b16 %v148
    %v241 = vunpack.c.h.b16 %v148
    %v242 = vunpack.c.l.b16 %v149
    %v243 = vunpack.c.h.b16 %v149
    %v244 = vunpack.c.l.b16 %v150
    %v245 = vunpack.c.h.b16 %v150
    %v246 = vunpack.c.l.b16 %v151
    %v247 = vunpack.c.h.b16 %v151
    %v248 = vunpack.c.l.b16 %v152
    %v249 = vunpack.c.h.b16 %v152
    %v250 = vunpack.c.l.b16 %v153
    %v251 = vunpack.c.h.b16 %v153
    %v252 = vunpack.c.l.b16 %v154
    %v253 = vunpack.c.h.b16 %v154
    %v254 = vunpack.c.l.b16 %v155
    %v255 = vunpack.c.h.b16 %v155
    %v256 = vunpack.c.l.b16 %v156
    %v257 = vunpack.c.h.b16 %v156
    %v258 = vunpack.c.l.b16 %v157
    %v259 = vunpack.c.h.b16 %v157
    %v260 = vunpack.c.l.b16 %v158
    %v261 = vunpack.c.h.b16 %v158
    %v262 = vunpack.c.l.b16 %v159
    %v263 = vunpack.c.h.b16 %v159
    %v264 = vunpack.c.l.b16 %v160
    %v265 = vunpack.c.h.b16 %v160
    %v266 = vunpack.c.l.b16 %v161
    %v267 = vunpack.c.h.b16 %v161
    %v268 = vpack.c.b16 %v208, %v204
    %v269 = vpack.c.b16 %v209, %v205
    %v270 = vpack.c.b16 %v210, %v206
    %v271 = vpack.c.b16 %v211, %v207
    %v272 = vpack.c.b16 %v216, %v212
    %v273 = vpack.c.b16 %v217, %v213
    %v274 = vpack.c.b16 %v218, %v214
    %v275 = vpack.c.b16 %v219, %v215
    %v276 = vpack.c.b16 %v224, %v220
    %v277 = vpack.c.b16 %v225, %v221
    %v278 = vpack.c.b16 %v226, %v222
    %v279 = vpack.c.b16 %v227, %v223
    %v280 = vpack.c.b16 %v232, %v228
    %v281 = vpack.c.b16 %v233, %v229
    %v282 = vpack.c.b16 %v234, %v230
    %v283 = vpack.c.b16 %v235, %v231
    %v284 = vpack.c.b16 %v240, %v236
    %v285 = vpack.c.b16 %v241, %v237
    %v286 = vpack.c.b16 %v242, %v238
    %v287 = vpack.c.b16 %v243, %v239
    %v288 = vpack.c.b16 %v248, %v244
    %v289 = vpack.c.b16 %v249, %v245
    %v290 = vpack.c.b16 %v250, %v246
    %v291 = vpack.c.b16 %v251, %v247
    %v292 = vpack.c.b16 %v256, %v252
    %v293 = vpack.c.b16 %v257, %v253
    %v294 = vpack.c.b16 %v258, %v254
    %v295 = vpack.c.b16 %v259, %v255
    %v296 = vpack.c.b16 %v264, %v260
    %v297 = vpack.c.b16 %v265, %v261
    %v298 = vpack.c.b16 %v266, %v262
    %v299 = vpack.c.b16 %v267, %v263
    %332 = vmatpush.bf16.msra.mxu0 %v296
    %333 = vmatpush.bf16.msra.mxu0 %v292
    %334 = vmatpush.bf16.msra.mxu0 %v288
    %335 = vmatpush.bf16.msra.mxu0 %v284
    %336 = vmatpush.bf16.msra.mxu0 %v280
    %337 = vmatpush.bf16.msra.mxu0 %v276
    %338 = vmatpush.bf16.msra.mxu0 %v272
    %339 = vmatpush.bf16.msra.mxu0 %v268
    %340 = vmatmul.bf16.gmra.mxu0 %v126
    %v341 = vpop.f32.mrf.mxu0
    %v342 = vadd.f32 %v164, %v341
    %v343 = vpop.f32.mrf.mxu0
    %v344 = vadd.f32 %v164, %v343
    %345 = vmatmul.bf16.gmra.mxu0 %v127
    %v346 = vpop.f32.mrf.mxu0
    %v347 = vadd.f32 %v164, %v346
    %v348 = vpop.f32.mrf.mxu0
    %v349 = vadd.f32 %v164, %v348
    %350 = vmatmul.bf16.gmra.mxu0 %v128
    %v351 = vpop.f32.mrf.mxu0
    %v352 = vadd.f32 %v164, %v351
    %v353 = vpop.f32.mrf.mxu0
    %v354 = vadd.f32 %v164, %v353
    %355 = vmatmul.bf16.gmra.mxu0 %v129
    %v356 = vpop.f32.mrf.mxu0
    %v357 = vadd.f32 %v164, %v356
    %v358 = vpop.f32.mrf.mxu0
    %v359 = vadd.f32 %v164, %v358
    %360 = vdwg.mxu0
    %361 = vmatpush.bf16.msra.mxu0 %v297
    %362 = vmatpush.bf16.msra.mxu0 %v293
    %363 = vmatpush.bf16.msra.mxu0 %v289
    %364 = vmatpush.bf16.msra.mxu0 %v285
    %365 = vmatpush.bf16.msra.mxu0 %v281
    %366 = vmatpush.bf16.msra.mxu0 %v277
    %367 = vmatpush.bf16.msra.mxu0 %v273
    %368 = vmatpush.bf16.msra.mxu0 %v269
    %369 = vmatmul.bf16.gmra.mxu0 %v126
    %v370 = vpop.f32.mrf.mxu0
    %v371 = vadd.f32 %v165, %v370
    %v372 = vpop.f32.mrf.mxu0
    %v373 = vadd.f32 %v165, %v372
    %374 = vmatmul.bf16.gmra.mxu0 %v127
    %v375 = vpop.f32.mrf.mxu0
    %v376 = vadd.f32 %v165, %v375
    %v377 = vpop.f32.mrf.mxu0
    %v378 = vadd.f32 %v165, %v377
    %379 = vmatmul.bf16.gmra.mxu0 %v128
    %v380 = vpop.f32.mrf.mxu0
    %v381 = vadd.f32 %v165, %v380
    %v382 = vpop.f32.mrf.mxu0
    %v383 = vadd.f32 %v165, %v382
    %384 = vmatmul.bf16.gmra.mxu0 %v129
    %v385 = vpop.f32.mrf.mxu0
    %v386 = vadd.f32 %v165, %v385
    %v387 = vpop.f32.mrf.mxu0
    %v388 = vadd.f32 %v165, %v387
    %389 = vdwg.mxu0
    %390 = vmatpush.bf16.msra.mxu0 %v298
    %391 = vmatpush.bf16.msra.mxu0 %v294
    %392 = vmatpush.bf16.msra.mxu0 %v290
    %393 = vmatpush.bf16.msra.mxu0 %v286
    %394 = vmatpush.bf16.msra.mxu0 %v282
    %395 = vmatpush.bf16.msra.mxu0 %v278
    %396 = vmatpush.bf16.msra.mxu0 %v274
    %397 = vmatpush.bf16.msra.mxu0 %v270
    %398 = vmatmul.bf16.gmra.mxu0 %v126
    %v399 = vpop.f32.mrf.mxu0
    %v400 = vadd.f32 %v166, %v399
    %v401 = vpop.f32.mrf.mxu0
    %v402 = vadd.f32 %v166, %v401
    %403 = vmatmul.bf16.gmra.mxu0 %v127
    %v404 = vpop.f32.mrf.mxu0
    %v405 = vadd.f32 %v166, %v404
    %v406 = vpop.f32.mrf.mxu0
    %v407 = vadd.f32 %v166, %v406
    %408 = vmatmul.bf16.gmra.mxu0 %v128
    %v409 = vpop.f32.mrf.mxu0
    %v410 = vadd.f32 %v166, %v409
    %v411 = vpop.f32.mrf.mxu0
    %v412 = vadd.f32 %v166, %v411
    %413 = vmatmul.bf16.gmra.mxu0 %v129
    %v414 = vpop.f32.mrf.mxu0
    %v415 = vadd.f32 %v166, %v414
    %v416 = vpop.f32.mrf.mxu0
    %v417 = vadd.f32 %v166, %v416
    %418 = vdwg.mxu0
    %419 = vmatpush.bf16.msra.mxu0 %v299
    %420 = vmatpush.bf16.msra.mxu0 %v295
    %421 = vmatpush.bf16.msra.mxu0 %v291
    %422 = vmatpush.bf16.msra.mxu0 %v287
    %423 = vmatpush.bf16.msra.mxu0 %v283
    %424 = vmatpush.bf16.msra.mxu0 %v279
    %425 = vmatpush.bf16.msra.mxu0 %v275
    %426 = vmatpush.bf16.msra.mxu0 %v271
    %427 = vmatmul.bf16.gmra.mxu0 %v126
    %v428 = vpop.f32.mrf.mxu0
    %v429 = vadd.f32 %v167, %v428
    %v430 = vpop.f32.mrf.mxu0
    %v431 = vadd.f32 %v167, %v430
    %432 = vmatmul.bf16.gmra.mxu0 %v127
    %v433 = vpop.f32.mrf.mxu0
    %v434 = vadd.f32 %v167, %v433
    %v435 = vpop.f32.mrf.mxu0
    %v436 = vadd.f32 %v167, %v435
    %437 = vmatmul.bf16.gmra.mxu0 %v128
    %v438 = vpop.f32.mrf.mxu0
    %v439 = vadd.f32 %v167, %v438
    %v440 = vpop.f32.mrf.mxu0
    %v441 = vadd.f32 %v167, %v440
    %442 = vmatmul.bf16.gmra.mxu0 %v129
    %v443 = vpop.f32.mrf.mxu0
    %v444 = vadd.f32 %v167, %v443
    %v445 = vpop.f32.mrf.mxu0
    %v446 = vadd.f32 %v167, %v445
    %447 = vdwg.mxu0
    %448 = vst [vmem:[#allocation2] sm:$0xff] %v342
    %449 = vst [vmem:[#allocation2 + $0x8] sm:$0xff] %v371
    %450 = vst [vmem:[#allocation2 + $0x10] sm:$0xff] %v400
    %451 = vst [vmem:[#allocation2 + $0x18] sm:$0xff] %v429
    %452 = vst [vmem:[#allocation2 + $0x20] sm:$0xff] %v344
    %453 = vst [vmem:[#allocation2 + $0x28] sm:$0xff] %v373
    %454 = vst [vmem:[#allocation2 + $0x30] sm:$0xff] %v402
    %455 = vst [vmem:[#allocation2 + $0x38] sm:$0xff] %v431
    %456 = vst [vmem:[#allocation2 + $0x40] sm:$0xff] %v347
    %457 = vst [vmem:[#allocation2 + $0x48] sm:$0xff] %v376
    %458 = vst [vmem:[#allocation2 + $0x50] sm:$0xff] %v405
    %459 = vst [vmem:[#allocation2 + $0x58] sm:$0xff] %v434
    %460 = vst [vmem:[#allocation2 + $0x60] sm:$0xff] %v349
    %461 = vst [vmem:[#allocation2 + $0x68] sm:$0xff] %v378
    %462 = vst [vmem:[#allocation2 + $0x70] sm:$0xff] %v407
    %463 = vst [vmem:[#allocation2 + $0x78] sm:$0xff] %v436
    %464 = vst [vmem:[#allocation2 + $0x80] sm:$0xff] %v352
    %465 = vst [vmem:[#allocation2 + $0x88] sm:$0xff] %v381
    %466 = vst [vmem:[#allocation2 + $0x90] sm:$0xff] %v410
    %467 = vst [vmem:[#allocation2 + $0x98] sm:$0xff] %v439
    %468 = vst [vmem:[#allocation2 + $0xa0] sm:$0xff] %v354
    %469 = vst [vmem:[#allocation2 + $0xa8] sm:$0xff] %v383
    %470 = vst [vmem:[#allocation2 + $0xb0] sm:$0xff] %v412
    %471 = vst [vmem:[#allocation2 + $0xb8] sm:$0xff] %v441
    %472 = vst [vmem:[#allocation2 + $0xc0] sm:$0xff] %v357
    %473 = vst [vmem:[#allocation2 + $0xc8] sm:$0xff] %v386
    %474 = vst [vmem:[#allocation2 + $0xd0] sm:$0xff] %v415
    %475 = vst [vmem:[#allocation2 + $0xd8] sm:$0xff] %v444
    %476 = vst [vmem:[#allocation2 + $0xe0] sm:$0xff] %v359
    %477 = vst [vmem:[#allocation2 + $0xe8] sm:$0xff] %v388
    %478 = vst [vmem:[#allocation2 + $0xf0] sm:$0xff] %v417
    %479 = vst [vmem:[#allocation2 + $0xf8] sm:$0xff] %v446
    %v480 = vld [vmem:[#allocation9] sm:$0xff]
    %v481 = vld [vmem:[#allocation9 + $0x8] sm:$0xff]
    %v482 = vld [vmem:[#allocation9 + $0x10] sm:$0xff]
    %v483 = vld [vmem:[#allocation9 + $0x18] sm:$0xff]
    %v484 = vld [vmem:[#allocation9 + $0x20] sm:$0xff]
    %v485 = vld [vmem:[#allocation9 + $0x28] sm:$0xff]
    %v486 = vld [vmem:[#allocation9 + $0x30] sm:$0xff]
    %v487 = vld [vmem:[#allocation9 + $0x38] sm:$0xff]
    %v488 = vld [vmem:[#allocation9 + $0x40] sm:$0xff]
    %v489 = vld [vmem:[#allocation9 + $0x48] sm:$0xff]
    %v490 = vld [vmem:[#allocation9 + $0x50] sm:$0xff]
    %v491 = vld [vmem:[#allocation9 + $0x58] sm:$0xff]
    %v492 = vld [vmem:[#allocation9 + $0x60] sm:$0xff]
    %v493 = vld [vmem:[#allocation9 + $0x68] sm:$0xff]
    %v494 = vld [vmem:[#allocation9 + $0x70] sm:$0xff]
    %v495 = vld [vmem:[#allocation9 + $0x78] sm:$0xff]
    %v496 = vld [vmem:[#allocation9 + $0x80] sm:$0xff]
    %v497 = vld [vmem:[#allocation9 + $0x88] sm:$0xff]
    %v498 = vld [vmem:[#allocation9 + $0x90] sm:$0xff]
    %v499 = vld [vmem:[#allocation9 + $0x98] sm:$0xff]
    %v500 = vld [vmem:[#allocation9 + $0xa0] sm:$0xff]
    %v501 = vld [vmem:[#allocation9 + $0xa8] sm:$0xff]
    %v502 = vld [vmem:[#allocation9 + $0xb0] sm:$0xff]
    %v503 = vld [vmem:[#allocation9 + $0xb8] sm:$0xff]
    %v504 = vld [vmem:[#allocation9 + $0xc0] sm:$0xff]
    %v505 = vld [vmem:[#allocation9 + $0xc8] sm:$0xff]
    %v506 = vld [vmem:[#allocation9 + $0xd0] sm:$0xff]
    %v507 = vld [vmem:[#allocation9 + $0xd8] sm:$0xff]
    %v508 = vld [vmem:[#allocation9 + $0xe0] sm:$0xff]
    %v509 = vld [vmem:[#allocation9 + $0xe8] sm:$0xff]
    %v510 = vld [vmem:[#allocation9 + $0xf0] sm:$0xff]
    %v511 = vld [vmem:[#allocation9 + $0xf8] sm:$0xff]
    %v512 = vld [vmem:[%s1] sm:$0xff]
    %v513 = vlaneseq
    %v514 = vand.u32 %v513, 127
    %v515 = vadd.s32 %v514, 128
    %v516 = vadd.s32 %v514, 256
    %v517 = vadd.s32 %v514, 384
    %vm518 = vcmp.lt.s32.totalorder %v514, 0
    %v519 = vsub.s32 0, %v514
    %v520 = vsel %vm518, %v519, %v514
    %v521 = vshrl.u32 %v520, 7
    %v522 = vand.u32 %v520, 127
    %v523 = vsub.s32 0, %v522
    %v524 = vsel %vm518, %v523, %v522
    %vm525 = vcmp.lt.s32.totalorder %v515, 0
    %v526 = vsub.s32 0, %v515
    %v527 = vsel %vm525, %v526, %v515
    %v528 = vshrl.u32 %v527, 7
    %v529 = vand.u32 %v527, 127
    %v530 = vsub.s32 0, %v529
    %v531 = vsel %vm525, %v530, %v529
    %vm532 = vcmp.lt.s32.totalorder %v516, 0
    %v533 = vsub.s32 0, %v516
    %v534 = vsel %vm532, %v533, %v516
    %v535 = vshrl.u32 %v534, 7
    %v536 = vand.u32 %v534, 127
    %v537 = vsub.s32 0, %v536
    %v538 = vsel %vm532, %v537, %v536
    %vm539 = vcmp.lt.s32.totalorder %v517, 0
    %v540 = vsub.s32 0, %v517
    %v541 = vsel %vm539, %v540, %v517
    %v542 = vshrl.u32 %v541, 7
    %v543 = vand.u32 %v541, 127
    %v544 = vsub.s32 0, %v543
    %v545 = vsel %vm539, %v544, %v543
    %vm546 = vcmp.ne.s32.totalorder %v524, 0
    %vm547 = vcmp.ne.s32.totalorder %v531, 0
    %vm548 = vcmp.ne.s32.totalorder %v538, 0
    %vm549 = vcmp.ne.s32.totalorder %v545, 0
    %vm550 = vcmp.lt.s32.totalorder %v524, 0
    %vm551 = vcmp.lt.s32.totalorder %v531, 0
    %vm552 = vcmp.lt.s32.totalorder %v538, 0
    %vm553 = vcmp.lt.s32.totalorder %v545, 0
    %vm554 = vmand %vm550, %vm546
    %vm555 = vmand %vm551, %vm547
    %vm556 = vmand %vm552, %vm548
    %vm557 = vmand %vm553, %vm549
    %v558 = vadd.s32 %v524, 128
    %v559 = vadd.s32 %v531, 128
    %v560 = vadd.s32 %v538, 128
    %v561 = vadd.s32 %v545, 128
    %v562 = vsel %vm554, %v558, %v524
    %v563 = vsel %vm555, %v559, %v531
    %v564 = vsel %vm556, %v560, %v538
    %v565 = vsel %vm557, %v561, %v545
    %vm566 = vcmp.lt.s32.totalorder %v562, 64
    %vm567 = vcmp.lt.s32.totalorder %v563, 64
    %vm568 = vcmp.lt.s32.totalorder %v564, 64
    %vm569 = vcmp.lt.s32.totalorder %v565, 64
    %vm570 = vcmp.lt.s32.totalorder %v514, 64
    %v571 = vsel %vm570, 0, 7
    %v572 = vsel %vm570, 1, 6
    %v573 = vsel %vm570, 2, 5
    %v574 = vsel %vm570, 3, 4
    %v575 = vsel %vm570, 4, 3
    %v576 = vsel %vm570, 5, 2
    %v577 = vsel %vm570, 6, 1
    %v578 = vsel %vm570, 7, 0
    %579 = vset.pattern.permute.xlu0 0
    %580 = vperm.xlu0 %579, %v512
    %v581 = vpop.permute.xlu0 %580
    %vm582 = vcmp.lt.s32.totalorder %v571, %v581
    %vm583 = vcmp.lt.s32.totalorder %v572, %v581
    %vm584 = vcmp.lt.s32.totalorder %v573, %v581
    %vm585 = vcmp.lt.s32.totalorder %v574, %v581
    %vm586 = vcmp.lt.s32.totalorder %v575, %v581
    %vm587 = vcmp.lt.s32.totalorder %v576, %v581
    %vm588 = vcmp.lt.s32.totalorder %v577, %v581
    %vm589 = vcmp.lt.s32.totalorder %v578, %v581
    %v590 = vld [vmem:[#allocation2] ss:$8 sm:$0xf]
    %s591 = scalar_lea.vmem [#allocation2], 32
    %v592 = vld [vmem:[%s591] ss:$8 sm:$0xf]
    %s593 = scalar_lea.vmem [#allocation2], 64
    %v594 = vld [vmem:[%s593] ss:$8 sm:$0xf]
    %s595 = scalar_lea.vmem [#allocation2], 96
    %v596 = vld [vmem:[%s595] ss:$8 sm:$0xf]
    %s597 = scalar_lea.vmem [#allocation2], 128
    %v598 = vld [vmem:[%s597] ss:$8 sm:$0xf]
    %s599 = scalar_lea.vmem [#allocation2], 160
    %v600 = vld [vmem:[%s599] ss:$8 sm:$0xf]
    %s601 = scalar_lea.vmem [#allocation2], 192
    %v602 = vld [vmem:[%s601] ss:$8 sm:$0xf]
    %s603 = scalar_lea.vmem [#allocation2], 224
    %v604 = vld [vmem:[%s603] ss:$8 sm:$0xf]
    %s605 = scalar_lea.vmem [#allocation2], 7
    %v606 = vld [vmem:[%s605] ss:$8 sm:$0xf]
    %s607 = scalar_lea.vmem [#allocation2], 39
    %v608 = vld [vmem:[%s607] ss:$8 sm:$0xf]
    %s609 = scalar_lea.vmem [#allocation2], 71
    %v610 = vld [vmem:[%s609] ss:$8 sm:$0xf]
    %s611 = scalar_lea.vmem [#allocation2], 103
    %v612 = vld [vmem:[%s611] ss:$8 sm:$0xf]
    %s613 = scalar_lea.vmem [#allocation2], 135
    %v614 = vld [vmem:[%s613] ss:$8 sm:$0xf]
    %s615 = scalar_lea.vmem [#allocation2], 167
    %v616 = vld [vmem:[%s615] ss:$8 sm:$0xf]
    %s617 = scalar_lea.vmem [#allocation2], 199
    %v618 = vld [vmem:[%s617] ss:$8 sm:$0xf]
    %s619 = scalar_lea.vmem [#allocation2], 231
    %v620 = vld [vmem:[%s619] ss:$8 sm:$0xf]
    %629 = vst [vmem:[#allocation1] ss:$9 sm:$0xff] %v590
    %s630 = scalar_lea.vmem [#allocation1], 1
    %631 = vst [vmem:[%s630] ss:$9 sm:$0xff] %v592
    %s632 = scalar_lea.vmem [#allocation1], 2
    %633 = vst [vmem:[%s632] ss:$9 sm:$0xff] %v594
    %s634 = scalar_lea.vmem [#allocation1], 3
    %635 = vst [vmem:[%s634] ss:$9 sm:$0xff] %v596
    %s636 = scalar_lea.vmem [#allocation1], 4
    %637 = vst [vmem:[%s636] ss:$9 sm:$0xff] %v598
    %s638 = scalar_lea.vmem [#allocation1], 5
    %639 = vst [vmem:[%s638] ss:$9 sm:$0xff] %v600
    %s640 = scalar_lea.vmem [#allocation1], 6
    %641 = vst [vmem:[%s640] ss:$9 sm:$0xff] %v602
    %s642 = scalar_lea.vmem [#allocation1], 7
    %643 = vst [vmem:[%s642] ss:$9 sm:$0xff] %v604
    %v644 = vld [vmem:[#allocation1] sm:$0xff]
    %v645 = vld [vmem:[#allocation1 + $0x9] sm:$0xff]
    %v646 = vld [vmem:[#allocation1 + $0x12] sm:$0xff]
    %v647 = vld [vmem:[#allocation1 + $0x1b] sm:$0xff]
    %660 = vst [vmem:[#allocation1] ss:$9 sm:$0xff] %v606
    %s661 = scalar_lea.vmem [#allocation1], 1
    %662 = vst [vmem:[%s661] ss:$9 sm:$0xff] %v608
    %s663 = scalar_lea.vmem [#allocation1], 2
    %664 = vst [vmem:[%s663] ss:$9 sm:$0xff] %v610
    %s665 = scalar_lea.vmem [#allocation1], 3
    %666 = vst [vmem:[%s665] ss:$9 sm:$0xff] %v612
    %s667 = scalar_lea.vmem [#allocation1], 4
    %668 = vst [vmem:[%s667] ss:$9 sm:$0xff] %v614
    %s669 = scalar_lea.vmem [#allocation1], 5
    %670 = vst [vmem:[%s669] ss:$9 sm:$0xff] %v616
    %s671 = scalar_lea.vmem [#allocation1], 6
    %672 = vst [vmem:[%s671] ss:$9 sm:$0xff] %v618
    %s673 = scalar_lea.vmem [#allocation1], 7
    %674 = vst [vmem:[%s673] ss:$9 sm:$0xff] %v620
    %v675 = vld [vmem:[#allocation1] sm:$0xff]
    %v676 = vld [vmem:[#allocation1 + $0x9] sm:$0xff]
    %v677 = vld [vmem:[#allocation1 + $0x12] sm:$0xff]
    %v678 = vld [vmem:[#allocation1 + $0x1b] sm:$0xff]
    %v683 = vsel %vm566, %v644, %v675
    %v684 = vsel %vm567, %v645, %v676
    %v685 = vsel %vm568, %v646, %v677
    %v686 = vsel %vm569, %v647, %v678
    %v719 = vunpack.c.l.b16 %v480
    %v720 = vunpack.c.h.b16 %v480
    %v721 = vunpack.c.l.b16 %v481
    %v722 = vunpack.c.h.b16 %v481
    %v723 = vunpack.c.l.b16 %v482
    %v724 = vunpack.c.h.b16 %v482
    %v725 = vunpack.c.l.b16 %v483
    %v726 = vunpack.c.h.b16 %v483
    %v727 = vunpack.c.l.b16 %v484
    %v728 = vunpack.c.h.b16 %v484
    %v729 = vunpack.c.l.b16 %v485
    %v730 = vunpack.c.h.b16 %v485
    %v731 = vunpack.c.l.b16 %v486
    %v732 = vunpack.c.h.b16 %v486
    %v733 = vunpack.c.l.b16 %v487
    %v734 = vunpack.c.h.b16 %v487
    %v735 = vunpack.c.l.b16 %v488
    %v736 = vunpack.c.h.b16 %v488
    %v737 = vunpack.c.l.b16 %v489
    %v738 = vunpack.c.h.b16 %v489
    %v739 = vunpack.c.l.b16 %v490
    %v740 = vunpack.c.h.b16 %v490
    %v741 = vunpack.c.l.b16 %v491
    %v742 = vunpack.c.h.b16 %v491
    %v743 = vunpack.c.l.b16 %v492
    %v744 = vunpack.c.h.b16 %v492
    %v745 = vunpack.c.l.b16 %v493
    %v746 = vunpack.c.h.b16 %v493
    %v747 = vunpack.c.l.b16 %v494
    %v748 = vunpack.c.h.b16 %v494
    %v749 = vunpack.c.l.b16 %v495
    %v750 = vunpack.c.h.b16 %v495
    %v751 = vunpack.c.l.b16 %v496
    %v752 = vunpack.c.h.b16 %v496
    %v753 = vunpack.c.l.b16 %v497
    %v754 = vunpack.c.h.b16 %v497
    %v755 = vunpack.c.l.b16 %v498
    %v756 = vunpack.c.h.b16 %v498
    %v757 = vunpack.c.l.b16 %v499
    %v758 = vunpack.c.h.b16 %v499
    %v759 = vunpack.c.l.b16 %v500
    %v760 = vunpack.c.h.b16 %v500
    %v761 = vunpack.c.l.b16 %v501
    %v762 = vunpack.c.h.b16 %v501
    %v763 = vunpack.c.l.b16 %v502
    %v764 = vunpack.c.h.b16 %v502
    %v765 = vunpack.c.l.b16 %v503
    %v766 = vunpack.c.h.b16 %v503
    %v767 = vunpack.c.l.b16 %v504
    %v768 = vunpack.c.h.b16 %v504
    %v769 = vunpack.c.l.b16 %v505
    %v770 = vunpack.c.h.b16 %v505
    %v771 = vunpack.c.l.b16 %v506
    %v772 = vunpack.c.h.b16 %v506
    %v773 = vunpack.c.l.b16 %v507
    %v774 = vunpack.c.h.b16 %v507
    %v775 = vunpack.c.l.b16 %v508
    %v776 = vunpack.c.h.b16 %v508
    %v777 = vunpack.c.l.b16 %v509
    %v778 = vunpack.c.h.b16 %v509
    %v779 = vunpack.c.l.b16 %v510
    %v780 = vunpack.c.h.b16 %v510
    %v781 = vunpack.c.l.b16 %v511
    %v782 = vunpack.c.h.b16 %v511
    %v783 = vpack.c.b16 %v723, %v719
    %v784 = vpack.c.b16 %v724, %v720
    %v785 = vpack.c.b16 %v725, %v721
    %v786 = vpack.c.b16 %v726, %v722
    %v787 = vpack.c.b16 %v731, %v727
    %v788 = vpack.c.b16 %v732, %v728
    %v789 = vpack.c.b16 %v733, %v729
    %v790 = vpack.c.b16 %v734, %v730
    %v791 = vpack.c.b16 %v739, %v735
    %v792 = vpack.c.b16 %v740, %v736
    %v793 = vpack.c.b16 %v741, %v737
    %v794 = vpack.c.b16 %v742, %v738
    %v795 = vpack.c.b16 %v747, %v743
    %v796 = vpack.c.b16 %v748, %v744
    %v797 = vpack.c.b16 %v749, %v745
    %v798 = vpack.c.b16 %v750, %v746
    %v799 = vpack.c.b16 %v755, %v751
    %v800 = vpack.c.b16 %v756, %v752
    %v801 = vpack.c.b16 %v757, %v753
    %v802 = vpack.c.b16 %v758, %v754
    %v803 = vpack.c.b16 %v763, %v759
    %v804 = vpack.c.b16 %v764, %v760
    %v805 = vpack.c.b16 %v765, %v761
    %v806 = vpack.c.b16 %v766, %v762
    %v807 = vpack.c.b16 %v771, %v767
    %v808 = vpack.c.b16 %v772, %v768
    %v809 = vpack.c.b16 %v773, %v769
    %v810 = vpack.c.b16 %v774, %v770
    %v811 = vpack.c.b16 %v779, %v775
    %v812 = vpack.c.b16 %v780, %v776
    %v813 = vpack.c.b16 %v781, %v777
    %v814 = vpack.c.b16 %v782, %v778
    %847 = vmatpush.bf16.msra.mxu0 %v811
    %848 = vmatpush.bf16.msra.mxu0 %v807
    %849 = vmatpush.bf16.msra.mxu0 %v803
    %850 = vmatpush.bf16.msra.mxu0 %v799
    %851 = vmatpush.bf16.msra.mxu0 %v795
    %852 = vmatpush.bf16.msra.mxu0 %v791
    %853 = vmatpush.bf16.msra.mxu0 %v787
    %854 = vmatpush.bf16.msra.mxu0 %v783
    %855 = vmatmul.bf16.gmra.mxu0 0
    %v856 = vpop.f32.mrf.mxu0
    %v857 = vadd.f32 0.0, %v856
    %v858 = vpop.f32.mrf.mxu0
    %859 = vdwg.mxu0
    %860 = vmatpush.bf16.msra.mxu0 %v812
    %861 = vmatpush.bf16.msra.mxu0 %v808
    %862 = vmatpush.bf16.msra.mxu0 %v804
    %863 = vmatpush.bf16.msra.mxu0 %v800
    %864 = vmatpush.bf16.msra.mxu0 %v796
    %865 = vmatpush.bf16.msra.mxu0 %v792
    %866 = vmatpush.bf16.msra.mxu0 %v788
    %867 = vmatpush.bf16.msra.mxu0 %v784
    %868 = vmatmul.bf16.gmra.mxu0 0
    %v869 = vpop.f32.mrf.mxu0
    %v870 = vadd.f32 0.0, %v869
    %v871 = vpop.f32.mrf.mxu0
    %872 = vdwg.mxu0
    %873 = vmatpush.bf16.msra.mxu0 %v813
    %874 = vmatpush.bf16.msra.mxu0 %v809
    %875 = vmatpush.bf16.msra.mxu0 %v805
    %876 = vmatpush.bf16.msra.mxu0 %v801
    %877 = vmatpush.bf16.msra.mxu0 %v797
    %878 = vmatpush.bf16.msra.mxu0 %v793
    %879 = vmatpush.bf16.msra.mxu0 %v789
    %880 = vmatpush.bf16.msra.mxu0 %v785
    %881 = vmatmul.bf16.gmra.mxu0 0
    %v882 = vpop.f32.mrf.mxu0
    %v883 = vadd.f32 0.0, %v882
    %v884 = vpop.f32.mrf.mxu0
    %885 = vdwg.mxu0
    %886 = vmatpush.bf16.msra.mxu0 %v814
    %887 = vmatpush.bf16.msra.mxu0 %v810
    %888 = vmatpush.bf16.msra.mxu0 %v806
    %889 = vmatpush.bf16.msra.mxu0 %v802
    %890 = vmatpush.bf16.msra.mxu0 %v798
    %891 = vmatpush.bf16.msra.mxu0 %v794
    %892 = vmatpush.bf16.msra.mxu0 %v790
    %893 = vmatpush.bf16.msra.mxu0 %v786
    %894 = vmatmul.bf16.gmra.mxu0 0
    %v895 = vpop.f32.mrf.mxu0
    %v896 = vadd.f32 0.0, %v895
    %v897 = vpop.f32.mrf.mxu0
    %898 = vdwg.mxu0
    %v899 = vadd.f32 %v683, %v857
    %v900 = vadd.f32 %v684, %v870
    %v901 = vadd.f32 %v685, %v883
    %v902 = vadd.f32 %v686, %v896
    %v903 = vxor.u32 %v899, 2147483648
    %v904 = vmul.f32 %v903, 1.442695
    %v905 = vpow.pop %v904
    %v906 = vadd.f32 %v905, 1.0
    %v907 = vrcp.pop %v906
    %v908 = vmul.f32 %v906, %v907
    %v909 = vsub.f32 1.0, %v908
    %v910 = vmul.f32 %v907, %v909
    %v911 = vadd.f32 %v907, %v910
    %vm912 = vweird.f32 %v906
    %vm913 = vweird.f32 %v907
    %vm914 = vmor %vm912, %vm913
    %v915 = vsel %vm914, %v907, %v911
    %v916 = vand.u32 2147483647, %v906
    %vm917 = vcmp.eq.f32.partialorder %v916, 8.507059e+37
    %v918 = vand.u32 %v906, 2147483648
    %v919 = vor.u32 1.1754944e-38, %v918
    %v920 = vsel %vm917, %v919, %v915
    %v921 = vmul.f32 1.0, %v920
    %v922 = vxor.u32 %v900, 2147483648
    %v923 = vmul.f32 %v922, 1.442695
    %v924 = vpow.pop %v923
    %v925 = vadd.f32 %v924, 1.0
    %v926 = vrcp.pop %v925
    %v927 = vmul.f32 %v925, %v926
    %v928 = vsub.f32 1.0, %v927
    %v929 = vmul.f32 %v926, %v928
    %v930 = vadd.f32 %v926, %v929
    %vm931 = vweird.f32 %v925
    %vm932 = vweird.f32 %v926
    %vm933 = vmor %vm931, %vm932
    %v934 = vsel %vm933, %v926, %v930
    %v935 = vand.u32 2147483647, %v925
    %vm936 = vcmp.eq.f32.partialorder %v935, 8.507059e+37
    %v937 = vand.u32 %v925, 2147483648
    %v938 = vor.u32 1.1754944e-38, %v937
    %v939 = vsel %vm936, %v938, %v934
    %v940 = vmul.f32 1.0, %v939
    %v941 = vtanh.pop %v901
    %v942 = vxor.u32 %v902, 2147483648
    %v943 = vmul.f32 %v942, 1.442695
    %v944 = vpow.pop %v943
    %v945 = vadd.f32 %v944, 1.0
    %v946 = vrcp.pop %v945
    %v947 = vmul.f32 %v945, %v946
    %v948 = vsub.f32 1.0, %v947
    %v949 = vmul.f32 %v946, %v948
    %v950 = vadd.f32 %v946, %v949
    %vm951 = vweird.f32 %v945
    %vm952 = vweird.f32 %v946
    %vm953 = vmor %vm951, %vm952
    %v954 = vsel %vm953, %v946, %v950
    %v955 = vand.u32 2147483647, %v945
    %vm956 = vcmp.eq.f32.partialorder %v955, 8.507059e+37
    %v957 = vand.u32 %v945, 2147483648
    %v958 = vor.u32 1.1754944e-38, %v957
    %v959 = vsel %vm956, %v958, %v954
    %v960 = vmul.f32 1.0, %v959
    %v961 = vmul.f32 %v940, 0.0
    %v962 = vmul.f32 %v921, %v941
    %v963 = vadd.f32 %v961, %v962
    %v964 = vtanh.pop %v963
    %v965 = vmul.f32 %v960, %v964
    %v966 = vsel %vm582, %v965, 0.0
    %v967 = vsel %vm582, %v963, 0.0
    %vm968 = vcmask 523264
    %969 = vst.msk [vmem:[#allocation3] sm:$0xff] %vm968, %v966
    %s970 = scalar_lea.vmem [#allocation3], 56
    %vm971 = vcmask 1048064
    %972 = vst.msk [vmem:[%s970] sm:$0xff] %vm971, %v966
    %s973 = scalar_lea.vmem [#allocation2], 1
    %v974 = vld [vmem:[%s973] ss:$8 sm:$0xf]
    %s975 = scalar_lea.vmem [#allocation2], 33
    %v976 = vld [vmem:[%s975] ss:$8 sm:$0xf]
    %s977 = scalar_lea.vmem [#allocation2], 65
    %v978 = vld [vmem:[%s977] ss:$8 sm:$0xf]
    %s979 = scalar_lea.vmem [#allocation2], 97
    %v980 = vld [vmem:[%s979] ss:$8 sm:$0xf]
    %s981 = scalar_lea.vmem [#allocation2], 129
    %v982 = vld [vmem:[%s981] ss:$8 sm:$0xf]
    %s983 = scalar_lea.vmem [#allocation2], 161
    %v984 = vld [vmem:[%s983] ss:$8 sm:$0xf]
    %s985 = scalar_lea.vmem [#allocation2], 193
    %v986 = vld [vmem:[%s985] ss:$8 sm:$0xf]
    %s987 = scalar_lea.vmem [#allocation2], 225
    %v988 = vld [vmem:[%s987] ss:$8 sm:$0xf]
    %s989 = scalar_lea.vmem [#allocation2], 6
    %v990 = vld [vmem:[%s989] ss:$8 sm:$0xf]
    %s991 = scalar_lea.vmem [#allocation2], 38
    %v992 = vld [vmem:[%s991] ss:$8 sm:$0xf]
    %s993 = scalar_lea.vmem [#allocation2], 70
    %v994 = vld [vmem:[%s993] ss:$8 sm:$0xf]
    %s995 = scalar_lea.vmem [#allocation2], 102
    %v996 = vld [vmem:[%s995] ss:$8 sm:$0xf]
    %s997 = scalar_lea.vmem [#allocation2], 134
    %v998 = vld [vmem:[%s997] ss:$8 sm:$0xf]
    %s999 = scalar_lea.vmem [#allocation2], 166
    %v1000 = vld [vmem:[%s999] ss:$8 sm:$0xf]
    %s1001 = scalar_lea.vmem [#allocation2], 198
    %v1002 = vld [vmem:[%s1001] ss:$8 sm:$0xf]
    %s1003 = scalar_lea.vmem [#allocation2], 230
    %v1004 = vld [vmem:[%s1003] ss:$8 sm:$0xf]
    %1013 = vst [vmem:[#allocation1] ss:$9 sm:$0xff] %v974
    %s1014 = scalar_lea.vmem [#allocation1], 1
    %1015 = vst [vmem:[%s1014] ss:$9 sm:$0xff] %v976
    %s1016 = scalar_lea.vmem [#allocation1], 2
    %1017 = vst [vmem:[%s1016] ss:$9 sm:$0xff] %v978
    %s1018 = scalar_lea.vmem [#allocation1], 3
    %1019 = vst [vmem:[%s1018] ss:$9 sm:$0xff] %v980
    %s1020 = scalar_lea.vmem [#allocation1], 4
    %1021 = vst [vmem:[%s1020] ss:$9 sm:$0xff] %v982
    %s1022 = scalar_lea.vmem [#allocation1], 5
    %1023 = vst [vmem:[%s1022] ss:$9 sm:$0xff] %v984
    %s1024 = scalar_lea.vmem [#allocation1], 6
    %1025 = vst [vmem:[%s1024] ss:$9 sm:$0xff] %v986
    %s1026 = scalar_lea.vmem [#allocation1], 7
    %1027 = vst [vmem:[%s1026] ss:$9 sm:$0xff] %v988
    %v1028 = vld [vmem:[#allocation1] sm:$0xff]
    %v1029 = vld [vmem:[#allocation1 + $0x9] sm:$0xff]
    %v1030 = vld [vmem:[#allocation1 + $0x12] sm:$0xff]
    %v1031 = vld [vmem:[#allocation1 + $0x1b] sm:$0xff]
    %1044 = vst [vmem:[#allocation1] ss:$9 sm:$0xff] %v990
    %s1045 = scalar_lea.vmem [#allocation1], 1
    %1046 = vst [vmem:[%s1045] ss:$9 sm:$0xff] %v992
    %s1047 = scalar_lea.vmem [#allocation1], 2
    %1048 = vst [vmem:[%s1047] ss:$9 sm:$0xff] %v994
    %s1049 = scalar_lea.vmem [#allocation1], 3
    %1050 = vst [vmem:[%s1049] ss:$9 sm:$0xff] %v996
    %s1051 = scalar_lea.vmem [#allocation1], 4
    %1052 = vst [vmem:[%s1051] ss:$9 sm:$0xff] %v998
    %s1053 = scalar_lea.vmem [#allocation1], 5
    %1054 = vst [vmem:[%s1053] ss:$9 sm:$0xff] %v1000
    %s1055 = scalar_lea.vmem [#allocation1], 6
    %1056 = vst [vmem:[%s1055] ss:$9 sm:$0xff] %v1002
    %s1057 = scalar_lea.vmem [#allocation1], 7
    %1058 = vst [vmem:[%s1057] ss:$9 sm:$0xff] %v1004
    %v1059 = vld [vmem:[#allocation1] sm:$0xff]
    %v1060 = vld [vmem:[#allocation1 + $0x9] sm:$0xff]
    %v1061 = vld [vmem:[#allocation1 + $0x12] sm:$0xff]
    %v1062 = vld [vmem:[#allocation1 + $0x1b] sm:$0xff]
    %v1067 = vsel %vm566, %v1028, %v1059
    %v1068 = vsel %vm567, %v1029, %v1060
    %v1069 = vsel %vm568, %v1030, %v1061
    %v1070 = vsel %vm569, %v1031, %v1062
    %v1071 = vpack.c.bf16 %v966, %v966
    %1072 = vmatpush.bf16.msra.mxu0 %v811
    %1073 = vmatpush.bf16.msra.mxu0 %v807
    %1074 = vmatpush.bf16.msra.mxu0 %v803
    %1075 = vmatpush.bf16.msra.mxu0 %v799
    %1076 = vmatpush.bf16.msra.mxu0 %v795
    %1077 = vmatpush.bf16.msra.mxu0 %v791
    %1078 = vmatpush.bf16.msra.mxu0 %v787
    %1079 = vmatpush.bf16.msra.mxu0 %v783
    %1080 = vmatmul.bf16.gmra.mxu0 %v1071
    %v1081 = vpop.f32.mrf.mxu0
    %v1082 = vadd.f32 0.0, %v1081
    %v1083 = vpop.f32.mrf.mxu0
    %1084 = vdwg.mxu0
    %1085 = vmatpush.bf16.msra.mxu0 %v812
    %1086 = vmatpush.bf16.msra.mxu0 %v808
    %1087 = vmatpush.bf16.msra.mxu0 %v804
    %1088 = vmatpush.bf16.msra.mxu0 %v800
    %1089 = vmatpush.bf16.msra.mxu0 %v796
    %1090 = vmatpush.bf16.msra.mxu0 %v792
    %1091 = vmatpush.bf16.msra.mxu0 %v788
    %1092 = vmatpush.bf16.msra.mxu0 %v784
    %1093 = vmatmul.bf16.gmra.mxu0 %v1071
    %v1094 = vpop.f32.mrf.mxu0
    %v1095 = vadd.f32 0.0, %v1094
    %v1096 = vpop.f32.mrf.mxu0
    %1097 = vdwg.mxu0
    %1098 = vmatpush.bf16.msra.mxu0 %v813
    %1099 = vmatpush.bf16.msra.mxu0 %v809
    %1100 = vmatpush.bf16.msra.mxu0 %v805
    %1101 = vmatpush.bf16.msra.mxu0 %v801
    %1102 = vmatpush.bf16.msra.mxu0 %v797
    %1103 = vmatpush.bf16.msra.mxu0 %v793
    %1104 = vmatpush.bf16.msra.mxu0 %v789
    %1105 = vmatpush.bf16.msra.mxu0 %v785
    %1106 = vmatmul.bf16.gmra.mxu0 %v1071
    %v1107 = vpop.f32.mrf.mxu0
    %v1108 = vadd.f32 0.0, %v1107
    %v1109 = vpop.f32.mrf.mxu0
    %1110 = vdwg.mxu0
    %1111 = vmatpush.bf16.msra.mxu0 %v814
    %1112 = vmatpush.bf16.msra.mxu0 %v810
    %1113 = vmatpush.bf16.msra.mxu0 %v806
    %1114 = vmatpush.bf16.msra.mxu0 %v802
    %1115 = vmatpush.bf16.msra.mxu0 %v798
    %1116 = vmatpush.bf16.msra.mxu0 %v794
    %1117 = vmatpush.bf16.msra.mxu0 %v790
    %1118 = vmatpush.bf16.msra.mxu0 %v786
    %1119 = vmatmul.bf16.gmra.mxu0 %v1071
    %v1120 = vpop.f32.mrf.mxu0
    %v1121 = vadd.f32 0.0, %v1120
    %v1122 = vpop.f32.mrf.mxu0
    %1123 = vdwg.mxu0
    %v1124 = vadd.f32 %v1067, %v1082
    %v1125 = vadd.f32 %v1068, %v1095
    %v1126 = vadd.f32 %v1069, %v1108
    %v1127 = vadd.f32 %v1070, %v1121
    %v1128 = vxor.u32 %v1124, 2147483648
    %v1129 = vmul.f32 %v1128, 1.442695
    %v1130 = vpow.pop %v1129
    %v1131 = vadd.f32 %v1130, 1.0
    %v1132 = vrcp.pop %v1131
    %v1133 = vmul.f32 %v1131, %v1132
    %v1134 = vsub.f32 1.0, %v1133
    %v1135 = vmul.f32 %v1132, %v1134
    %v1136 = vadd.f32 %v1132, %v1135
    %vm1137 = vweird.f32 %v1131
    %vm1138 = vweird.f32 %v1132
    %vm1139 = vmor %vm1137, %vm1138
    %v1140 = vsel %vm1139, %v1132, %v1136
    %v1141 = vand.u32 2147483647, %v1131
    %vm1142 = vcmp.eq.f32.partialorder %v1141, 8.507059e+37
    %v1143 = vand.u32 %v1131, 2147483648
    %v1144 = vor.u32 1.1754944e-38, %v1143
    %v1145 = vsel %vm1142, %v1144, %v1140
    %v1146 = vmul.f32 1.0, %v1145
    %v1147 = vxor.u32 %v1125, 2147483648
    %v1148 = vmul.f32 %v1147, 1.442695
    %v1149 = vpow.pop %v1148
    %v1150 = vadd.f32 %v1149, 1.0
    %v1151 = vrcp.pop %v1150
    %v1152 = vmul.f32 %v1150, %v1151
    %v1153 = vsub.f32 1.0, %v1152
    %v1154 = vmul.f32 %v1151, %v1153
    %v1155 = vadd.f32 %v1151, %v1154
    %vm1156 = vweird.f32 %v1150
    %vm1157 = vweird.f32 %v1151
    %vm1158 = vmor %vm1156, %vm1157
    %v1159 = vsel %vm1158, %v1151, %v1155
    %v1160 = vand.u32 2147483647, %v1150
    %vm1161 = vcmp.eq.f32.partialorder %v1160, 8.507059e+37
    %v1162 = vand.u32 %v1150, 2147483648
    %v1163 = vor.u32 1.1754944e-38, %v1162
    %v1164 = vsel %vm1161, %v1163, %v1159
    %v1165 = vmul.f32 1.0, %v1164
    %v1166 = vtanh.pop %v1126
    %v1167 = vxor.u32 %v1127, 2147483648
    %v1168 = vmul.f32 %v1167, 1.442695
    %v1169 = vpow.pop %v1168
    %v1170 = vadd.f32 %v1169, 1.0
    %v1171 = vrcp.pop %v1170
    %v1172 = vmul.f32 %v1170, %v1171
    %v1173 = vsub.f32 1.0, %v1172
    %v1174 = vmul.f32 %v1171, %v1173
    %v1175 = vadd.f32 %v1171, %v1174
    %vm1176 = vweird.f32 %v1170
    %vm1177 = vweird.f32 %v1171
    %vm1178 = vmor %vm1176, %vm1177
    %v1179 = vsel %vm1178, %v1171, %v1175
    %v1180 = vand.u32 2147483647, %v1170
    %vm1181 = vcmp.eq.f32.partialorder %v1180, 8.507059e+37
    %v1182 = vand.u32 %v1170, 2147483648
    %v1183 = vor.u32 1.1754944e-38, %v1182
    %v1184 = vsel %vm1181, %v1183, %v1179
    %v1185 = vmul.f32 1.0, %v1184
    %v1186 = vmul.f32 %v1165, %v967
    %v1187 = vmul.f32 %v1146, %v1166
    %v1188 = vadd.f32 %v1186, %v1187
    %v1189 = vtanh.pop %v1188
    %v1190 = vmul.f32 %v1185, %v1189
    %v1191 = vsel %vm583, %v1190, %v966
    %v1192 = vsel %vm583, %v1188, %v967
    %v1193 = vsel %vm583, %v1190, 0.0
    %s1194 = scalar_lea.vmem [#allocation3], 8
    %1195 = vst.msk [vmem:[%s1194] sm:$0xff] %vm968, %v1193
    %s1196 = scalar_lea.vmem [#allocation3], 48
    %1197 = vst.msk [vmem:[%s1196] sm:$0xff] %vm971, %v1193
    %s1198 = scalar_lea.vmem [#allocation2], 2
    %v1199 = vld [vmem:[%s1198] ss:$8 sm:$0xf]
    %s1200 = scalar_lea.vmem [#allocation2], 34
    %v1201 = vld [vmem:[%s1200] ss:$8 sm:$0xf]
    %s1202 = scalar_lea.vmem [#allocation2], 66
    %v1203 = vld [vmem:[%s1202] ss:$8 sm:$0xf]
    %s1204 = scalar_lea.vmem [#allocation2], 98
    %v1205 = vld [vmem:[%s1204] ss:$8 sm:$0xf]
    %s1206 = scalar_lea.vmem [#allocation2], 130
    %v1207 = vld [vmem:[%s1206] ss:$8 sm:$0xf]
    %s1208 = scalar_lea.vmem [#allocation2], 162
    %v1209 = vld [vmem:[%s1208] ss:$8 sm:$0xf]
    %s1210 = scalar_lea.vmem [#allocation2], 194
    %v1211 = vld [vmem:[%s1210] ss:$8 sm:$0xf]
    %s1212 = scalar_lea.vmem [#allocation2], 226
    %v1213 = vld [vmem:[%s1212] ss:$8 sm:$0xf]
    %s1214 = scalar_lea.vmem [#allocation2], 5
    %v1215 = vld [vmem:[%s1214] ss:$8 sm:$0xf]
    %s1216 = scalar_lea.vmem [#allocation2], 37
    %v1217 = vld [vmem:[%s1216] ss:$8 sm:$0xf]
    %s1218 = scalar_lea.vmem [#allocation2], 69
    %v1219 = vld [vmem:[%s1218] ss:$8 sm:$0xf]
    %s1220 = scalar_lea.vmem [#allocation2], 101
    %v1221 = vld [vmem:[%s1220] ss:$8 sm:$0xf]
    %s1222 = scalar_lea.vmem [#allocation2], 133
    %v1223 = vld [vmem:[%s1222] ss:$8 sm:$0xf]
    %s1224 = scalar_lea.vmem [#allocation2], 165
    %v1225 = vld [vmem:[%s1224] ss:$8 sm:$0xf]
    %s1226 = scalar_lea.vmem [#allocation2], 197
    %v1227 = vld [vmem:[%s1226] ss:$8 sm:$0xf]
    %s1228 = scalar_lea.vmem [#allocation2], 229
    %v1229 = vld [vmem:[%s1228] ss:$8 sm:$0xf]
    %1238 = vst [vmem:[#allocation1] ss:$9 sm:$0xff] %v1199
    %s1239 = scalar_lea.vmem [#allocation1], 1
    %1240 = vst [vmem:[%s1239] ss:$9 sm:$0xff] %v1201
    %s1241 = scalar_lea.vmem [#allocation1], 2
    %1242 = vst [vmem:[%s1241] ss:$9 sm:$0xff] %v1203
    %s1243 = scalar_lea.vmem [#allocation1], 3
    %1244 = vst [vmem:[%s1243] ss:$9 sm:$0xff] %v1205
    %s1245 = scalar_lea.vmem [#allocation1], 4
    %1246 = vst [vmem:[%s1245] ss:$9 sm:$0xff] %v1207
    %s1247 = scalar_lea.vmem [#allocation1], 5
    %1248 = vst [vmem:[%s1247] ss:$9 sm:$0xff] %v1209
    %s1249 = scalar_lea.vmem [#allocation1], 6
    %1250 = vst [vmem:[%s1249] ss:$9 sm:$0xff] %v1211
    %s1251 = scalar_lea.vmem [#allocation1], 7
    %1252 = vst [vmem:[%s1251] ss:$9 sm:$0xff] %v1213
    %v1253 = vld [vmem:[#allocation1] sm:$0xff]
    %v1254 = vld [vmem:[#allocation1 + $0x9] sm:$0xff]
    %v1255 = vld [vmem:[#allocation1 + $0x12] sm:$0xff]
    %v1256 = vld [vmem:[#allocation1 + $0x1b] sm:$0xff]
    %1269 = vst [vmem:[#allocation1] ss:$9 sm:$0xff] %v1215
    %s1270 = scalar_lea.vmem [#allocation1], 1
    %1271 = vst [vmem:[%s1270] ss:$9 sm:$0xff] %v1217
    %s1272 = scalar_lea.vmem [#allocation1], 2
    %1273 = vst [vmem:[%s1272] ss:$9 sm:$0xff] %v1219
    %s1274 = scalar_lea.vmem [#allocation1], 3
    %1275 = vst [vmem:[%s1274] ss:$9 sm:$0xff] %v1221
    %s1276 = scalar_lea.vmem [#allocation1], 4
    %1277 = vst [vmem:[%s1276] ss:$9 sm:$0xff] %v1223
    %s1278 = scalar_lea.vmem [#allocation1], 5
    %1279 = vst [vmem:[%s1278] ss:$9 sm:$0xff] %v1225
    %s1280 = scalar_lea.vmem [#allocation1], 6
    %1281 = vst [vmem:[%s1280] ss:$9 sm:$0xff] %v1227
    %s1282 = scalar_lea.vmem [#allocation1], 7
    %1283 = vst [vmem:[%s1282] ss:$9 sm:$0xff] %v1229
    %v1284 = vld [vmem:[#allocation1] sm:$0xff]
    %v1285 = vld [vmem:[#allocation1 + $0x9] sm:$0xff]
    %v1286 = vld [vmem:[#allocation1 + $0x12] sm:$0xff]
    %v1287 = vld [vmem:[#allocation1 + $0x1b] sm:$0xff]
    %v1292 = vsel %vm566, %v1253, %v1284
    %v1293 = vsel %vm567, %v1254, %v1285
    %v1294 = vsel %vm568, %v1255, %v1286
    %v1295 = vsel %vm569, %v1256, %v1287
    %v1296 = vpack.c.bf16 %v1191, %v1191
    %1297 = vmatpush.bf16.msra.mxu0 %v811
    %1298 = vmatpush.bf16.msra.mxu0 %v807
    %1299 = vmatpush.bf16.msra.mxu0 %v803
    %1300 = vmatpush.bf16.msra.mxu0 %v799
    %1301 = vmatpush.bf16.msra.mxu0 %v795
    %1302 = vmatpush.bf16.msra.mxu0 %v791
    %1303 = vmatpush.bf16.msra.mxu0 %v787
    %1304 = vmatpush.bf16.msra.mxu0 %v783
    %1305 = vmatmul.bf16.gmra.mxu0 %v1296
    %v1306 = vpop.f32.mrf.mxu0
    %v1307 = vadd.f32 0.0, %v1306
    %v1308 = vpop.f32.mrf.mxu0
    %1309 = vdwg.mxu0
    %1310 = vmatpush.bf16.msra.mxu0 %v812
    %1311 = vmatpush.bf16.msra.mxu0 %v808
    %1312 = vmatpush.bf16.msra.mxu0 %v804
    %1313 = vmatpush.bf16.msra.mxu0 %v800
    %1314 = vmatpush.bf16.msra.mxu0 %v796
    %1315 = vmatpush.bf16.msra.mxu0 %v792
    %1316 = vmatpush.bf16.msra.mxu0 %v788
    %1317 = vmatpush.bf16.msra.mxu0 %v784
    %1318 = vmatmul.bf16.gmra.mxu0 %v1296
    %v1319 = vpop.f32.mrf.mxu0
    %v1320 = vadd.f32 0.0, %v1319
    %v1321 = vpop.f32.mrf.mxu0
    %1322 = vdwg.mxu0
    %1323 = vmatpush.bf16.msra.mxu0 %v813
    %1324 = vmatpush.bf16.msra.mxu0 %v809
    %1325 = vmatpush.bf16.msra.mxu0 %v805
    %1326 = vmatpush.bf16.msra.mxu0 %v801
    %1327 = vmatpush.bf16.msra.mxu0 %v797
    %1328 = vmatpush.bf16.msra.mxu0 %v793
    %1329 = vmatpush.bf16.msra.mxu0 %v789
    %1330 = vmatpush.bf16.msra.mxu0 %v785
    %1331 = vmatmul.bf16.gmra.mxu0 %v1296
    %v1332 = vpop.f32.mrf.mxu0
    %v1333 = vadd.f32 0.0, %v1332
    %v1334 = vpop.f32.mrf.mxu0
    %1335 = vdwg.mxu0
    %1336 = vmatpush.bf16.msra.mxu0 %v814
    %1337 = vmatpush.bf16.msra.mxu0 %v810
    %1338 = vmatpush.bf16.msra.mxu0 %v806
    %1339 = vmatpush.bf16.msra.mxu0 %v802
    %1340 = vmatpush.bf16.msra.mxu0 %v798
    %1341 = vmatpush.bf16.msra.mxu0 %v794
    %1342 = vmatpush.bf16.msra.mxu0 %v790
    %1343 = vmatpush.bf16.msra.mxu0 %v786
    %1344 = vmatmul.bf16.gmra.mxu0 %v1296
    %v1345 = vpop.f32.mrf.mxu0
    %v1346 = vadd.f32 0.0, %v1345
    %v1347 = vpop.f32.mrf.mxu0
    %1348 = vdwg.mxu0
    %v1349 = vadd.f32 %v1292, %v1307
    %v1350 = vadd.f32 %v1293, %v1320
    %v1351 = vadd.f32 %v1294, %v1333
    %v1352 = vadd.f32 %v1295, %v1346
    %v1353 = vxor.u32 %v1349, 2147483648
    %v1354 = vmul.f32 %v1353, 1.442695
    %v1355 = vpow.pop %v1354
    %v1356 = vadd.f32 %v1355, 1.0
    %v1357 = vrcp.pop %v1356
    %v1358 = vmul.f32 %v1356, %v1357
    %v1359 = vsub.f32 1.0, %v1358
    %v1360 = vmul.f32 %v1357, %v1359
    %v1361 = vadd.f32 %v1357, %v1360
    %vm1362 = vweird.f32 %v1356
    %vm1363 = vweird.f32 %v1357
    %vm1364 = vmor %vm1362, %vm1363
    %v1365 = vsel %vm1364, %v1357, %v1361
    %v1366 = vand.u32 2147483647, %v1356
    %vm1367 = vcmp.eq.f32.partialorder %v1366, 8.507059e+37
    %v1368 = vand.u32 %v1356, 2147483648
    %v1369 = vor.u32 1.1754944e-38, %v1368
    %v1370 = vsel %vm1367, %v1369, %v1365
    %v1371 = vmul.f32 1.0, %v1370
    %v1372 = vxor.u32 %v1350, 2147483648
    %v1373 = vmul.f32 %v1372, 1.442695
    %v1374 = vpow.pop %v1373
    %v1375 = vadd.f32 %v1374, 1.0
    %v1376 = vrcp.pop %v1375
    %v1377 = vmul.f32 %v1375, %v1376
    %v1378 = vsub.f32 1.0, %v1377
    %v1379 = vmul.f32 %v1376, %v1378
    %v1380 = vadd.f32 %v1376, %v1379
    %vm1381 = vweird.f32 %v1375
    %vm1382 = vweird.f32 %v1376
    %vm1383 = vmor %vm1381, %vm1382
    %v1384 = vsel %vm1383, %v1376, %v1380
    %v1385 = vand.u32 2147483647, %v1375
    %vm1386 = vcmp.eq.f32.partialorder %v1385, 8.507059e+37
    %v1387 = vand.u32 %v1375, 2147483648
    %v1388 = vor.u32 1.1754944e-38, %v1387
    %v1389 = vsel %vm1386, %v1388, %v1384
    %v1390 = vmul.f32 1.0, %v1389
    %v1391 = vtanh.pop %v1351
    %v1392 = vxor.u32 %v1352, 2147483648
    %v1393 = vmul.f32 %v1392, 1.442695
    %v1394 = vpow.pop %v1393
    %v1395 = vadd.f32 %v1394, 1.0
    %v1396 = vrcp.pop %v1395
    %v1397 = vmul.f32 %v1395, %v1396
    %v1398 = vsub.f32 1.0, %v1397
    %v1399 = vmul.f32 %v1396, %v1398
    %v1400 = vadd.f32 %v1396, %v1399
    %vm1401 = vweird.f32 %v1395
    %vm1402 = vweird.f32 %v1396
    %vm1403 = vmor %vm1401, %vm1402
    %v1404 = vsel %vm1403, %v1396, %v1400
    %v1405 = vand.u32 2147483647, %v1395
    %vm1406 = vcmp.eq.f32.partialorder %v1405, 8.507059e+37
    %v1407 = vand.u32 %v1395, 2147483648
    %v1408 = vor.u32 1.1754944e-38, %v1407
    %v1409 = vsel %vm1406, %v1408, %v1404
    %v1410 = vmul.f32 1.0, %v1409
    %v1411 = vmul.f32 %v1390, %v1192
    %v1412 = vmul.f32 %v1371, %v1391
    %v1413 = vadd.f32 %v1411, %v1412
    %v1414 = vtanh.pop %v1413
    %v1415 = vmul.f32 %v1410, %v1414
    %v1416 = vsel %vm584, %v1415, %v1191
    %v1417 = vsel %vm584, %v1413, %v1192
    %v1418 = vsel %vm584, %v1415, 0.0
    %s1419 = scalar_lea.vmem [#allocation3], 16
    %1420 = vst.msk [vmem:[%s1419] sm:$0xff] %vm968, %v1418
    %s1421 = scalar_lea.vmem [#allocation3], 40
    %1422 = vst.msk [vmem:[%s1421] sm:$0xff] %vm971, %v1418
    %s1423 = scalar_lea.vmem [#allocation2], 3
    %v1424 = vld [vmem:[%s1423] ss:$8 sm:$0xf]
    %s1425 = scalar_lea.vmem [#allocation2], 35
    %v1426 = vld [vmem:[%s1425] ss:$8 sm:$0xf]
    %s1427 = scalar_lea.vmem [#allocation2], 67
    %v1428 = vld [vmem:[%s1427] ss:$8 sm:$0xf]
    %s1429 = scalar_lea.vmem [#allocation2], 99
    %v1430 = vld [vmem:[%s1429] ss:$8 sm:$0xf]
    %s1431 = scalar_lea.vmem [#allocation2], 131
    %v1432 = vld [vmem:[%s1431] ss:$8 sm:$0xf]
    %s1433 = scalar_lea.vmem [#allocation2], 163
    %v1434 = vld [vmem:[%s1433] ss:$8 sm:$0xf]
    %s1435 = scalar_lea.vmem [#allocation2], 195
    %v1436 = vld [vmem:[%s1435] ss:$8 sm:$0xf]
    %s1437 = scalar_lea.vmem [#allocation2], 227
    %v1438 = vld [vmem:[%s1437] ss:$8 sm:$0xf]
    %s1439 = scalar_lea.vmem [#allocation2], 4
    %v1440 = vld [vmem:[%s1439] ss:$8 sm:$0xf]
    %s1441 = scalar_lea.vmem [#allocation2], 36
    %v1442 = vld [vmem:[%s1441] ss:$8 sm:$0xf]
    %s1443 = scalar_lea.vmem [#allocation2], 68
    %v1444 = vld [vmem:[%s1443] ss:$8 sm:$0xf]
    %s1445 = scalar_lea.vmem [#allocation2], 100
    %v1446 = vld [vmem:[%s1445] ss:$8 sm:$0xf]
    %s1447 = scalar_lea.vmem [#allocation2], 132
    %v1448 = vld [vmem:[%s1447] ss:$8 sm:$0xf]
    %s1449 = scalar_lea.vmem [#allocation2], 164
    %v1450 = vld [vmem:[%s1449] ss:$8 sm:$0xf]
    %s1451 = scalar_lea.vmem [#allocation2], 196
    %v1452 = vld [vmem:[%s1451] ss:$8 sm:$0xf]
    %s1453 = scalar_lea.vmem [#allocation2], 228
    %v1454 = vld [vmem:[%s1453] ss:$8 sm:$0xf]
    %1463 = vst [vmem:[#allocation1] ss:$9 sm:$0xff] %v1424
    %s1464 = scalar_lea.vmem [#allocation1], 1
    %1465 = vst [vmem:[%s1464] ss:$9 sm:$0xff] %v1426
    %s1466 = scalar_lea.vmem [#allocation1], 2
    %1467 = vst [vmem:[%s1466] ss:$9 sm:$0xff] %v1428
    %s1468 = scalar_lea.vmem [#allocation1], 3
    %1469 = vst [vmem:[%s1468] ss:$9 sm:$0xff] %v1430
    %s1470 = scalar_lea.vmem [#allocation1], 4
    %1471 = vst [vmem:[%s1470] ss:$9 sm:$0xff] %v1432
    %s1472 = scalar_lea.vmem [#allocation1], 5
    %1473 = vst [vmem:[%s1472] ss:$9 sm:$0xff] %v1434
    %s1474 = scalar_lea.vmem [#allocation1], 6
    %1475 = vst [vmem:[%s1474] ss:$9 sm:$0xff] %v1436
    %s1476 = scalar_lea.vmem [#allocation1], 7
    %1477 = vst [vmem:[%s1476] ss:$9 sm:$0xff] %v1438
    %v1478 = vld [vmem:[#allocation1] sm:$0xff]
    %v1479 = vld [vmem:[#allocation1 + $0x9] sm:$0xff]
    %v1480 = vld [vmem:[#allocation1 + $0x12] sm:$0xff]
    %v1481 = vld [vmem:[#allocation1 + $0x1b] sm:$0xff]
    %1494 = vst [vmem:[#allocation1] ss:$9 sm:$0xff] %v1440
    %s1495 = scalar_lea.vmem [#allocation1], 1
    %1496 = vst [vmem:[%s1495] ss:$9 sm:$0xff] %v1442
    %s1497 = scalar_lea.vmem [#allocation1], 2
    %1498 = vst [vmem:[%s1497] ss:$9 sm:$0xff] %v1444
    %s1499 = scalar_lea.vmem [#allocation1], 3
    %1500 = vst [vmem:[%s1499] ss:$9 sm:$0xff] %v1446
    %s1501 = scalar_lea.vmem [#allocation1], 4
    %1502 = vst [vmem:[%s1501] ss:$9 sm:$0xff] %v1448
    %s1503 = scalar_lea.vmem [#allocation1], 5
    %1504 = vst [vmem:[%s1503] ss:$9 sm:$0xff] %v1450
    %s1505 = scalar_lea.vmem [#allocation1], 6
    %1506 = vst [vmem:[%s1505] ss:$9 sm:$0xff] %v1452
    %s1507 = scalar_lea.vmem [#allocation1], 7
    %1508 = vst [vmem:[%s1507] ss:$9 sm:$0xff] %v1454
    %v1509 = vld [vmem:[#allocation1] sm:$0xff]
    %v1510 = vld [vmem:[#allocation1 + $0x9] sm:$0xff]
    %v1511 = vld [vmem:[#allocation1 + $0x12] sm:$0xff]
    %v1512 = vld [vmem:[#allocation1 + $0x1b] sm:$0xff]
    %v1517 = vsel %vm566, %v1478, %v1509
    %v1518 = vsel %vm567, %v1479, %v1510
    %v1519 = vsel %vm568, %v1480, %v1511
    %v1520 = vsel %vm569, %v1481, %v1512
    %v1521 = vpack.c.bf16 %v1416, %v1416
    %1522 = vmatpush.bf16.msra.mxu0 %v811
    %1523 = vmatpush.bf16.msra.mxu0 %v807
    %1524 = vmatpush.bf16.msra.mxu0 %v803
    %1525 = vmatpush.bf16.msra.mxu0 %v799
    %1526 = vmatpush.bf16.msra.mxu0 %v795
    %1527 = vmatpush.bf16.msra.mxu0 %v791
    %1528 = vmatpush.bf16.msra.mxu0 %v787
    %1529 = vmatpush.bf16.msra.mxu0 %v783
    %1530 = vmatmul.bf16.gmra.mxu0 %v1521
    %v1531 = vpop.f32.mrf.mxu0
    %v1532 = vadd.f32 0.0, %v1531
    %v1533 = vpop.f32.mrf.mxu0
    %1534 = vdwg.mxu0
    %1535 = vmatpush.bf16.msra.mxu0 %v812
    %1536 = vmatpush.bf16.msra.mxu0 %v808
    %1537 = vmatpush.bf16.msra.mxu0 %v804
    %1538 = vmatpush.bf16.msra.mxu0 %v800
    %1539 = vmatpush.bf16.msra.mxu0 %v796
    %1540 = vmatpush.bf16.msra.mxu0 %v792
    %1541 = vmatpush.bf16.msra.mxu0 %v788
    %1542 = vmatpush.bf16.msra.mxu0 %v784
    %1543 = vmatmul.bf16.gmra.mxu0 %v1521
    %v1544 = vpop.f32.mrf.mxu0
    %v1545 = vadd.f32 0.0, %v1544
    %v1546 = vpop.f32.mrf.mxu0
    %1547 = vdwg.mxu0
    %1548 = vmatpush.bf16.msra.mxu0 %v813
    %1549 = vmatpush.bf16.msra.mxu0 %v809
    %1550 = vmatpush.bf16.msra.mxu0 %v805
    %1551 = vmatpush.bf16.msra.mxu0 %v801
    %1552 = vmatpush.bf16.msra.mxu0 %v797
    %1553 = vmatpush.bf16.msra.mxu0 %v793
    %1554 = vmatpush.bf16.msra.mxu0 %v789
    %1555 = vmatpush.bf16.msra.mxu0 %v785
    %1556 = vmatmul.bf16.gmra.mxu0 %v1521
    %v1557 = vpop.f32.mrf.mxu0
    %v1558 = vadd.f32 0.0, %v1557
    %v1559 = vpop.f32.mrf.mxu0
    %1560 = vdwg.mxu0
    %1561 = vmatpush.bf16.msra.mxu0 %v814
    %1562 = vmatpush.bf16.msra.mxu0 %v810
    %1563 = vmatpush.bf16.msra.mxu0 %v806
    %1564 = vmatpush.bf16.msra.mxu0 %v802
    %1565 = vmatpush.bf16.msra.mxu0 %v798
    %1566 = vmatpush.bf16.msra.mxu0 %v794
    %1567 = vmatpush.bf16.msra.mxu0 %v790
    %1568 = vmatpush.bf16.msra.mxu0 %v786
    %1569 = vmatmul.bf16.gmra.mxu0 %v1521
    %v1570 = vpop.f32.mrf.mxu0
    %v1571 = vadd.f32 0.0, %v1570
    %v1572 = vpop.f32.mrf.mxu0
    %1573 = vdwg.mxu0
    %v1574 = vadd.f32 %v1517, %v1532
    %v1575 = vadd.f32 %v1518, %v1545
    %v1576 = vadd.f32 %v1519, %v1558
    %v1577 = vadd.f32 %v1520, %v1571
    %v1578 = vxor.u32 %v1574, 2147483648
    %v1579 = vmul.f32 %v1578, 1.442695
    %v1580 = vpow.pop %v1579
    %v1581 = vadd.f32 %v1580, 1.0
    %v1582 = vrcp.pop %v1581
    %v1583 = vmul.f32 %v1581, %v1582
    %v1584 = vsub.f32 1.0, %v1583
    %v1585 = vmul.f32 %v1582, %v1584
    %v1586 = vadd.f32 %v1582, %v1585
    %vm1587 = vweird.f32 %v1581
    %vm1588 = vweird.f32 %v1582
    %vm1589 = vmor %vm1587, %vm1588
    %v1590 = vsel %vm1589, %v1582, %v1586
    %v1591 = vand.u32 2147483647, %v1581
    %vm1592 = vcmp.eq.f32.partialorder %v1591, 8.507059e+37
    %v1593 = vand.u32 %v1581, 2147483648
    %v1594 = vor.u32 1.1754944e-38, %v1593
    %v1595 = vsel %vm1592, %v1594, %v1590
    %v1596 = vmul.f32 1.0, %v1595
    %v1597 = vxor.u32 %v1575, 2147483648
    %v1598 = vmul.f32 %v1597, 1.442695
    %v1599 = vpow.pop %v1598
    %v1600 = vadd.f32 %v1599, 1.0
    %v1601 = vrcp.pop %v1600
    %v1602 = vmul.f32 %v1600, %v1601
    %v1603 = vsub.f32 1.0, %v1602
    %v1604 = vmul.f32 %v1601, %v1603
    %v1605 = vadd.f32 %v1601, %v1604
    %vm1606 = vweird.f32 %v1600
    %vm1607 = vweird.f32 %v1601
    %vm1608 = vmor %vm1606, %vm1607
    %v1609 = vsel %vm1608, %v1601, %v1605
    %v1610 = vand.u32 2147483647, %v1600
    %vm1611 = vcmp.eq.f32.partialorder %v1610, 8.507059e+37
    %v1612 = vand.u32 %v1600, 2147483648
    %v1613 = vor.u32 1.1754944e-38, %v1612
    %v1614 = vsel %vm1611, %v1613, %v1609
    %v1615 = vmul.f32 1.0, %v1614
    %v1616 = vtanh.pop %v1576
    %v1617 = vxor.u32 %v1577, 2147483648
    %v1618 = vmul.f32 %v1617, 1.442695
    %v1619 = vpow.pop %v1618
    %v1620 = vadd.f32 %v1619, 1.0
    %v1621 = vrcp.pop %v1620
    %v1622 = vmul.f32 %v1620, %v1621
    %v1623 = vsub.f32 1.0, %v1622
    %v1624 = vmul.f32 %v1621, %v1623
    %v1625 = vadd.f32 %v1621, %v1624
    %vm1626 = vweird.f32 %v1620
    %vm1627 = vweird.f32 %v1621
    %vm1628 = vmor %vm1626, %vm1627
    %v1629 = vsel %vm1628, %v1621, %v1625
    %v1630 = vand.u32 2147483647, %v1620
    %vm1631 = vcmp.eq.f32.partialorder %v1630, 8.507059e+37
    %v1632 = vand.u32 %v1620, 2147483648
    %v1633 = vor.u32 1.1754944e-38, %v1632
    %v1634 = vsel %vm1631, %v1633, %v1629
    %v1635 = vmul.f32 1.0, %v1634
    %v1636 = vmul.f32 %v1615, %v1417
    %v1637 = vmul.f32 %v1596, %v1616
    %v1638 = vadd.f32 %v1636, %v1637
    %v1639 = vtanh.pop %v1638
    %v1640 = vmul.f32 %v1635, %v1639
    %v1641 = vsel %vm585, %v1640, %v1416
    %v1642 = vsel %vm585, %v1638, %v1417
    %v1643 = vsel %vm585, %v1640, 0.0
    %s1644 = scalar_lea.vmem [#allocation3], 24
    %1645 = vst.msk [vmem:[%s1644] sm:$0xff] %vm968, %v1643
    %s1646 = scalar_lea.vmem [#allocation3], 32
    %1647 = vst.msk [vmem:[%s1646] sm:$0xff] %vm971, %v1643
    %v1648 = vld [vmem:[%s1439] ss:$8 sm:$0xf]
    %v1649 = vld [vmem:[%s1441] ss:$8 sm:$0xf]
    %v1650 = vld [vmem:[%s1443] ss:$8 sm:$0xf]
    %v1651 = vld [vmem:[%s1445] ss:$8 sm:$0xf]
    %v1652 = vld [vmem:[%s1447] ss:$8 sm:$0xf]
    %v1653 = vld [vmem:[%s1449] ss:$8 sm:$0xf]
    %v1654 = vld [vmem:[%s1451] ss:$8 sm:$0xf]
    %v1655 = vld [vmem:[%s1453] ss:$8 sm:$0xf]
    %v1656 = vld [vmem:[%s1423] ss:$8 sm:$0xf]
    %v1657 = vld [vmem:[%s1425] ss:$8 sm:$0xf]
    %v1658 = vld [vmem:[%s1427] ss:$8 sm:$0xf]
    %v1659 = vld [vmem:[%s1429] ss:$8 sm:$0xf]
    %v1660 = vld [vmem:[%s1431] ss:$8 sm:$0xf]
    %v1661 = vld [vmem:[%s1433] ss:$8 sm:$0xf]
    %v1662 = vld [vmem:[%s1435] ss:$8 sm:$0xf]
    %v1663 = vld [vmem:[%s1437] ss:$8 sm:$0xf]
    %1672 = vst [vmem:[#allocation1] ss:$9 sm:$0xff] %v1648
    %s1673 = scalar_lea.vmem [#allocation1], 1
    %1674 = vst [vmem:[%s1673] ss:$9 sm:$0xff] %v1649
    %s1675 = scalar_lea.vmem [#allocation1], 2
    %1676 = vst [vmem:[%s1675] ss:$9 sm:$0xff] %v1650
    %s1677 = scalar_lea.vmem [#allocation1], 3
    %1678 = vst [vmem:[%s1677] ss:$9 sm:$0xff] %v1651
    %s1679 = scalar_lea.vmem [#allocation1], 4
    %1680 = vst [vmem:[%s1679] ss:$9 sm:$0xff] %v1652
    %s1681 = scalar_lea.vmem [#allocation1], 5
    %1682 = vst [vmem:[%s1681] ss:$9 sm:$0xff] %v1653
    %s1683 = scalar_lea.vmem [#allocation1], 6
    %1684 = vst [vmem:[%s1683] ss:$9 sm:$0xff] %v1654
    %s1685 = scalar_lea.vmem [#allocation1], 7
    %1686 = vst [vmem:[%s1685] ss:$9 sm:$0xff] %v1655
    %v1687 = vld [vmem:[#allocation1] sm:$0xff]
    %v1688 = vld [vmem:[#allocation1 + $0x9] sm:$0xff]
    %v1689 = vld [vmem:[#allocation1 + $0x12] sm:$0xff]
    %v1690 = vld [vmem:[#allocation1 + $0x1b] sm:$0xff]
    %1703 = vst [vmem:[#allocation1] ss:$9 sm:$0xff] %v1656
    %s1704 = scalar_lea.vmem [#allocation1], 1
    %1705 = vst [vmem:[%s1704] ss:$9 sm:$0xff] %v1657
    %s1706 = scalar_lea.vmem [#allocation1], 2
    %1707 = vst [vmem:[%s1706] ss:$9 sm:$0xff] %v1658
    %s1708 = scalar_lea.vmem [#allocation1], 3
    %1709 = vst [vmem:[%s1708] ss:$9 sm:$0xff] %v1659
    %s1710 = scalar_lea.vmem [#allocation1], 4
    %1711 = vst [vmem:[%s1710] ss:$9 sm:$0xff] %v1660
    %s1712 = scalar_lea.vmem [#allocation1], 5
    %1713 = vst [vmem:[%s1712] ss:$9 sm:$0xff] %v1661
    %s1714 = scalar_lea.vmem [#allocation1], 6
    %1715 = vst [vmem:[%s1714] ss:$9 sm:$0xff] %v1662
    %s1716 = scalar_lea.vmem [#allocation1], 7
    %1717 = vst [vmem:[%s1716] ss:$9 sm:$0xff] %v1663
    %v1718 = vld [vmem:[#allocation1] sm:$0xff]
    %v1719 = vld [vmem:[#allocation1 + $0x9] sm:$0xff]
    %v1720 = vld [vmem:[#allocation1 + $0x12] sm:$0xff]
    %v1721 = vld [vmem:[#allocation1 + $0x1b] sm:$0xff]
    %v1726 = vsel %vm566, %v1687, %v1718
    %v1727 = vsel %vm567, %v1688, %v1719
    %v1728 = vsel %vm568, %v1689, %v1720
    %v1729 = vsel %vm569, %v1690, %v1721
    %v1730 = vpack.c.bf16 %v1641, %v1641
    %1731 = vmatpush.bf16.msra.mxu0 %v811
    %1732 = vmatpush.bf16.msra.mxu0 %v807
    %1733 = vmatpush.bf16.msra.mxu0 %v803
    %1734 = vmatpush.bf16.msra.mxu0 %v799
    %1735 = vmatpush.bf16.msra.mxu0 %v795
    %1736 = vmatpush.bf16.msra.mxu0 %v791
    %1737 = vmatpush.bf16.msra.mxu0 %v787
    %1738 = vmatpush.bf16.msra.mxu0 %v783
    %1739 = vmatmul.bf16.gmra.mxu0 %v1730
    %v1740 = vpop.f32.mrf.mxu0
    %v1741 = vadd.f32 0.0, %v1740
    %v1742 = vpop.f32.mrf.mxu0
    %1743 = vdwg.mxu0
    %1744 = vmatpush.bf16.msra.mxu0 %v812
    %1745 = vmatpush.bf16.msra.mxu0 %v808
    %1746 = vmatpush.bf16.msra.mxu0 %v804
    %1747 = vmatpush.bf16.msra.mxu0 %v800
    %1748 = vmatpush.bf16.msra.mxu0 %v796
    %1749 = vmatpush.bf16.msra.mxu0 %v792
    %1750 = vmatpush.bf16.msra.mxu0 %v788
    %1751 = vmatpush.bf16.msra.mxu0 %v784
    %1752 = vmatmul.bf16.gmra.mxu0 %v1730
    %v1753 = vpop.f32.mrf.mxu0
    %v1754 = vadd.f32 0.0, %v1753
    %v1755 = vpop.f32.mrf.mxu0
    %1756 = vdwg.mxu0
    %1757 = vmatpush.bf16.msra.mxu0 %v813
    %1758 = vmatpush.bf16.msra.mxu0 %v809
    %1759 = vmatpush.bf16.msra.mxu0 %v805
    %1760 = vmatpush.bf16.msra.mxu0 %v801
    %1761 = vmatpush.bf16.msra.mxu0 %v797
    %1762 = vmatpush.bf16.msra.mxu0 %v793
    %1763 = vmatpush.bf16.msra.mxu0 %v789
    %1764 = vmatpush.bf16.msra.mxu0 %v785
    %1765 = vmatmul.bf16.gmra.mxu0 %v1730
    %v1766 = vpop.f32.mrf.mxu0
    %v1767 = vadd.f32 0.0, %v1766
    %v1768 = vpop.f32.mrf.mxu0
    %1769 = vdwg.mxu0
    %1770 = vmatpush.bf16.msra.mxu0 %v814
    %1771 = vmatpush.bf16.msra.mxu0 %v810
    %1772 = vmatpush.bf16.msra.mxu0 %v806
    %1773 = vmatpush.bf16.msra.mxu0 %v802
    %1774 = vmatpush.bf16.msra.mxu0 %v798
    %1775 = vmatpush.bf16.msra.mxu0 %v794
    %1776 = vmatpush.bf16.msra.mxu0 %v790
    %1777 = vmatpush.bf16.msra.mxu0 %v786
    %1778 = vmatmul.bf16.gmra.mxu0 %v1730
    %v1779 = vpop.f32.mrf.mxu0
    %v1780 = vadd.f32 0.0, %v1779
    %v1781 = vpop.f32.mrf.mxu0
    %1782 = vdwg.mxu0
    %v1783 = vadd.f32 %v1726, %v1741
    %v1784 = vadd.f32 %v1727, %v1754
    %v1785 = vadd.f32 %v1728, %v1767
    %v1786 = vadd.f32 %v1729, %v1780
    %v1787 = vxor.u32 %v1783, 2147483648
    %v1788 = vmul.f32 %v1787, 1.442695
    %v1789 = vpow.pop %v1788
    %v1790 = vadd.f32 %v1789, 1.0
    %v1791 = vrcp.pop %v1790
    %v1792 = vmul.f32 %v1790, %v1791
    %v1793 = vsub.f32 1.0, %v1792
    %v1794 = vmul.f32 %v1791, %v1793
    %v1795 = vadd.f32 %v1791, %v1794
    %vm1796 = vweird.f32 %v1790
    %vm1797 = vweird.f32 %v1791
    %vm1798 = vmor %vm1796, %vm1797
    %v1799 = vsel %vm1798, %v1791, %v1795
    %v1800 = vand.u32 2147483647, %v1790
    %vm1801 = vcmp.eq.f32.partialorder %v1800, 8.507059e+37
    %v1802 = vand.u32 %v1790, 2147483648
    %v1803 = vor.u32 1.1754944e-38, %v1802
    %v1804 = vsel %vm1801, %v1803, %v1799
    %v1805 = vmul.f32 1.0, %v1804
    %v1806 = vxor.u32 %v1784, 2147483648
    %v1807 = vmul.f32 %v1806, 1.442695
    %v1808 = vpow.pop %v1807
    %v1809 = vadd.f32 %v1808, 1.0
    %v1810 = vrcp.pop %v1809
    %v1811 = vmul.f32 %v1809, %v1810
    %v1812 = vsub.f32 1.0, %v1811
    %v1813 = vmul.f32 %v1810, %v1812
    %v1814 = vadd.f32 %v1810, %v1813
    %vm1815 = vweird.f32 %v1809
    %vm1816 = vweird.f32 %v1810
    %vm1817 = vmor %vm1815, %vm1816
    %v1818 = vsel %vm1817, %v1810, %v1814
    %v1819 = vand.u32 2147483647, %v1809
    %vm1820 = vcmp.eq.f32.partialorder %v1819, 8.507059e+37
    %v1821 = vand.u32 %v1809, 2147483648
    %v1822 = vor.u32 1.1754944e-38, %v1821
    %v1823 = vsel %vm1820, %v1822, %v1818
    %v1824 = vmul.f32 1.0, %v1823
    %v1825 = vtanh.pop %v1785
    %v1826 = vxor.u32 %v1786, 2147483648
    %v1827 = vmul.f32 %v1826, 1.442695
    %v1828 = vpow.pop %v1827
    %v1829 = vadd.f32 %v1828, 1.0
    %v1830 = vrcp.pop %v1829
    %v1831 = vmul.f32 %v1829, %v1830
    %v1832 = vsub.f32 1.0, %v1831
    %v1833 = vmul.f32 %v1830, %v1832
    %v1834 = vadd.f32 %v1830, %v1833
    %vm1835 = vweird.f32 %v1829
    %vm1836 = vweird.f32 %v1830
    %vm1837 = vmor %vm1835, %vm1836
    %v1838 = vsel %vm1837, %v1830, %v1834
    %v1839 = vand.u32 2147483647, %v1829
    %vm1840 = vcmp.eq.f32.partialorder %v1839, 8.507059e+37
    %v1841 = vand.u32 %v1829, 2147483648
    %v1842 = vor.u32 1.1754944e-38, %v1841
    %v1843 = vsel %vm1840, %v1842, %v1838
    %v1844 = vmul.f32 1.0, %v1843
    %v1845 = vmul.f32 %v1824, %v1642
    %v1846 = vmul.f32 %v1805, %v1825
    %v1847 = vadd.f32 %v1845, %v1846
    %v1848 = vtanh.pop %v1847
    %v1849 = vmul.f32 %v1844, %v1848
    %v1850 = vsel %vm586, %v1849, %v1641
    %v1851 = vsel %vm586, %v1847, %v1642
    %v1852 = vsel %vm586, %v1849, 0.0
    %1853 = vst.msk [vmem:[%s1646] sm:$0xff] %vm968, %v1852
    %1854 = vst.msk [vmem:[%s1644] sm:$0xff] %vm971, %v1852
    %v1855 = vld [vmem:[%s1214] ss:$8 sm:$0xf]
    %v1856 = vld [vmem:[%s1216] ss:$8 sm:$0xf]
    %v1857 = vld [vmem:[%s1218] ss:$8 sm:$0xf]
    %v1858 = vld [vmem:[%s1220] ss:$8 sm:$0xf]
    %v1859 = vld [vmem:[%s1222] ss:$8 sm:$0xf]
    %v1860 = vld [vmem:[%s1224] ss:$8 sm:$0xf]
    %v1861 = vld [vmem:[%s1226] ss:$8 sm:$0xf]
    %v1862 = vld [vmem:[%s1228] ss:$8 sm:$0xf]
    %v1863 = vld [vmem:[%s1198] ss:$8 sm:$0xf]
    %v1864 = vld [vmem:[%s1200] ss:$8 sm:$0xf]
    %v1865 = vld [vmem:[%s1202] ss:$8 sm:$0xf]
    %v1866 = vld [vmem:[%s1204] ss:$8 sm:$0xf]
    %v1867 = vld [vmem:[%s1206] ss:$8 sm:$0xf]
    %v1868 = vld [vmem:[%s1208] ss:$8 sm:$0xf]
    %v1869 = vld [vmem:[%s1210] ss:$8 sm:$0xf]
    %v1870 = vld [vmem:[%s1212] ss:$8 sm:$0xf]
    %1879 = vst [vmem:[#allocation1] ss:$9 sm:$0xff] %v1855
    %s1880 = scalar_lea.vmem [#allocation1], 1
    %1881 = vst [vmem:[%s1880] ss:$9 sm:$0xff] %v1856
    %s1882 = scalar_lea.vmem [#allocation1], 2
    %1883 = vst [vmem:[%s1882] ss:$9 sm:$0xff] %v1857
    %s1884 = scalar_lea.vmem [#allocation1], 3
    %1885 = vst [vmem:[%s1884] ss:$9 sm:$0xff] %v1858
    %s1886 = scalar_lea.vmem [#allocation1], 4
    %1887 = vst [vmem:[%s1886] ss:$9 sm:$0xff] %v1859
    %s1888 = scalar_lea.vmem [#allocation1], 5
    %1889 = vst [vmem:[%s1888] ss:$9 sm:$0xff] %v1860
    %s1890 = scalar_lea.vmem [#allocation1], 6
    %1891 = vst [vmem:[%s1890] ss:$9 sm:$0xff] %v1861
    %s1892 = scalar_lea.vmem [#allocation1], 7
    %1893 = vst [vmem:[%s1892] ss:$9 sm:$0xff] %v1862
    %v1894 = vld [vmem:[#allocation1] sm:$0xff]
    %v1895 = vld [vmem:[#allocation1 + $0x9] sm:$0xff]
    %v1896 = vld [vmem:[#allocation1 + $0x12] sm:$0xff]
    %v1897 = vld [vmem:[#allocation1 + $0x1b] sm:$0xff]
    %1910 = vst [vmem:[#allocation1] ss:$9 sm:$0xff] %v1863
    %s1911 = scalar_lea.vmem [#allocation1], 1
    %1912 = vst [vmem:[%s1911] ss:$9 sm:$0xff] %v1864
    %s1913 = scalar_lea.vmem [#allocation1], 2
    %1914 = vst [vmem:[%s1913] ss:$9 sm:$0xff] %v1865
    %s1915 = scalar_lea.vmem [#allocation1], 3
    %1916 = vst [vmem:[%s1915] ss:$9 sm:$0xff] %v1866
    %s1917 = scalar_lea.vmem [#allocation1], 4
    %1918 = vst [vmem:[%s1917] ss:$9 sm:$0xff] %v1867
    %s1919 = scalar_lea.vmem [#allocation1], 5
    %1920 = vst [vmem:[%s1919] ss:$9 sm:$0xff] %v1868
    %s1921 = scalar_lea.vmem [#allocation1], 6
    %1922 = vst [vmem:[%s1921] ss:$9 sm:$0xff] %v1869
    %s1923 = scalar_lea.vmem [#allocation1], 7
    %1924 = vst [vmem:[%s1923] ss:$9 sm:$0xff] %v1870
    %v1925 = vld [vmem:[#allocation1] sm:$0xff]
    %v1926 = vld [vmem:[#allocation1 + $0x9] sm:$0xff]
    %v1927 = vld [vmem:[#allocation1 + $0x12] sm:$0xff]
    %v1928 = vld [vmem:[#allocation1 + $0x1b] sm:$0xff]
    %v1933 = vsel %vm566, %v1894, %v1925
    %v1934 = vsel %vm567, %v1895, %v1926
    %v1935 = vsel %vm568, %v1896, %v1927
    %v1936 = vsel %vm569, %v1897, %v1928
    %v1937 = vpack.c.bf16 %v1850, %v1850
    %1938 = vmatpush.bf16.msra.mxu0 %v811
    %1939 = vmatpush.bf16.msra.mxu0 %v807
    %1940 = vmatpush.bf16.msra.mxu0 %v803
    %1941 = vmatpush.bf16.msra.mxu0 %v799
    %1942 = vmatpush.bf16.msra.mxu0 %v795
    %1943 = vmatpush.bf16.msra.mxu0 %v791
    %1944 = vmatpush.bf16.msra.mxu0 %v787
    %1945 = vmatpush.bf16.msra.mxu0 %v783
    %1946 = vmatmul.bf16.gmra.mxu0 %v1937
    %v1947 = vpop.f32.mrf.mxu0
    %v1948 = vadd.f32 0.0, %v1947
    %v1949 = vpop.f32.mrf.mxu0
    %1950 = vdwg.mxu0
    %1951 = vmatpush.bf16.msra.mxu0 %v812
    %1952 = vmatpush.bf16.msra.mxu0 %v808
    %1953 = vmatpush.bf16.msra.mxu0 %v804
    %1954 = vmatpush.bf16.msra.mxu0 %v800
    %1955 = vmatpush.bf16.msra.mxu0 %v796
    %1956 = vmatpush.bf16.msra.mxu0 %v792
    %1957 = vmatpush.bf16.msra.mxu0 %v788
    %1958 = vmatpush.bf16.msra.mxu0 %v784
    %1959 = vmatmul.bf16.gmra.mxu0 %v1937
    %v1960 = vpop.f32.mrf.mxu0
    %v1961 = vadd.f32 0.0, %v1960
    %v1962 = vpop.f32.mrf.mxu0
    %1963 = vdwg.mxu0
    %1964 = vmatpush.bf16.msra.mxu0 %v813
    %1965 = vmatpush.bf16.msra.mxu0 %v809
    %1966 = vmatpush.bf16.msra.mxu0 %v805
    %1967 = vmatpush.bf16.msra.mxu0 %v801
    %1968 = vmatpush.bf16.msra.mxu0 %v797
    %1969 = vmatpush.bf16.msra.mxu0 %v793
    %1970 = vmatpush.bf16.msra.mxu0 %v789
    %1971 = vmatpush.bf16.msra.mxu0 %v785
    %1972 = vmatmul.bf16.gmra.mxu0 %v1937
    %v1973 = vpop.f32.mrf.mxu0
    %v1974 = vadd.f32 0.0, %v1973
    %v1975 = vpop.f32.mrf.mxu0
    %1976 = vdwg.mxu0
    %1977 = vmatpush.bf16.msra.mxu0 %v814
    %1978 = vmatpush.bf16.msra.mxu0 %v810
    %1979 = vmatpush.bf16.msra.mxu0 %v806
    %1980 = vmatpush.bf16.msra.mxu0 %v802
    %1981 = vmatpush.bf16.msra.mxu0 %v798
    %1982 = vmatpush.bf16.msra.mxu0 %v794
    %1983 = vmatpush.bf16.msra.mxu0 %v790
    %1984 = vmatpush.bf16.msra.mxu0 %v786
    %1985 = vmatmul.bf16.gmra.mxu0 %v1937
    %v1986 = vpop.f32.mrf.mxu0
    %v1987 = vadd.f32 0.0, %v1986
    %v1988 = vpop.f32.mrf.mxu0
    %1989 = vdwg.mxu0
    %v1990 = vadd.f32 %v1933, %v1948
    %v1991 = vadd.f32 %v1934, %v1961
    %v1992 = vadd.f32 %v1935, %v1974
    %v1993 = vadd.f32 %v1936, %v1987
    %v1994 = vxor.u32 %v1990, 2147483648
    %v1995 = vmul.f32 %v1994, 1.442695
    %v1996 = vpow.pop %v1995
    %v1997 = vadd.f32 %v1996, 1.0
    %v1998 = vrcp.pop %v1997
    %v1999 = vmul.f32 %v1997, %v1998
    %v2000 = vsub.f32 1.0, %v1999
    %v2001 = vmul.f32 %v1998, %v2000
    %v2002 = vadd.f32 %v1998, %v2001
    %vm2003 = vweird.f32 %v1997
    %vm2004 = vweird.f32 %v1998
    %vm2005 = vmor %vm2003, %vm2004
    %v2006 = vsel %vm2005, %v1998, %v2002
    %v2007 = vand.u32 2147483647, %v1997
    %vm2008 = vcmp.eq.f32.partialorder %v2007, 8.507059e+37
    %v2009 = vand.u32 %v1997, 2147483648
    %v2010 = vor.u32 1.1754944e-38, %v2009
    %v2011 = vsel %vm2008, %v2010, %v2006
    %v2012 = vmul.f32 1.0, %v2011
    %v2013 = vxor.u32 %v1991, 2147483648
    %v2014 = vmul.f32 %v2013, 1.442695
    %v2015 = vpow.pop %v2014
    %v2016 = vadd.f32 %v2015, 1.0
    %v2017 = vrcp.pop %v2016
    %v2018 = vmul.f32 %v2016, %v2017
    %v2019 = vsub.f32 1.0, %v2018
    %v2020 = vmul.f32 %v2017, %v2019
    %v2021 = vadd.f32 %v2017, %v2020
    %vm2022 = vweird.f32 %v2016
    %vm2023 = vweird.f32 %v2017
    %vm2024 = vmor %vm2022, %vm2023
    %v2025 = vsel %vm2024, %v2017, %v2021
    %v2026 = vand.u32 2147483647, %v2016
    %vm2027 = vcmp.eq.f32.partialorder %v2026, 8.507059e+37
    %v2028 = vand.u32 %v2016, 2147483648
    %v2029 = vor.u32 1.1754944e-38, %v2028
    %v2030 = vsel %vm2027, %v2029, %v2025
    %v2031 = vmul.f32 1.0, %v2030
    %v2032 = vtanh.pop %v1992
    %v2033 = vxor.u32 %v1993, 2147483648
    %v2034 = vmul.f32 %v2033, 1.442695
    %v2035 = vpow.pop %v2034
    %v2036 = vadd.f32 %v2035, 1.0
    %v2037 = vrcp.pop %v2036
    %v2038 = vmul.f32 %v2036, %v2037
    %v2039 = vsub.f32 1.0, %v2038
    %v2040 = vmul.f32 %v2037, %v2039
    %v2041 = vadd.f32 %v2037, %v2040
    %vm2042 = vweird.f32 %v2036
    %vm2043 = vweird.f32 %v2037
    %vm2044 = vmor %vm2042, %vm2043
    %v2045 = vsel %vm2044, %v2037, %v2041
    %v2046 = vand.u32 2147483647, %v2036
    %vm2047 = vcmp.eq.f32.partialorder %v2046, 8.507059e+37
    %v2048 = vand.u32 %v2036, 2147483648
    %v2049 = vor.u32 1.1754944e-38, %v2048
    %v2050 = vsel %vm2047, %v2049, %v2045
    %v2051 = vmul.f32 1.0, %v2050
    %v2052 = vmul.f32 %v2031, %v1851
    %v2053 = vmul.f32 %v2012, %v2032
    %v2054 = vadd.f32 %v2052, %v2053
    %v2055 = vtanh.pop %v2054
    %v2056 = vmul.f32 %v2051, %v2055
    %v2057 = vsel %vm587, %v2056, %v1850
    %v2058 = vsel %vm587, %v2054, %v1851
    %v2059 = vsel %vm587, %v2056, 0.0
    %2060 = vst.msk [vmem:[%s1421] sm:$0xff] %vm968, %v2059
    %2061 = vst.msk [vmem:[%s1419] sm:$0xff] %vm971, %v2059
    %v2062 = vld [vmem:[%s989] ss:$8 sm:$0xf]
    %v2063 = vld [vmem:[%s991] ss:$8 sm:$0xf]
    %v2064 = vld [vmem:[%s993] ss:$8 sm:$0xf]
    %v2065 = vld [vmem:[%s995] ss:$8 sm:$0xf]
    %v2066 = vld [vmem:[%s997] ss:$8 sm:$0xf]
    %v2067 = vld [vmem:[%s999] ss:$8 sm:$0xf]
    %v2068 = vld [vmem:[%s1001] ss:$8 sm:$0xf]
    %v2069 = vld [vmem:[%s1003] ss:$8 sm:$0xf]
    %v2070 = vld [vmem:[%s973] ss:$8 sm:$0xf]
    %v2071 = vld [vmem:[%s975] ss:$8 sm:$0xf]
    %v2072 = vld [vmem:[%s977] ss:$8 sm:$0xf]
    %v2073 = vld [vmem:[%s979] ss:$8 sm:$0xf]
    %v2074 = vld [vmem:[%s981] ss:$8 sm:$0xf]
    %v2075 = vld [vmem:[%s983] ss:$8 sm:$0xf]
    %v2076 = vld [vmem:[%s985] ss:$8 sm:$0xf]
    %v2077 = vld [vmem:[%s987] ss:$8 sm:$0xf]
    %2086 = vst [vmem:[#allocation1] ss:$9 sm:$0xff] %v2062
    %s2087 = scalar_lea.vmem [#allocation1], 1
    %2088 = vst [vmem:[%s2087] ss:$9 sm:$0xff] %v2063
    %s2089 = scalar_lea.vmem [#allocation1], 2
    %2090 = vst [vmem:[%s2089] ss:$9 sm:$0xff] %v2064
    %s2091 = scalar_lea.vmem [#allocation1], 3
    %2092 = vst [vmem:[%s2091] ss:$9 sm:$0xff] %v2065
    %s2093 = scalar_lea.vmem [#allocation1], 4
    %2094 = vst [vmem:[%s2093] ss:$9 sm:$0xff] %v2066
    %s2095 = scalar_lea.vmem [#allocation1], 5
    %2096 = vst [vmem:[%s2095] ss:$9 sm:$0xff] %v2067
    %s2097 = scalar_lea.vmem [#allocation1], 6
    %2098 = vst [vmem:[%s2097] ss:$9 sm:$0xff] %v2068
    %s2099 = scalar_lea.vmem [#allocation1], 7
    %2100 = vst [vmem:[%s2099] ss:$9 sm:$0xff] %v2069
    %v2101 = vld [vmem:[#allocation1] sm:$0xff]
    %v2102 = vld [vmem:[#allocation1 + $0x9] sm:$0xff]
    %v2103 = vld [vmem:[#allocation1 + $0x12] sm:$0xff]
    %v2104 = vld [vmem:[#allocation1 + $0x1b] sm:$0xff]
    %2117 = vst [vmem:[#allocation1] ss:$9 sm:$0xff] %v2070
    %s2118 = scalar_lea.vmem [#allocation1], 1
    %2119 = vst [vmem:[%s2118] ss:$9 sm:$0xff] %v2071
    %s2120 = scalar_lea.vmem [#allocation1], 2
    %2121 = vst [vmem:[%s2120] ss:$9 sm:$0xff] %v2072
    %s2122 = scalar_lea.vmem [#allocation1], 3
    %2123 = vst [vmem:[%s2122] ss:$9 sm:$0xff] %v2073
    %s2124 = scalar_lea.vmem [#allocation1], 4
    %2125 = vst [vmem:[%s2124] ss:$9 sm:$0xff] %v2074
    %s2126 = scalar_lea.vmem [#allocation1], 5
    %2127 = vst [vmem:[%s2126] ss:$9 sm:$0xff] %v2075
    %s2128 = scalar_lea.vmem [#allocation1], 6
    %2129 = vst [vmem:[%s2128] ss:$9 sm:$0xff] %v2076
    %s2130 = scalar_lea.vmem [#allocation1], 7
    %2131 = vst [vmem:[%s2130] ss:$9 sm:$0xff] %v2077
    %v2132 = vld [vmem:[#allocation1] sm:$0xff]
    %v2133 = vld [vmem:[#allocation1 + $0x9] sm:$0xff]
    %v2134 = vld [vmem:[#allocation1 + $0x12] sm:$0xff]
    %v2135 = vld [vmem:[#allocation1 + $0x1b] sm:$0xff]
    %v2140 = vsel %vm566, %v2101, %v2132
    %v2141 = vsel %vm567, %v2102, %v2133
    %v2142 = vsel %vm568, %v2103, %v2134
    %v2143 = vsel %vm569, %v2104, %v2135
    %v2144 = vpack.c.bf16 %v2057, %v2057
    %2145 = vmatpush.bf16.msra.mxu0 %v811
    %2146 = vmatpush.bf16.msra.mxu0 %v807
    %2147 = vmatpush.bf16.msra.mxu0 %v803
    %2148 = vmatpush.bf16.msra.mxu0 %v799
    %2149 = vmatpush.bf16.msra.mxu0 %v795
    %2150 = vmatpush.bf16.msra.mxu0 %v791
    %2151 = vmatpush.bf16.msra.mxu0 %v787
    %2152 = vmatpush.bf16.msra.mxu0 %v783
    %2153 = vmatmul.bf16.gmra.mxu0 %v2144
    %v2154 = vpop.f32.mrf.mxu0
    %v2155 = vadd.f32 0.0, %v2154
    %v2156 = vpop.f32.mrf.mxu0
    %2157 = vdwg.mxu0
    %2158 = vmatpush.bf16.msra.mxu0 %v812
    %2159 = vmatpush.bf16.msra.mxu0 %v808
    %2160 = vmatpush.bf16.msra.mxu0 %v804
    %2161 = vmatpush.bf16.msra.mxu0 %v800
    %2162 = vmatpush.bf16.msra.mxu0 %v796
    %2163 = vmatpush.bf16.msra.mxu0 %v792
    %2164 = vmatpush.bf16.msra.mxu0 %v788
    %2165 = vmatpush.bf16.msra.mxu0 %v784
    %2166 = vmatmul.bf16.gmra.mxu0 %v2144
    %v2167 = vpop.f32.mrf.mxu0
    %v2168 = vadd.f32 0.0, %v2167
    %v2169 = vpop.f32.mrf.mxu0
    %2170 = vdwg.mxu0
    %2171 = vmatpush.bf16.msra.mxu0 %v813
    %2172 = vmatpush.bf16.msra.mxu0 %v809
    %2173 = vmatpush.bf16.msra.mxu0 %v805
    %2174 = vmatpush.bf16.msra.mxu0 %v801
    %2175 = vmatpush.bf16.msra.mxu0 %v797
    %2176 = vmatpush.bf16.msra.mxu0 %v793
    %2177 = vmatpush.bf16.msra.mxu0 %v789
    %2178 = vmatpush.bf16.msra.mxu0 %v785
    %2179 = vmatmul.bf16.gmra.mxu0 %v2144
    %v2180 = vpop.f32.mrf.mxu0
    %v2181 = vadd.f32 0.0, %v2180
    %v2182 = vpop.f32.mrf.mxu0
    %2183 = vdwg.mxu0
    %2184 = vmatpush.bf16.msra.mxu0 %v814
    %2185 = vmatpush.bf16.msra.mxu0 %v810
    %2186 = vmatpush.bf16.msra.mxu0 %v806
    %2187 = vmatpush.bf16.msra.mxu0 %v802
    %2188 = vmatpush.bf16.msra.mxu0 %v798
    %2189 = vmatpush.bf16.msra.mxu0 %v794
    %2190 = vmatpush.bf16.msra.mxu0 %v790
    %2191 = vmatpush.bf16.msra.mxu0 %v786
    %2192 = vmatmul.bf16.gmra.mxu0 %v2144
    %v2193 = vpop.f32.mrf.mxu0
    %v2194 = vadd.f32 0.0, %v2193
    %v2195 = vpop.f32.mrf.mxu0
    %2196 = vdwg.mxu0
    %v2197 = vadd.f32 %v2140, %v2155
    %v2198 = vadd.f32 %v2141, %v2168
    %v2199 = vadd.f32 %v2142, %v2181
    %v2200 = vadd.f32 %v2143, %v2194
    %v2201 = vxor.u32 %v2197, 2147483648
    %v2202 = vmul.f32 %v2201, 1.442695
    %v2203 = vpow.pop %v2202
    %v2204 = vadd.f32 %v2203, 1.0
    %v2205 = vrcp.pop %v2204
    %v2206 = vmul.f32 %v2204, %v2205
    %v2207 = vsub.f32 1.0, %v2206
    %v2208 = vmul.f32 %v2205, %v2207
    %v2209 = vadd.f32 %v2205, %v2208
    %vm2210 = vweird.f32 %v2204
    %vm2211 = vweird.f32 %v2205
    %vm2212 = vmor %vm2210, %vm2211
    %v2213 = vsel %vm2212, %v2205, %v2209
    %v2214 = vand.u32 2147483647, %v2204
    %vm2215 = vcmp.eq.f32.partialorder %v2214, 8.507059e+37
    %v2216 = vand.u32 %v2204, 2147483648
    %v2217 = vor.u32 1.1754944e-38, %v2216
    %v2218 = vsel %vm2215, %v2217, %v2213
    %v2219 = vmul.f32 1.0, %v2218
    %v2220 = vxor.u32 %v2198, 2147483648
    %v2221 = vmul.f32 %v2220, 1.442695
    %v2222 = vpow.pop %v2221
    %v2223 = vadd.f32 %v2222, 1.0
    %v2224 = vrcp.pop %v2223
    %v2225 = vmul.f32 %v2223, %v2224
    %v2226 = vsub.f32 1.0, %v2225
    %v2227 = vmul.f32 %v2224, %v2226
    %v2228 = vadd.f32 %v2224, %v2227
    %vm2229 = vweird.f32 %v2223
    %vm2230 = vweird.f32 %v2224
    %vm2231 = vmor %vm2229, %vm2230
    %v2232 = vsel %vm2231, %v2224, %v2228
    %v2233 = vand.u32 2147483647, %v2223
    %vm2234 = vcmp.eq.f32.partialorder %v2233, 8.507059e+37
    %v2235 = vand.u32 %v2223, 2147483648
    %v2236 = vor.u32 1.1754944e-38, %v2235
    %v2237 = vsel %vm2234, %v2236, %v2232
    %v2238 = vmul.f32 1.0, %v2237
    %v2239 = vtanh.pop %v2199
    %v2240 = vxor.u32 %v2200, 2147483648
    %v2241 = vmul.f32 %v2240, 1.442695
    %v2242 = vpow.pop %v2241
    %v2243 = vadd.f32 %v2242, 1.0
    %v2244 = vrcp.pop %v2243
    %v2245 = vmul.f32 %v2243, %v2244
    %v2246 = vsub.f32 1.0, %v2245
    %v2247 = vmul.f32 %v2244, %v2246
    %v2248 = vadd.f32 %v2244, %v2247
    %vm2249 = vweird.f32 %v2243
    %vm2250 = vweird.f32 %v2244
    %vm2251 = vmor %vm2249, %vm2250
    %v2252 = vsel %vm2251, %v2244, %v2248
    %v2253 = vand.u32 2147483647, %v2243
    %vm2254 = vcmp.eq.f32.partialorder %v2253, 8.507059e+37
    %v2255 = vand.u32 %v2243, 2147483648
    %v2256 = vor.u32 1.1754944e-38, %v2255
    %v2257 = vsel %vm2254, %v2256, %v2252
    %v2258 = vmul.f32 1.0, %v2257
    %v2259 = vmul.f32 %v2238, %v2058
    %v2260 = vmul.f32 %v2219, %v2239
    %v2261 = vadd.f32 %v2259, %v2260
    %v2262 = vtanh.pop %v2261
    %v2263 = vmul.f32 %v2258, %v2262
    %v2264 = vsel %vm588, %v2263, %v2057
    %v2265 = vsel %vm588, %v2261, %v2058
    %v2266 = vsel %vm588, %v2263, 0.0
    %2267 = vst.msk [vmem:[%s1196] sm:$0xff] %vm968, %v2266
    %2268 = vst.msk [vmem:[%s1194] sm:$0xff] %vm971, %v2266
    %v2269 = vld [vmem:[%s605] ss:$8 sm:$0xf]
    %v2270 = vld [vmem:[%s607] ss:$8 sm:$0xf]
    %v2271 = vld [vmem:[%s609] ss:$8 sm:$0xf]
    %v2272 = vld [vmem:[%s611] ss:$8 sm:$0xf]
    %v2273 = vld [vmem:[%s613] ss:$8 sm:$0xf]
    %v2274 = vld [vmem:[%s615] ss:$8 sm:$0xf]
    %v2275 = vld [vmem:[%s617] ss:$8 sm:$0xf]
    %v2276 = vld [vmem:[%s619] ss:$8 sm:$0xf]
    %v2277 = vld [vmem:[#allocation2] ss:$8 sm:$0xf]
    %v2278 = vld [vmem:[%s591] ss:$8 sm:$0xf]
    %v2279 = vld [vmem:[%s593] ss:$8 sm:$0xf]
    %v2280 = vld [vmem:[%s595] ss:$8 sm:$0xf]
    %v2281 = vld [vmem:[%s597] ss:$8 sm:$0xf]
    %v2282 = vld [vmem:[%s599] ss:$8 sm:$0xf]
    %v2283 = vld [vmem:[%s601] ss:$8 sm:$0xf]
    %v2284 = vld [vmem:[%s603] ss:$8 sm:$0xf]
    %2293 = vst [vmem:[#allocation1] ss:$9 sm:$0xff] %v2269
    %s2294 = scalar_lea.vmem [#allocation1], 1
    %2295 = vst [vmem:[%s2294] ss:$9 sm:$0xff] %v2270
    %s2296 = scalar_lea.vmem [#allocation1], 2
    %2297 = vst [vmem:[%s2296] ss:$9 sm:$0xff] %v2271
    %s2298 = scalar_lea.vmem [#allocation1], 3
    %2299 = vst [vmem:[%s2298] ss:$9 sm:$0xff] %v2272
    %s2300 = scalar_lea.vmem [#allocation1], 4
    %2301 = vst [vmem:[%s2300] ss:$9 sm:$0xff] %v2273
    %s2302 = scalar_lea.vmem [#allocation1], 5
    %2303 = vst [vmem:[%s2302] ss:$9 sm:$0xff] %v2274
    %s2304 = scalar_lea.vmem [#allocation1], 6
    %2305 = vst [vmem:[%s2304] ss:$9 sm:$0xff] %v2275
    %s2306 = scalar_lea.vmem [#allocation1], 7
    %2307 = vst [vmem:[%s2306] ss:$9 sm:$0xff] %v2276
    %v2308 = vld [vmem:[#allocation1] sm:$0xff]
    %v2309 = vld [vmem:[#allocation1 + $0x9] sm:$0xff]
    %v2310 = vld [vmem:[#allocation1 + $0x12] sm:$0xff]
    %v2311 = vld [vmem:[#allocation1 + $0x1b] sm:$0xff]
    %2324 = vst [vmem:[#allocation1] ss:$9 sm:$0xff] %v2277
    %s2325 = scalar_lea.vmem [#allocation1], 1
    %2326 = vst [vmem:[%s2325] ss:$9 sm:$0xff] %v2278
    %s2327 = scalar_lea.vmem [#allocation1], 2
    %2328 = vst [vmem:[%s2327] ss:$9 sm:$0xff] %v2279
    %s2329 = scalar_lea.vmem [#allocation1], 3
    %2330 = vst [vmem:[%s2329] ss:$9 sm:$0xff] %v2280
    %s2331 = scalar_lea.vmem [#allocation1], 4
    %2332 = vst [vmem:[%s2331] ss:$9 sm:$0xff] %v2281
    %s2333 = scalar_lea.vmem [#allocation1], 5
    %2334 = vst [vmem:[%s2333] ss:$9 sm:$0xff] %v2282
    %s2335 = scalar_lea.vmem [#allocation1], 6
    %2336 = vst [vmem:[%s2335] ss:$9 sm:$0xff] %v2283
    %s2337 = scalar_lea.vmem [#allocation1], 7
    %2338 = vst [vmem:[%s2337] ss:$9 sm:$0xff] %v2284
    %v2339 = vld [vmem:[#allocation1] sm:$0xff]
    %v2340 = vld [vmem:[#allocation1 + $0x9] sm:$0xff]
    %v2341 = vld [vmem:[#allocation1 + $0x12] sm:$0xff]
    %v2342 = vld [vmem:[#allocation1 + $0x1b] sm:$0xff]
    %v2347 = vsel %vm566, %v2308, %v2339
    %v2348 = vsel %vm567, %v2309, %v2340
    %v2349 = vsel %vm568, %v2310, %v2341
    %v2350 = vsel %vm569, %v2311, %v2342
    %v2351 = vpack.c.bf16 %v2264, %v2264
    %2352 = vmatpush.bf16.msra.mxu0 %v811
    %2353 = vmatpush.bf16.msra.mxu0 %v807
    %2354 = vmatpush.bf16.msra.mxu0 %v803
    %2355 = vmatpush.bf16.msra.mxu0 %v799
    %2356 = vmatpush.bf16.msra.mxu0 %v795
    %2357 = vmatpush.bf16.msra.mxu0 %v791
    %2358 = vmatpush.bf16.msra.mxu0 %v787
    %2359 = vmatpush.bf16.msra.mxu0 %v783
    %2360 = vmatmul.bf16.gmra.mxu0 %v2351
    %v2361 = vpop.f32.mrf.mxu0
    %v2362 = vadd.f32 0.0, %v2361
    %v2363 = vpop.f32.mrf.mxu0
    %2364 = vdwg.mxu0
    %2365 = vmatpush.bf16.msra.mxu0 %v812
    %2366 = vmatpush.bf16.msra.mxu0 %v808
    %2367 = vmatpush.bf16.msra.mxu0 %v804
    %2368 = vmatpush.bf16.msra.mxu0 %v800
    %2369 = vmatpush.bf16.msra.mxu0 %v796
    %2370 = vmatpush.bf16.msra.mxu0 %v792
    %2371 = vmatpush.bf16.msra.mxu0 %v788
    %2372 = vmatpush.bf16.msra.mxu0 %v784
    %2373 = vmatmul.bf16.gmra.mxu0 %v2351
    %v2374 = vpop.f32.mrf.mxu0
    %v2375 = vadd.f32 0.0, %v2374
    %v2376 = vpop.f32.mrf.mxu0
    %2377 = vdwg.mxu0
    %2378 = vmatpush.bf16.msra.mxu0 %v813
    %2379 = vmatpush.bf16.msra.mxu0 %v809
    %2380 = vmatpush.bf16.msra.mxu0 %v805
    %2381 = vmatpush.bf16.msra.mxu0 %v801
    %2382 = vmatpush.bf16.msra.mxu0 %v797
    %2383 = vmatpush.bf16.msra.mxu0 %v793
    %2384 = vmatpush.bf16.msra.mxu0 %v789
    %2385 = vmatpush.bf16.msra.mxu0 %v785
    %2386 = vmatmul.bf16.gmra.mxu0 %v2351
    %v2387 = vpop.f32.mrf.mxu0
    %v2388 = vadd.f32 0.0, %v2387
    %v2389 = vpop.f32.mrf.mxu0
    %2390 = vdwg.mxu0
    %2391 = vmatpush.bf16.msra.mxu0 %v814
    %2392 = vmatpush.bf16.msra.mxu0 %v810
    %2393 = vmatpush.bf16.msra.mxu0 %v806
    %2394 = vmatpush.bf16.msra.mxu0 %v802
    %2395 = vmatpush.bf16.msra.mxu0 %v798
    %2396 = vmatpush.bf16.msra.mxu0 %v794
    %2397 = vmatpush.bf16.msra.mxu0 %v790
    %2398 = vmatpush.bf16.msra.mxu0 %v786
    %2399 = vmatmul.bf16.gmra.mxu0 %v2351
    %v2400 = vpop.f32.mrf.mxu0
    %v2401 = vadd.f32 0.0, %v2400
    %v2402 = vpop.f32.mrf.mxu0
    %2403 = vdwg.mxu0
    %v2404 = vadd.f32 %v2347, %v2362
    %v2405 = vadd.f32 %v2348, %v2375
    %v2406 = vadd.f32 %v2349, %v2388
    %v2407 = vadd.f32 %v2350, %v2401
    %v2408 = vxor.u32 %v2404, 2147483648
    %v2409 = vmul.f32 %v2408, 1.442695
    %v2410 = vpow.pop %v2409
    %v2411 = vadd.f32 %v2410, 1.0
    %v2412 = vrcp.pop %v2411
    %v2413 = vmul.f32 %v2411, %v2412
    %v2414 = vsub.f32 1.0, %v2413
    %v2415 = vmul.f32 %v2412, %v2414
    %v2416 = vadd.f32 %v2412, %v2415
    %vm2417 = vweird.f32 %v2411
    %vm2418 = vweird.f32 %v2412
    %vm2419 = vmor %vm2417, %vm2418
    %v2420 = vsel %vm2419, %v2412, %v2416
    %v2421 = vand.u32 2147483647, %v2411
    %vm2422 = vcmp.eq.f32.partialorder %v2421, 8.507059e+37
    %v2423 = vand.u32 %v2411, 2147483648
    %v2424 = vor.u32 1.1754944e-38, %v2423
    %v2425 = vsel %vm2422, %v2424, %v2420
    %v2426 = vmul.f32 1.0, %v2425
    %v2427 = vxor.u32 %v2405, 2147483648
    %v2428 = vmul.f32 %v2427, 1.442695
    %v2429 = vpow.pop %v2428
    %v2430 = vadd.f32 %v2429, 1.0
    %v2431 = vrcp.pop %v2430
    %v2432 = vmul.f32 %v2430, %v2431
    %v2433 = vsub.f32 1.0, %v2432
    %v2434 = vmul.f32 %v2431, %v2433
    %v2435 = vadd.f32 %v2431, %v2434
    %vm2436 = vweird.f32 %v2430
    %vm2437 = vweird.f32 %v2431
    %vm2438 = vmor %vm2436, %vm2437
    %v2439 = vsel %vm2438, %v2431, %v2435
    %v2440 = vand.u32 2147483647, %v2430
    %vm2441 = vcmp.eq.f32.partialorder %v2440, 8.507059e+37
    %v2442 = vand.u32 %v2430, 2147483648
    %v2443 = vor.u32 1.1754944e-38, %v2442
    %v2444 = vsel %vm2441, %v2443, %v2439
    %v2445 = vmul.f32 1.0, %v2444
    %v2446 = vtanh.pop %v2406
    %v2447 = vxor.u32 %v2407, 2147483648
    %v2448 = vmul.f32 %v2447, 1.442695
    %v2449 = vpow.pop %v2448
    %v2450 = vadd.f32 %v2449, 1.0
    %v2451 = vrcp.pop %v2450
    %v2452 = vmul.f32 %v2450, %v2451
    %v2453 = vsub.f32 1.0, %v2452
    %v2454 = vmul.f32 %v2451, %v2453
    %v2455 = vadd.f32 %v2451, %v2454
    %vm2456 = vweird.f32 %v2450
    %vm2457 = vweird.f32 %v2451
    %vm2458 = vmor %vm2456, %vm2457
    %v2459 = vsel %vm2458, %v2451, %v2455
    %v2460 = vand.u32 2147483647, %v2450
    %vm2461 = vcmp.eq.f32.partialorder %v2460, 8.507059e+37
    %v2462 = vand.u32 %v2450, 2147483648
    %v2463 = vor.u32 1.1754944e-38, %v2462
    %v2464 = vsel %vm2461, %v2463, %v2459
    %v2465 = vmul.f32 1.0, %v2464
    %v2466 = vmul.f32 %v2445, %v2265
    %v2467 = vmul.f32 %v2426, %v2446
    %v2468 = vadd.f32 %v2466, %v2467
    %v2469 = vtanh.pop %v2468
    %v2470 = vmul.f32 %v2465, %v2469
    %v2471 = vsel %vm589, %v2470, 0.0
    %2472 = vst.msk [vmem:[%s970] sm:$0xff] %vm968, %v2471
    %2473 = vst.msk [vmem:[#allocation3] sm:$0xff] %vm971, %v2471
    %v2474 = vld [vmem:[#allocation3] sm:$0xff]
    %v2475 = vld [vmem:[#allocation3 + $0x8] sm:$0xff]
    %v2476 = vld [vmem:[#allocation3 + $0x10] sm:$0xff]
    %v2477 = vld [vmem:[#allocation3 + $0x18] sm:$0xff]
    %v2478 = vld [vmem:[#allocation3 + $0x20] sm:$0xff]
    %v2479 = vld [vmem:[#allocation3 + $0x28] sm:$0xff]
    %v2480 = vld [vmem:[#allocation3 + $0x30] sm:$0xff]
    %v2481 = vld [vmem:[#allocation3 + $0x38] sm:$0xff]
    %v2482 = vpack.c.bf16 %v2475, %v2474
    %v2483 = vpack.c.bf16 %v2477, %v2476
    %v2484 = vpack.c.bf16 %v2479, %v2478
    %v2485 = vpack.c.bf16 %v2481, %v2480
    %v2486 = vld [vmem:[#allocation10] sm:$0xff]
    %v2487 = vld [vmem:[#allocation10 + $0x8] sm:$0xff]
    %v2488 = vld [vmem:[#allocation10 + $0x10] sm:$0xff]
    %v2489 = vld [vmem:[#allocation10 + $0x18] sm:$0xff]
    %v2490 = vld [vmem:[#allocation10 + $0x20] sm:$0xff]
    %v2491 = vld [vmem:[#allocation10 + $0x28] sm:$0xff]
    %v2492 = vld [vmem:[#allocation10 + $0x30] sm:$0xff]
    %v2493 = vld [vmem:[#allocation10 + $0x38] sm:$0xff]
    %v2494 = vld [vmem:[#allocation10 + $0x40] sm:$0xff]
    %v2495 = vld [vmem:[#allocation10 + $0x48] sm:$0xff]
    %v2496 = vld [vmem:[#allocation10 + $0x50] sm:$0xff]
    %v2497 = vld [vmem:[#allocation10 + $0x58] sm:$0xff]
    %v2498 = vld [vmem:[#allocation10 + $0x60] sm:$0xff]
    %v2499 = vld [vmem:[#allocation10 + $0x68] sm:$0xff]
    %v2500 = vld [vmem:[#allocation10 + $0x70] sm:$0xff]
    %v2501 = vld [vmem:[#allocation10 + $0x78] sm:$0xff]
    %v2502 = vld [vmem:[%s6] sm:$0x3]
    %v2504 = vperm.slane %v2502, 0
    %v2505 = vperm.slane %v2502, 1
    %v2524 = vunpack.c.l.b16 %v2486
    %v2525 = vunpack.c.h.b16 %v2486
    %v2526 = vunpack.c.l.b16 %v2487
    %v2527 = vunpack.c.h.b16 %v2487
    %v2528 = vunpack.c.l.b16 %v2488
    %v2529 = vunpack.c.h.b16 %v2488
    %v2530 = vunpack.c.l.b16 %v2489
    %v2531 = vunpack.c.h.b16 %v2489
    %v2532 = vunpack.c.l.b16 %v2490
    %v2533 = vunpack.c.h.b16 %v2490
    %v2534 = vunpack.c.l.b16 %v2491
    %v2535 = vunpack.c.h.b16 %v2491
    %v2536 = vunpack.c.l.b16 %v2492
    %v2537 = vunpack.c.h.b16 %v2492
    %v2538 = vunpack.c.l.b16 %v2493
    %v2539 = vunpack.c.h.b16 %v2493
    %v2540 = vunpack.c.l.b16 %v2494
    %v2541 = vunpack.c.h.b16 %v2494
    %v2542 = vunpack.c.l.b16 %v2495
    %v2543 = vunpack.c.h.b16 %v2495
    %v2544 = vunpack.c.l.b16 %v2496
    %v2545 = vunpack.c.h.b16 %v2496
    %v2546 = vunpack.c.l.b16 %v2497
    %v2547 = vunpack.c.h.b16 %v2497
    %v2548 = vunpack.c.l.b16 %v2498
    %v2549 = vunpack.c.h.b16 %v2498
    %v2550 = vunpack.c.l.b16 %v2499
    %v2551 = vunpack.c.h.b16 %v2499
    %v2552 = vunpack.c.l.b16 %v2500
    %v2553 = vunpack.c.h.b16 %v2500
    %v2554 = vunpack.c.l.b16 %v2501
    %v2555 = vunpack.c.h.b16 %v2501
    %v2556 = vpack.c.b16 %v2526, %v2524
    %v2557 = vpack.c.b16 %v2527, %v2525
    %v2558 = vpack.c.b16 %v2530, %v2528
    %v2559 = vpack.c.b16 %v2531, %v2529
    %v2560 = vpack.c.b16 %v2534, %v2532
    %v2561 = vpack.c.b16 %v2535, %v2533
    %v2562 = vpack.c.b16 %v2538, %v2536
    %v2563 = vpack.c.b16 %v2539, %v2537
    %v2564 = vpack.c.b16 %v2542, %v2540
    %v2565 = vpack.c.b16 %v2543, %v2541
    %v2566 = vpack.c.b16 %v2546, %v2544
    %v2567 = vpack.c.b16 %v2547, %v2545
    %v2568 = vpack.c.b16 %v2550, %v2548
    %v2569 = vpack.c.b16 %v2551, %v2549
    %v2570 = vpack.c.b16 %v2554, %v2552
    %v2571 = vpack.c.b16 %v2555, %v2553
    %2588 = vmatpush.bf16.msra.mxu0 %v2570
    %2589 = vmatpush.bf16.msra.mxu0 %v2568
    %2590 = vmatpush.bf16.msra.mxu0 %v2566
    %2591 = vmatpush.bf16.msra.mxu0 %v2564
    %2592 = vmatpush.bf16.msra.mxu0 %v2562
    %2593 = vmatpush.bf16.msra.mxu0 %v2560
    %2594 = vmatpush.bf16.msra.mxu0 %v2558
    %2595 = vmatpush.bf16.msra.mxu0 %v2556
    %2596 = vmatmul.bf16.gmra.mxu0 %v2482
    %v2597 = vpop.f32.mrf.mxu0
    %v2598 = vadd.f32 %v2504, %v2597
    %v2599 = vpop.f32.mrf.mxu0
    %v2600 = vadd.f32 %v2504, %v2599
    %2601 = vmatmul.bf16.gmra.mxu0 %v2483
    %v2602 = vpop.f32.mrf.mxu0
    %v2603 = vadd.f32 %v2504, %v2602
    %v2604 = vpop.f32.mrf.mxu0
    %v2605 = vadd.f32 %v2504, %v2604
    %2606 = vmatmul.bf16.gmra.mxu0 %v2484
    %v2607 = vpop.f32.mrf.mxu0
    %v2608 = vadd.f32 %v2504, %v2607
    %v2609 = vpop.f32.mrf.mxu0
    %v2610 = vadd.f32 %v2504, %v2609
    %2611 = vmatmul.bf16.gmra.mxu0 %v2485
    %v2612 = vpop.f32.mrf.mxu0
    %v2613 = vadd.f32 %v2504, %v2612
    %v2614 = vpop.f32.mrf.mxu0
    %v2615 = vadd.f32 %v2504, %v2614
    %2616 = vdwg.mxu0
    %2617 = vmatpush.bf16.msra.mxu0 %v2571
    %2618 = vmatpush.bf16.msra.mxu0 %v2569
    %2619 = vmatpush.bf16.msra.mxu0 %v2567
    %2620 = vmatpush.bf16.msra.mxu0 %v2565
    %2621 = vmatpush.bf16.msra.mxu0 %v2563
    %2622 = vmatpush.bf16.msra.mxu0 %v2561
    %2623 = vmatpush.bf16.msra.mxu0 %v2559
    %2624 = vmatpush.bf16.msra.mxu0 %v2557
    %2625 = vmatmul.bf16.gmra.mxu0 %v2482
    %v2626 = vpop.f32.mrf.mxu0
    %v2627 = vadd.f32 %v2505, %v2626
    %v2628 = vpop.f32.mrf.mxu0
    %v2629 = vadd.f32 %v2505, %v2628
    %2630 = vmatmul.bf16.gmra.mxu0 %v2483
    %v2631 = vpop.f32.mrf.mxu0
    %v2632 = vadd.f32 %v2505, %v2631
    %v2633 = vpop.f32.mrf.mxu0
    %v2634 = vadd.f32 %v2505, %v2633
    %2635 = vmatmul.bf16.gmra.mxu0 %v2484
    %v2636 = vpop.f32.mrf.mxu0
    %v2637 = vadd.f32 %v2505, %v2636
    %v2638 = vpop.f32.mrf.mxu0
    %v2639 = vadd.f32 %v2505, %v2638
    %2640 = vmatmul.bf16.gmra.mxu0 %v2485
    %v2641 = vpop.f32.mrf.mxu0
    %v2642 = vadd.f32 %v2505, %v2641
    %v2643 = vpop.f32.mrf.mxu0
    %v2644 = vadd.f32 %v2505, %v2643
    %2645 = vdwg.mxu0
    %v2646 = vmax.f32 %v2598, 0.0
    %v2647 = vmax.f32 %v2627, 0.0
    %v2648 = vmax.f32 %v2600, 0.0
    %v2649 = vmax.f32 %v2629, 0.0
    %v2650 = vmax.f32 %v2603, 0.0
    %v2651 = vmax.f32 %v2632, 0.0
    %v2652 = vmax.f32 %v2605, 0.0
    %v2653 = vmax.f32 %v2634, 0.0
    %v2654 = vmax.f32 %v2608, 0.0
    %v2655 = vmax.f32 %v2637, 0.0
    %v2656 = vmax.f32 %v2610, 0.0
    %v2657 = vmax.f32 %v2639, 0.0
    %v2658 = vmax.f32 %v2613, 0.0
    %v2659 = vmax.f32 %v2642, 0.0
    %v2660 = vmax.f32 %v2615, 0.0
    %v2661 = vmax.f32 %v2644, 0.0
    %v2662 = vpack.c.bf16 %v2648, %v2646
    %v2663 = vpack.c.bf16 %v2649, %v2647
    %v2664 = vpack.c.bf16 %v2652, %v2650
    %v2665 = vpack.c.bf16 %v2653, %v2651
    %v2666 = vpack.c.bf16 %v2656, %v2654
    %v2667 = vpack.c.bf16 %v2657, %v2655
    %v2668 = vpack.c.bf16 %v2660, %v2658
    %v2669 = vpack.c.bf16 %v2661, %v2659
    %v2670 = vld [vmem:[#allocation12] sm:$0xf]
    %v2671 = vld [vmem:[#allocation12 + $0x4] sm:$0xf]
    %v2672 = vld [vmem:[#allocation12 + $0x8] sm:$0xf]
    %v2673 = vld [vmem:[#allocation12 + $0xc] sm:$0xf]
    %v2674 = vld [vmem:[#allocation12 + $0x10] sm:$0xf]
    %v2675 = vld [vmem:[#allocation12 + $0x14] sm:$0xf]
    %v2676 = vld [vmem:[#allocation12 + $0x18] sm:$0xf]
    %v2677 = vld [vmem:[#allocation12 + $0x1c] sm:$0xf]
    %v2678 = vld [vmem:[#allocation12 + $0x20] sm:$0xf]
    %v2679 = vld [vmem:[#allocation12 + $0x24] sm:$0xf]
    %v2680 = vld [vmem:[#allocation12 + $0x28] sm:$0xf]
    %v2681 = vld [vmem:[#allocation12 + $0x2c] sm:$0xf]
    %v2682 = vld [vmem:[#allocation12 + $0x30] sm:$0xf]
    %v2683 = vld [vmem:[#allocation12 + $0x34] sm:$0xf]
    %v2684 = vld [vmem:[#allocation12 + $0x38] sm:$0xf]
    %v2685 = vld [vmem:[#allocation12 + $0x3c] sm:$0xf]
    %v2686 = vld [vmem:[#allocation12 + $0x40] sm:$0xf]
    %v2687 = vld [vmem:[#allocation12 + $0x44] sm:$0xf]
    %v2688 = vld [vmem:[#allocation12 + $0x48] sm:$0xf]
    %v2689 = vld [vmem:[#allocation12 + $0x4c] sm:$0xf]
    %v2690 = vld [vmem:[#allocation12 + $0x50] sm:$0xf]
    %v2691 = vld [vmem:[#allocation12 + $0x54] sm:$0xf]
    %v2692 = vld [vmem:[#allocation12 + $0x58] sm:$0xf]
    %v2693 = vld [vmem:[#allocation12 + $0x5c] sm:$0xf]
    %v2694 = vld [vmem:[#allocation12 + $0x60] sm:$0xf]
    %v2695 = vld [vmem:[#allocation12 + $0x64] sm:$0xf]
    %v2696 = vld [vmem:[#allocation12 + $0x68] sm:$0xf]
    %v2697 = vld [vmem:[#allocation12 + $0x6c] sm:$0xf]
    %v2698 = vld [vmem:[#allocation12 + $0x70] sm:$0xf]
    %v2699 = vld [vmem:[#allocation12 + $0x74] sm:$0xf]
    %v2700 = vld [vmem:[#allocation12 + $0x78] sm:$0xf]
    %v2701 = vld [vmem:[#allocation12 + $0x7c] sm:$0xf]
    %v2702 = vld [vmem:[%s8] sm:$0x1]
    %v2704 = vperm.slane %v2702, 0
    %v2738 = vunpack.c.l.b16 %v2670
    %v2739 = vunpack.c.l.b16 %v2671
    %v2740 = vunpack.c.l.b16 %v2672
    %v2741 = vunpack.c.l.b16 %v2673
    %v2742 = vunpack.c.l.b16 %v2674
    %v2743 = vunpack.c.l.b16 %v2675
    %v2744 = vunpack.c.l.b16 %v2676
    %v2745 = vunpack.c.l.b16 %v2677
    %v2746 = vunpack.c.l.b16 %v2678
    %v2747 = vunpack.c.l.b16 %v2679
    %v2748 = vunpack.c.l.b16 %v2680
    %v2749 = vunpack.c.l.b16 %v2681
    %v2750 = vunpack.c.l.b16 %v2682
    %v2751 = vunpack.c.l.b16 %v2683
    %v2752 = vunpack.c.l.b16 %v2684
    %v2753 = vunpack.c.l.b16 %v2685
    %v2754 = vunpack.c.l.b16 %v2686
    %v2755 = vunpack.c.l.b16 %v2687
    %v2756 = vunpack.c.l.b16 %v2688
    %v2757 = vunpack.c.l.b16 %v2689
    %v2758 = vunpack.c.l.b16 %v2690
    %v2759 = vunpack.c.l.b16 %v2691
    %v2760 = vunpack.c.l.b16 %v2692
    %v2761 = vunpack.c.l.b16 %v2693
    %v2762 = vunpack.c.l.b16 %v2694
    %v2763 = vunpack.c.l.b16 %v2695
    %v2764 = vunpack.c.l.b16 %v2696
    %v2765 = vunpack.c.l.b16 %v2697
    %v2766 = vunpack.c.l.b16 %v2698
    %v2767 = vunpack.c.l.b16 %v2699
    %v2768 = vunpack.c.l.b16 %v2700
    %v2769 = vunpack.c.l.b16 %v2701
    %v2770 = vpack.c.b16 %v2739, %v2738
    %v2771 = vpack.c.b16 %v2741, %v2740
    %v2772 = vpack.c.b16 %v2743, %v2742
    %v2773 = vpack.c.b16 %v2745, %v2744
    %v2774 = vpack.c.b16 %v2747, %v2746
    %v2775 = vpack.c.b16 %v2749, %v2748
    %v2776 = vpack.c.b16 %v2751, %v2750
    %v2777 = vpack.c.b16 %v2753, %v2752
    %v2778 = vpack.c.b16 %v2755, %v2754
    %v2779 = vpack.c.b16 %v2757, %v2756
    %v2780 = vpack.c.b16 %v2759, %v2758
    %v2781 = vpack.c.b16 %v2761, %v2760
    %v2782 = vpack.c.b16 %v2763, %v2762
    %v2783 = vpack.c.b16 %v2765, %v2764
    %v2784 = vpack.c.b16 %v2767, %v2766
    %v2785 = vpack.c.b16 %v2769, %v2768
    %2802 = vmatpush.bf16.msra.mxu0 %v2777
    %2803 = vmatpush.bf16.msra.mxu0 %v2776
    %2804 = vmatpush.bf16.msra.mxu0 %v2775
    %2805 = vmatpush.bf16.msra.mxu0 %v2774
    %2806 = vmatpush.bf16.msra.mxu0 %v2773
    %2807 = vmatpush.bf16.msra.mxu0 %v2772
    %2808 = vmatpush.bf16.msra.mxu0 %v2771
    %2809 = vmatpush.bf16.msra.mxu0 %v2770
    %2810 = vmatmul.bf16.gmra.mxu0 %v2662
    %v2811 = vpop.f32.mrf.mxu0
    %v2812 = vadd.f32 %v2704, %v2811
    %v2813 = vpop.f32.mrf.mxu0
    %v2814 = vadd.f32 %v2704, %v2813
    %2815 = vmatmul.bf16.gmra.mxu0 %v2664
    %v2816 = vpop.f32.mrf.mxu0
    %v2817 = vadd.f32 %v2704, %v2816
    %v2818 = vpop.f32.mrf.mxu0
    %v2819 = vadd.f32 %v2704, %v2818
    %2820 = vmatmul.bf16.gmra.mxu0 %v2666
    %v2821 = vpop.f32.mrf.mxu0
    %v2822 = vadd.f32 %v2704, %v2821
    %v2823 = vpop.f32.mrf.mxu0
    %v2824 = vadd.f32 %v2704, %v2823
    %2825 = vmatmul.bf16.gmra.mxu0 %v2668
    %v2826 = vpop.f32.mrf.mxu0
    %v2827 = vadd.f32 %v2704, %v2826
    %v2828 = vpop.f32.mrf.mxu0
    %v2829 = vadd.f32 %v2704, %v2828
    %2830 = vdwg.mxu0
    %2831 = vmatpush.bf16.msra.mxu0 %v2785
    %2832 = vmatpush.bf16.msra.mxu0 %v2784
    %2833 = vmatpush.bf16.msra.mxu0 %v2783
    %2834 = vmatpush.bf16.msra.mxu0 %v2782
    %2835 = vmatpush.bf16.msra.mxu0 %v2781
    %2836 = vmatpush.bf16.msra.mxu0 %v2780
    %2837 = vmatpush.bf16.msra.mxu0 %v2779
    %2838 = vmatpush.bf16.msra.mxu0 %v2778
    %2839 = vmatmul.bf16.gmra.mxu0 %v2663
    %v2840 = vpop.f32.mrf.mxu0
    %v2841 = vadd.f32 %v2812, %v2840
    %v2842 = vpop.f32.mrf.mxu0
    %v2843 = vadd.f32 %v2814, %v2842
    %2844 = vmatmul.bf16.gmra.mxu0 %v2665
    %v2845 = vpop.f32.mrf.mxu0
    %v2846 = vadd.f32 %v2817, %v2845
    %v2847 = vpop.f32.mrf.mxu0
    %v2848 = vadd.f32 %v2819, %v2847
    %2849 = vmatmul.bf16.gmra.mxu0 %v2667
    %v2850 = vpop.f32.mrf.mxu0
    %v2851 = vadd.f32 %v2822, %v2850
    %v2852 = vpop.f32.mrf.mxu0
    %v2853 = vadd.f32 %v2824, %v2852
    %2854 = vmatmul.bf16.gmra.mxu0 %v2669
    %v2855 = vpop.f32.mrf.mxu0
    %v2856 = vadd.f32 %v2827, %v2855
    %v2857 = vpop.f32.mrf.mxu0
    %v2858 = vadd.f32 %v2829, %v2857
    %2859 = vdwg.mxu0
    %v2860 = vadd.f32 %v2841, %v2474
    %v2861 = vadd.f32 %v2843, %v2475
    %v2862 = vadd.f32 %v2846, %v2476
    %v2863 = vadd.f32 %v2848, %v2477
    %v2864 = vadd.f32 %v2851, %v2478
    %v2865 = vadd.f32 %v2853, %v2479
    %v2866 = vadd.f32 %v2856, %v2480
    %v2867 = vadd.f32 %v2858, %v2481
    %2868 = vadd.xlane.f32.xlu0 %v2860
    %v2869 = vpop.xlane.xlu0 %2868
    %2870 = vadd.xlane.f32.xlu0 %v2861
    %v2871 = vpop.xlane.xlu0 %2870
    %2872 = vadd.xlane.f32.xlu0 %v2862
    %v2873 = vpop.xlane.xlu0 %2872
    %2874 = vadd.xlane.f32.xlu0 %v2863
    %v2875 = vpop.xlane.xlu0 %2874
    %2876 = vadd.xlane.f32.xlu0 %v2864
    %v2877 = vpop.xlane.xlu0 %2876
    %2878 = vadd.xlane.f32.xlu0 %v2865
    %v2879 = vpop.xlane.xlu0 %2878
    %2880 = vadd.xlane.f32.xlu0 %v2866
    %v2881 = vpop.xlane.xlu0 %2880
    %2882 = vadd.xlane.f32.xlu0 %v2867
    %v2883 = vpop.xlane.xlu0 %2882
    %v2884 = vrcp.pop 128.0
    %v2885 = vmul.f32 128.0, %v2884
    %v2886 = vsub.f32 1.0, %v2885
    %v2887 = vmul.f32 %v2884, %v2886
    %v2888 = vadd.f32 %v2884, %v2887
    %vm2889 = vweird.f32 %v2884
    %v2890 = vsel %vm2889, %v2884, %v2888
    %v2891 = vmul.f32 %v2869, %v2890
    %v2892 = vmul.f32 %v2871, %v2890
    %v2893 = vmul.f32 %v2873, %v2890
    %v2894 = vmul.f32 %v2875, %v2890
    %v2895 = vmul.f32 %v2877, %v2890
    %v2896 = vmul.f32 %v2879, %v2890
    %v2897 = vmul.f32 %v2881, %v2890
    %v2898 = vmul.f32 %v2883, %v2890
    %v2899 = vsub.f32 %v2860, %v2891
    %v2900 = vsub.f32 %v2861, %v2892
    %v2901 = vsub.f32 %v2862, %v2893
    %v2902 = vsub.f32 %v2863, %v2894
    %v2903 = vsub.f32 %v2864, %v2895
    %v2904 = vsub.f32 %v2865, %v2896
    %v2905 = vsub.f32 %v2866, %v2897
    %v2906 = vsub.f32 %v2867, %v2898
    %v2907 = vmul.f32 %v2899, %v2899
    %v2908 = vmul.f32 %v2900, %v2900
    %v2909 = vmul.f32 %v2901, %v2901
    %v2910 = vmul.f32 %v2902, %v2902
    %v2911 = vmul.f32 %v2903, %v2903
    %v2912 = vmul.f32 %v2904, %v2904
    %v2913 = vmul.f32 %v2905, %v2905
    %v2914 = vmul.f32 %v2906, %v2906
    %2915 = vadd.xlane.f32.xlu0 %v2907
    %v2916 = vpop.xlane.xlu0 %2915
    %2917 = vadd.xlane.f32.xlu0 %v2908
    %v2918 = vpop.xlane.xlu0 %2917
    %2919 = vadd.xlane.f32.xlu0 %v2909
    %v2920 = vpop.xlane.xlu0 %2919
    %2921 = vadd.xlane.f32.xlu0 %v2910
    %v2922 = vpop.xlane.xlu0 %2921
    %2923 = vadd.xlane.f32.xlu0 %v2911
    %v2924 = vpop.xlane.xlu0 %2923
    %2925 = vadd.xlane.f32.xlu0 %v2912
    %v2926 = vpop.xlane.xlu0 %2925
    %2927 = vadd.xlane.f32.xlu0 %v2913
    %v2928 = vpop.xlane.xlu0 %2927
    %2929 = vadd.xlane.f32.xlu0 %v2914
    %v2930 = vpop.xlane.xlu0 %2929
    %v2931 = vmul.f32 %v2916, %v2890
    %v2932 = vmul.f32 %v2918, %v2890
    %v2933 = vmul.f32 %v2920, %v2890
    %v2934 = vmul.f32 %v2922, %v2890
    %v2935 = vmul.f32 %v2924, %v2890
    %v2936 = vmul.f32 %v2926, %v2890
    %v2937 = vmul.f32 %v2928, %v2890
    %v2938 = vmul.f32 %v2930, %v2890
    %v2939 = vadd.f32 %v2931, 1e-06
    %v2940 = vadd.f32 %v2932, 1e-06
    %v2941 = vadd.f32 %v2933, 1e-06
    %v2942 = vadd.f32 %v2934, 1e-06
    %v2943 = vadd.f32 %v2935, 1e-06
    %v2944 = vadd.f32 %v2936, 1e-06
    %v2945 = vadd.f32 %v2937, 1e-06
    %v2946 = vadd.f32 %v2938, 1e-06
    %v2947 = vrsqrt.pop %v2939
    %v2948 = vmul.f32 %v2947, %v2939
    %v2949 = vmul.f32 %v2948, %v2947
    %v2950 = vmul.f32 0.5, %v2949
    %v2951 = vsub.f32 1.5, %v2950
    %v2952 = vmul.f32 %v2947, %v2951
    %vm2953 = vweird.f32 %v2939
    %vm2954 = vweird.f32 %v2947
    %vm2955 = vmor %vm2953, %vm2954
    %v2956 = vsel %vm2955, %v2947, %v2952
    %v2957 = vrsqrt.pop %v2940
    %v2958 = vmul.f32 %v2957, %v2940
    %v2959 = vmul.f32 %v2958, %v2957
    %v2960 = vmul.f32 0.5, %v2959
    %v2961 = vsub.f32 1.5, %v2960
    %v2962 = vmul.f32 %v2957, %v2961
    %vm2963 = vweird.f32 %v2940
    %vm2964 = vweird.f32 %v2957
    %vm2965 = vmor %vm2963, %vm2964
    %v2966 = vsel %vm2965, %v2957, %v2962
    %v2967 = vrsqrt.pop %v2941
    %v2968 = vmul.f32 %v2967, %v2941
    %v2969 = vmul.f32 %v2968, %v2967
    %v2970 = vmul.f32 0.5, %v2969
    %v2971 = vsub.f32 1.5, %v2970
    %v2972 = vmul.f32 %v2967, %v2971
    %vm2973 = vweird.f32 %v2941
    %vm2974 = vweird.f32 %v2967
    %vm2975 = vmor %vm2973, %vm2974
    %v2976 = vsel %vm2975, %v2967, %v2972
    %v2977 = vrsqrt.pop %v2942
    %v2978 = vmul.f32 %v2977, %v2942
    %v2979 = vmul.f32 %v2978, %v2977
    %v2980 = vmul.f32 0.5, %v2979
    %v2981 = vsub.f32 1.5, %v2980
    %v2982 = vmul.f32 %v2977, %v2981
    %vm2983 = vweird.f32 %v2942
    %vm2984 = vweird.f32 %v2977
    %vm2985 = vmor %vm2983, %vm2984
    %v2986 = vsel %vm2985, %v2977, %v2982
    %v2987 = vrsqrt.pop %v2943
    %v2988 = vmul.f32 %v2987, %v2943
    %v2989 = vmul.f32 %v2988, %v2987
    %v2990 = vmul.f32 0.5, %v2989
    %v2991 = vsub.f32 1.5, %v2990
    %v2992 = vmul.f32 %v2987, %v2991
    %vm2993 = vweird.f32 %v2943
    %vm2994 = vweird.f32 %v2987
    %vm2995 = vmor %vm2993, %vm2994
    %v2996 = vsel %vm2995, %v2987, %v2992
    %v2997 = vrsqrt.pop %v2944
    %v2998 = vmul.f32 %v2997, %v2944
    %v2999 = vmul.f32 %v2998, %v2997
    %v3000 = vmul.f32 0.5, %v2999
    %v3001 = vsub.f32 1.5, %v3000
    %v3002 = vmul.f32 %v2997, %v3001
    %vm3003 = vweird.f32 %v2944
    %vm3004 = vweird.f32 %v2997
    %vm3005 = vmor %vm3003, %vm3004
    %v3006 = vsel %vm3005, %v2997, %v3002
    %v3007 = vrsqrt.pop %v2945
    %v3008 = vmul.f32 %v3007, %v2945
    %v3009 = vmul.f32 %v3008, %v3007
    %v3010 = vmul.f32 0.5, %v3009
    %v3011 = vsub.f32 1.5, %v3010
    %v3012 = vmul.f32 %v3007, %v3011
    %vm3013 = vweird.f32 %v2945
    %vm3014 = vweird.f32 %v3007
    %vm3015 = vmor %vm3013, %vm3014
    %v3016 = vsel %vm3015, %v3007, %v3012
    %v3017 = vrsqrt.pop %v2946
    %v3018 = vmul.f32 %v3017, %v2946
    %v3019 = vmul.f32 %v3018, %v3017
    %v3020 = vmul.f32 0.5, %v3019
    %v3021 = vsub.f32 1.5, %v3020
    %v3022 = vmul.f32 %v3017, %v3021
    %vm3023 = vweird.f32 %v2946
    %vm3024 = vweird.f32 %v3017
    %vm3025 = vmor %vm3023, %vm3024
    %v3026 = vsel %vm3025, %v3017, %v3022
    %v3027 = vmul.f32 %v2899, %v2956
    %v3028 = vmul.f32 %v2900, %v2966
    %v3029 = vmul.f32 %v2901, %v2976
    %v3030 = vmul.f32 %v2902, %v2986
    %v3031 = vmul.f32 %v2903, %v2996
    %v3032 = vmul.f32 %v2904, %v3006
    %v3033 = vmul.f32 %v2905, %v3016
    %v3034 = vmul.f32 %v2906, %v3026
    %v3035 = vld [vmem:[%s9] sm:$0x1]
    %v3037 = vperm.slane %v3035, 0
    %v3039 = vmul.f32 %v3027, %v3037
    %v3040 = vmul.f32 %v3028, %v3037
    %v3041 = vmul.f32 %v3029, %v3037
    %v3042 = vmul.f32 %v3030, %v3037
    %v3043 = vmul.f32 %v3031, %v3037
    %v3044 = vmul.f32 %v3032, %v3037
    %v3045 = vmul.f32 %v3033, %v3037
    %v3046 = vmul.f32 %v3034, %v3037
    %v3047 = vld [vmem:[%s10] sm:$0x1]
    %v3049 = vperm.slane %v3047, 0
    %v3051 = vadd.f32 %v3039, %v3049
    %v3052 = vadd.f32 %v3040, %v3049
    %v3053 = vadd.f32 %v3041, %v3049
    %v3054 = vadd.f32 %v3042, %v3049
    %v3055 = vadd.f32 %v3043, %v3049
    %v3056 = vadd.f32 %v3044, %v3049
    %v3057 = vadd.f32 %v3045, %v3049
    %v3058 = vadd.f32 %v3046, %v3049
    %v3060 = vrot.slane %v3051, 1
    %v3061 = vrot.slane %v3051, 2
    %v3062 = vrot.slane %v3051, 3
    %v3063 = vrot.slane %v3051, 4
    %v3064 = vrot.slane %v3051, 5
    %v3065 = vrot.slane %v3051, 6
    %v3066 = vrot.slane %v3051, 7
    %3074 = vst [vmem:[#allocation13] sm:$0x1] %v3051
    %3075 = vst [vmem:[#allocation13 + $0x8] sm:$0x1] %v3060
    %3076 = vst [vmem:[#allocation13 + $0x10] sm:$0x1] %v3061
    %3077 = vst [vmem:[#allocation13 + $0x18] sm:$0x1] %v3062
    %3078 = vst [vmem:[#allocation13 + $0x20] sm:$0x1] %v3063
    %3079 = vst [vmem:[#allocation13 + $0x28] sm:$0x1] %v3064
    %3080 = vst [vmem:[#allocation13 + $0x30] sm:$0x1] %v3065
    %3081 = vst [vmem:[#allocation13 + $0x38] sm:$0x1] %v3066
    %v3083 = vrot.slane %v3052, 1
    %v3084 = vrot.slane %v3052, 2
    %v3085 = vrot.slane %v3052, 3
    %v3086 = vrot.slane %v3052, 4
    %v3087 = vrot.slane %v3052, 5
    %v3088 = vrot.slane %v3052, 6
    %v3089 = vrot.slane %v3052, 7
    %3097 = vst [vmem:[#allocation13 + $0x1] sm:$0x1] %v3052
    %3098 = vst [vmem:[#allocation13 + $0x9] sm:$0x1] %v3083
    %3099 = vst [vmem:[#allocation13 + $0x11] sm:$0x1] %v3084
    %3100 = vst [vmem:[#allocation13 + $0x19] sm:$0x1] %v3085
    %3101 = vst [vmem:[#allocation13 + $0x21] sm:$0x1] %v3086
    %3102 = vst [vmem:[#allocation13 + $0x29] sm:$0x1] %v3087
    %3103 = vst [vmem:[#allocation13 + $0x31] sm:$0x1] %v3088
    %3104 = vst [vmem:[#allocation13 + $0x39] sm:$0x1] %v3089
    %v3106 = vrot.slane %v3053, 1
    %v3107 = vrot.slane %v3053, 2
    %v3108 = vrot.slane %v3053, 3
    %v3109 = vrot.slane %v3053, 4
    %v3110 = vrot.slane %v3053, 5
    %v3111 = vrot.slane %v3053, 6
    %v3112 = vrot.slane %v3053, 7
    %3120 = vst [vmem:[#allocation13 + $0x2] sm:$0x1] %v3053
    %3121 = vst [vmem:[#allocation13 + $0xa] sm:$0x1] %v3106
    %3122 = vst [vmem:[#allocation13 + $0x12] sm:$0x1] %v3107
    %3123 = vst [vmem:[#allocation13 + $0x1a] sm:$0x1] %v3108
    %3124 = vst [vmem:[#allocation13 + $0x22] sm:$0x1] %v3109
    %3125 = vst [vmem:[#allocation13 + $0x2a] sm:$0x1] %v3110
    %3126 = vst [vmem:[#allocation13 + $0x32] sm:$0x1] %v3111
    %3127 = vst [vmem:[#allocation13 + $0x3a] sm:$0x1] %v3112
    %v3129 = vrot.slane %v3054, 1
    %v3130 = vrot.slane %v3054, 2
    %v3131 = vrot.slane %v3054, 3
    %v3132 = vrot.slane %v3054, 4
    %v3133 = vrot.slane %v3054, 5
    %v3134 = vrot.slane %v3054, 6
    %v3135 = vrot.slane %v3054, 7
    %3143 = vst [vmem:[#allocation13 + $0x3] sm:$0x1] %v3054
    %3144 = vst [vmem:[#allocation13 + $0xb] sm:$0x1] %v3129
    %3145 = vst [vmem:[#allocation13 + $0x13] sm:$0x1] %v3130
    %3146 = vst [vmem:[#allocation13 + $0x1b] sm:$0x1] %v3131
    %3147 = vst [vmem:[#allocation13 + $0x23] sm:$0x1] %v3132
    %3148 = vst [vmem:[#allocation13 + $0x2b] sm:$0x1] %v3133
    %3149 = vst [vmem:[#allocation13 + $0x33] sm:$0x1] %v3134
    %3150 = vst [vmem:[#allocation13 + $0x3b] sm:$0x1] %v3135
    %v3152 = vrot.slane %v3055, 1
    %v3153 = vrot.slane %v3055, 2
    %v3154 = vrot.slane %v3055, 3
    %v3155 = vrot.slane %v3055, 4
    %v3156 = vrot.slane %v3055, 5
    %v3157 = vrot.slane %v3055, 6
    %v3158 = vrot.slane %v3055, 7
    %3166 = vst [vmem:[#allocation13 + $0x4] sm:$0x1] %v3055
    %3167 = vst [vmem:[#allocation13 + $0xc] sm:$0x1] %v3152
    %3168 = vst [vmem:[#allocation13 + $0x14] sm:$0x1] %v3153
    %3169 = vst [vmem:[#allocation13 + $0x1c] sm:$0x1] %v3154
    %3170 = vst [vmem:[#allocation13 + $0x24] sm:$0x1] %v3155
    %3171 = vst [vmem:[#allocation13 + $0x2c] sm:$0x1] %v3156
    %3172 = vst [vmem:[#allocation13 + $0x34] sm:$0x1] %v3157
    %3173 = vst [vmem:[#allocation13 + $0x3c] sm:$0x1] %v3158
    %v3175 = vrot.slane %v3056, 1
    %v3176 = vrot.slane %v3056, 2
    %v3177 = vrot.slane %v3056, 3
    %v3178 = vrot.slane %v3056, 4
    %v3179 = vrot.slane %v3056, 5
    %v3180 = vrot.slane %v3056, 6
    %v3181 = vrot.slane %v3056, 7
    %3189 = vst [vmem:[#allocation13 + $0x5] sm:$0x1] %v3056
    %3190 = vst [vmem:[#allocation13 + $0xd] sm:$0x1] %v3175
    %3191 = vst [vmem:[#allocation13 + $0x15] sm:$0x1] %v3176
    %3192 = vst [vmem:[#allocation13 + $0x1d] sm:$0x1] %v3177
    %3193 = vst [vmem:[#allocation13 + $0x25] sm:$0x1] %v3178
    %3194 = vst [vmem:[#allocation13 + $0x2d] sm:$0x1] %v3179
    %3195 = vst [vmem:[#allocation13 + $0x35] sm:$0x1] %v3180
    %3196 = vst [vmem:[#allocation13 + $0x3d] sm:$0x1] %v3181
    %v3198 = vrot.slane %v3057, 1
    %v3199 = vrot.slane %v3057, 2
    %v3200 = vrot.slane %v3057, 3
    %v3201 = vrot.slane %v3057, 4
    %v3202 = vrot.slane %v3057, 5
    %v3203 = vrot.slane %v3057, 6
    %v3204 = vrot.slane %v3057, 7
    %3212 = vst [vmem:[#allocation13 + $0x6] sm:$0x1] %v3057
    %3213 = vst [vmem:[#allocation13 + $0xe] sm:$0x1] %v3198
    %3214 = vst [vmem:[#allocation13 + $0x16] sm:$0x1] %v3199
    %3215 = vst [vmem:[#allocation13 + $0x1e] sm:$0x1] %v3200
    %3216 = vst [vmem:[#allocation13 + $0x26] sm:$0x1] %v3201
    %3217 = vst [vmem:[#allocation13 + $0x2e] sm:$0x1] %v3202
    %3218 = vst [vmem:[#allocation13 + $0x36] sm:$0x1] %v3203
    %3219 = vst [vmem:[#allocation13 + $0x3e] sm:$0x1] %v3204
    %v3221 = vrot.slane %v3058, 1
    %v3222 = vrot.slane %v3058, 2
    %v3223 = vrot.slane %v3058, 3
    %v3224 = vrot.slane %v3058, 4
    %v3225 = vrot.slane %v3058, 5
    %v3226 = vrot.slane %v3058, 6
    %v3227 = vrot.slane %v3058, 7
    %3235 = vst [vmem:[#allocation13 + $0x7] sm:$0x1] %v3058
    %3236 = vst [vmem:[#allocation13 + $0xf] sm:$0x1] %v3221
    %3237 = vst [vmem:[#allocation13 + $0x17] sm:$0x1] %v3222
    %3238 = vst [vmem:[#allocation13 + $0x1f] sm:$0x1] %v3223
    %3239 = vst [vmem:[#allocation13 + $0x27] sm:$0x1] %v3224
    %3240 = vst [vmem:[#allocation13 + $0x2f] sm:$0x1] %v3225
    %3241 = vst [vmem:[#allocation13 + $0x37] sm:$0x1] %v3226
    %3242 = vst [vmem:[#allocation13 + $0x3f] sm:$0x1] %v3227
    // Predicated region
    $region66: #{encoder_layer_forward.1} parent=1 // pred_check
      _
    $region67: #{encoder_layer_forward.1} parent=1 // pred_check_branch
      %3244 = sbr.rel (0) target = $region69
    $region68: #{encoder_layer_forward.1} parent=1 // pred_region
      %3246 = vsyncadd [#allocation6], 0
      %s3247 = sshll.u32 [#allocation13], 4
      %s3248 = int_to_ptr.vmem [resolvable:$true] %s3247
      %s3249 = sshll.u32 %s11, 4
      %s3250 = int_to_ptr.hbm [resolvable:$true] %s3249
      %3255 = dma.vmem_to_hbm [thread:$0]  %s3248, 1024, %s3250, [#allocation6], 128, 128, 8
    $region69: #{encoder_layer_forward.1} parent=1 // pred_fallthru
      _
    // Predicated region
    $region70: #{encoder_layer_forward.1} parent=1 // pred_check
      _
    $region71: #{encoder_layer_forward.1} parent=1 // pred_check_branch
      %3257 = sbr.rel (0) target = $region73
    $region72: #{encoder_layer_forward.1} parent=1 // pred_region
      %3259 = dma.done [#allocation6], 1024
    $region73: #{encoder_layer_forward.1} parent=1 // pred_fallthru
      _
    %3260 = vsyncpa [#allocation5], 1
    %3261 = vsyncpa [#allocation8], 1
    %3262 = vsyncpa [#allocation11], 1
    %3263 = vsyncpa [#allocation6], 1

</llo_original>
